<compile_context>
chip_gen: v6e
topology: v6e:2x2x1
jax: 0.10.0
libtpu: 0.0.40
codegen_flags: <defaults>
</compile_context>

<pallas_src>
import jax
import jax.numpy as jnp
from jax.experimental import pallas as pl
from jax.experimental.pallas import tpu as pltpu

BATCH = 2           # "double function": two trajectories integrated jointly
DATA_DIM = 1        # each function value is a scalar
AUG_DIM = 1         # ANODE augmentation
STATE_DIM = DATA_DIM + AUG_DIM
HIDDEN = 32
NTIMESTAMPS = 8     # args.ntimestamps
NSUB = 8            # fixed RK4 sub-steps per output interval

BATCH_PAD = 8       # sublane-aligned batch
DIM_PAD = 128       # lane-aligned feature/hidden dim
BIAS_LANE = HIDDEN  # hidden lane forced to 1.0 (carries folded b3)


def _ode_kernel(times_ref,                  # SMEM: (NTIMESTAMPS,) f32
                x0_ref,                     # VMEM: (8, 128) initial state (padded)
                l1_ref,                     # VMEM: (8, 128)  rows: W1[0], W1[1], b1
                w2_ref,                     # VMEM: (128, 128) padded W2
                l3_ref,                     # VMEM: (8, 128)  rows: W3[:,0](+b3[0]),
                                            #                        W3[:,1](+b3[1]),
                                            #                        b2 (+1.0 bias lane)
                out_ref):                   # VMEM: (NTIMESTAMPS, 8, 128)
    # Hoist all loop-invariant parameters into vregs once. The (1,128) rows are
    # one vreg each; W2 is ~16 vregs — well within the 64-vreg budget together
    # with the (8,1)/(8,128) temporaries of the unrolled RK4 body.
    w1r0 = l1_ref[0:1, :]
    w1r1 = l1_ref[1:2, :]
    b1 = l1_ref[2:3, :]
    w3c0 = l3_ref[0:1, :]     # W3 column 0 spread over lanes; lane 32 holds b3[0]
    w3c1 = l3_ref[1:2, :]     # W3 column 1 spread over lanes; lane 32 holds b3[1]
    b2 = l3_ref[2:3, :]       # b2; lane 32 holds 1.0 (constant bias lane of h)
    w2 = w2_ref[...]          # loop-invariant MXU RHS

    lane = jax.lax.broadcasted_iota(jnp.int32, (BATCH_PAD, DIM_PAD), 1)
    is0 = lane == 0
    is1 = lane == 1

    def f(yA, yB):
        # yA, yB: (8,1) = state components (value, augmented dim) per sample row.
        # Layer 1: contraction dim = 2  ->  two broadcast FMAs on the VPU.
        h = jnp.maximum(yA * w1r0 + yB * w1r1 + b1, 0.0)          # (8, 128)
        # Layer 2: 32x32 -> the single MXU dot on the critical chain.
        h = jnp.dot(h, w2, preferred_element_type=jnp.float32) + b2
        h = jnp.maximum(h, 0.0)                                   # lane 32 == 1.0
        # Layer 3: only 2 live output columns -> XLU cross-lane reduces.
        # b3 is picked up automatically via the constant-1 bias lane.
        rA = jnp.sum(h * w3c0, axis=-1, keepdims=True)            # (8, 1)
        rB = jnp.sum(h * w3c1, axis=-1, keepdims=True)            # (8, 1)
        return rA, rB

    x0 = x0_ref[...]
    out_ref[0] = x0                          # odeint returns x at the first time
    yA0 = jnp.sum(jnp.where(is0, x0, 0.0), axis=-1, keepdims=True)
    yB0 = jnp.sum(jnp.where(is1, x0, 0.0), axis=-1, keepdims=True)

    def interval(t, carry):
        yA, yB = carry
        # Per-interval scalars hoisted out of the sub-step loop (SMEM reads).
        dt = (times_ref[t] - times_ref[t - 1]) / NSUB
        half_dt = 0.5 * dt
        dt_6 = dt / 6.0

        def rk4_step(_, c):
            a, b = c
            k1A, k1B = f(a, b)
            k2A, k2B = f(a + half_dt * k1A, b + half_dt * k1B)
            k3A, k3B = f(a + half_dt * k2A, b + half_dt * k2B)
            k4A, k4B = f(a + dt * k3A, b + dt * k3B)
            a = a + dt_6 * (k1A + 2.0 * k2A + 2.0 * k3A + k4A)
            b = b + dt_6 * (k1B + 2.0 * k2B + 2.0 * k3B + k4B)
            return a, b

        yA, yB = jax.lax.fori_loop(0, NSUB, rk4_step, (yA, yB), unroll=True)
        # Assemble the (8,128) output layout only once per output time.
        out_ref[t] = jnp.where(is0, yA, 0.0) + jnp.where(is1, yB, 0.0)
        return yA, yB

    jax.lax.fori_loop(1, NTIMESTAMPS, interval, (yA0, yB0))


def ode_block_forward(x, ids, times, packed_params):
    """x: (BATCH, STATE_DIM) f32, ids: (BATCH, 1) i32, times: (NTIMESTAMPS,) f32."""
    l1p, w2p, l3p = packed_params

    x_pad = jnp.zeros((BATCH_PAD, DIM_PAD), jnp.float32)
    x_pad = x_pad.at[:BATCH, :STATE_DIM].set(x.astype(jnp.float32))

    integrated_pad = pl.pallas_call(
        _ode_kernel,
        out_shape=jax.ShapeDtypeStruct((NTIMESTAMPS, BATCH_PAD, DIM_PAD), jnp.float32),
        in_specs=[
            pl.BlockSpec(memory_space=pltpu.MemorySpace.SMEM),   # times
            pl.BlockSpec(memory_space=pltpu.MemorySpace.VMEM),   # x0
            pl.BlockSpec(memory_space=pltpu.MemorySpace.VMEM),   # l1 pack
            pl.BlockSpec(memory_space=pltpu.MemorySpace.VMEM),   # W2
            pl.BlockSpec(memory_space=pltpu.MemorySpace.VMEM),   # l3 pack
        ],
        out_specs=pl.BlockSpec(memory_space=pltpu.MemorySpace.VMEM),
    )(times.astype(jnp.float32), x_pad, l1p, w2p, l3p)

    integrated = integrated_pad[:, :BATCH, :STATE_DIM]           # (T, 2, STATE_DIM)
    # out[i] = integrated[i].gather(1, ids)  ->  (T, 2, 1)
    out = jnp.take_along_axis(integrated, ids[None, :, :], axis=2)
    return out


def make_params(key):
    """Deterministic odefunc parameters; returns (raw, packed) versions."""
    k1, k2, k3, k4, k5, k6 = jax.random.split(key, 6)
    s1 = 0.3 / jnp.sqrt(STATE_DIM)
    s2 = 0.3 / jnp.sqrt(HIDDEN)
    w1 = s1 * jax.random.normal(k1, (STATE_DIM, HIDDEN), jnp.float32)
    b1 = 0.1 * jax.random.normal(k4, (HIDDEN,), jnp.float32)
    w2 = s2 * jax.random.normal(k2, (HIDDEN, HIDDEN), jnp.float32)
    b2 = 0.1 * jax.random.normal(k5, (HIDDEN,), jnp.float32)
    w3 = s2 * jax.random.normal(k3, (HIDDEN, STATE_DIM), jnp.float32)
    b3 = 0.1 * jax.random.normal(k6, (STATE_DIM,), jnp.float32)
    raw = (w1, b1, w2, b2, w3, b3)

    # Layer-1 pack: rows 0/1 = W1 rows, row 2 = b1.
    l1p = jnp.zeros((BATCH_PAD, DIM_PAD), jnp.float32)
    l1p = (l1p.at[0, :HIDDEN].set(w1[0])
               .at[1, :HIDDEN].set(w1[1])
               .at[2, :HIDDEN].set(b1))

    # W2 padded; column BIAS_LANE stays zero so the bias lane of h is exactly
    # relu(0 + 1.0) = 1.0 at every f-evaluation.
    w2p = jnp.zeros((DIM_PAD, DIM_PAD), jnp.float32).at[:HIDDEN, :HIDDEN].set(w2)

    # Layer-3 pack: rows 0/1 = W3 columns (with b3 folded into the bias lane),
    # row 2 = b2 with 1.0 at the bias lane.
    l3p = jnp.zeros((BATCH_PAD, DIM_PAD), jnp.float32)
    l3p = (l3p.at[0, :HIDDEN].set(w3[:, 0]).at[0, BIAS_LANE].set(b3[0])
               .at[1, :HIDDEN].set(w3[:, 1]).at[1, BIAS_LANE].set(b3[1])
               .at[2, :HIDDEN].set(b2).at[2, BIAS_LANE].set(1.0))

    packed = (l1p, w2p, l3p)
    return raw, packed


def ref_forward(x, ids, times, raw_params):
    """Pure-JAX reference (same fixed-step RK4) for a correctness check."""
    w1, b1, w2, b2, w3, b3 = raw_params

    def f(y):
        h = jnp.maximum(y @ w1 + b1, 0.0)
        h = jnp.maximum(h @ w2 + b2, 0.0)
        return h @ w3 + b3

    states = [x]
    y = x
    for i in range(1, NTIMESTAMPS):
        dt = (times[i] - times[i - 1]) / NSUB
        for _ in range(NSUB):
            k1 = f(y)
            k2 = f(y + 0.5 * dt * k1)
            k3 = f(y + 0.5 * dt * k2)
            k4 = f(y + dt * k3)
            y = y + (dt / 6.0) * (k1 + 2.0 * k2 + 2.0 * k3 + k4)
        states.append(y)
    integrated = jnp.stack(states)
    return jnp.take_along_axis(integrated, ids[None, :, :], axis=2)


if __name__ == "__main__":
    key = jax.random.PRNGKey(0)
    k_param, k_x = jax.random.split(key)

    raw_params, packed_params = make_params(k_param)

    # Initial state: two scalar data points, augmented with zeros (ANODE style).
    x_data = jax.random.normal(k_x, (BATCH, DATA_DIM), jnp.float32)
    x = jnp.concatenate([x_data, jnp.zeros((BATCH, AUG_DIM), jnp.float32)], axis=1)

    # self.ids: pick the original (non-augmented) coordinate of each trajectory.
    ids = jnp.zeros((BATCH, 1), jnp.int32)
    # self.integration_times
    times = jnp.linspace(0.0, 1.0, NTIMESTAMPS, dtype=jnp.float32)

    out = ode_block_forward(x, ids, times, packed_params)
    out = jax.block_until_ready(out)

    assert out.shape == (NTIMESTAMPS, BATCH, 1), out.shape

    ref = jax.block_until_ready(ref_forward(x, ids, times, raw_params))
    if not jnp.allclose(out, ref, rtol=1e-3, atol=1e-2):
        raise AssertionError("Pallas ODEBlock output mismatch vs JAX reference")

    print("KERNEL_OK")
</pallas_src>

<mosaic_0001>
module attributes {stable_mosaic.version = 11 : i64} {
  func.func @_ode_kernel(%arg0: memref<8xf32, #tpu.memory_space<smem>>, %arg1: memref<8x128xf32, #tpu.memory_space<vmem>>, %arg2: memref<8x128xf32, #tpu.memory_space<vmem>>, %arg3: memref<128x128xf32, #tpu.memory_space<vmem>>, %arg4: memref<8x128xf32, #tpu.memory_space<vmem>>, %arg5: memref<8x8x128xf32, #tpu.memory_space<vmem>>) attributes {dimension_semantics = [], scalar_prefetch = 0 : i64, scratch_operands = 0 : i64, tpu.core_type = #tpu.core_type<tc>} {
    %c0 = arith.constant 0 : index
    %c0_0 = arith.constant 0 : index
    %0 = vector.load %arg2[%c0, %c0_0] : memref<8x128xf32, #tpu.memory_space<vmem>>, vector<1x128xf32>
    %c1 = arith.constant 1 : index
    %c0_1 = arith.constant 0 : index
    %1 = vector.load %arg2[%c1, %c0_1] : memref<8x128xf32, #tpu.memory_space<vmem>>, vector<1x128xf32>
    %c2 = arith.constant 2 : index
    %c0_2 = arith.constant 0 : index
    %2 = vector.load %arg2[%c2, %c0_2] : memref<8x128xf32, #tpu.memory_space<vmem>>, vector<1x128xf32>
    %c0_3 = arith.constant 0 : index
    %c0_4 = arith.constant 0 : index
    %3 = vector.load %arg4[%c0_3, %c0_4] : memref<8x128xf32, #tpu.memory_space<vmem>>, vector<1x128xf32>
    %c1_5 = arith.constant 1 : index
    %c0_6 = arith.constant 0 : index
    %4 = vector.load %arg4[%c1_5, %c0_6] : memref<8x128xf32, #tpu.memory_space<vmem>>, vector<1x128xf32>
    %c2_7 = arith.constant 2 : index
    %c0_8 = arith.constant 0 : index
    %5 = vector.load %arg4[%c2_7, %c0_8] : memref<8x128xf32, #tpu.memory_space<vmem>>, vector<1x128xf32>
    %c0_9 = arith.constant 0 : index
    %c0_10 = arith.constant 0 : index
    %6 = vector.load %arg3[%c0_9, %c0_10] : memref<128x128xf32, #tpu.memory_space<vmem>>, vector<128x128xf32>
    %7 = tpu.iota {dimensions = array<i32: 1>} : vector<8x128xi32>
    %c0_i32 = arith.constant 0 : i32
    %8 = vector.broadcast %c0_i32 : i32 to vector<8x128xi32>
    %9 = arith.cmpi eq, %7, %8 : vector<8x128xi32>
    %c1_i32 = arith.constant 1 : i32
    %10 = vector.broadcast %c1_i32 : i32 to vector<8x128xi32>
    %11 = arith.cmpi eq, %7, %10 : vector<8x128xi32>
    %c0_11 = arith.constant 0 : index
    %c0_12 = arith.constant 0 : index
    %12 = vector.load %arg1[%c0_11, %c0_12] : memref<8x128xf32, #tpu.memory_space<vmem>>, vector<8x128xf32>
    %c0_13 = arith.constant 0 : index
    %c0_14 = arith.constant 0 : index
    %c0_15 = arith.constant 0 : index
    %13 = vector.load %arg5[%c0_13, %c0_14, %c0_15] : memref<8x8x128xf32, #tpu.memory_space<vmem>>, vector<1x8x128xf32>
    %14 = vector.shape_cast %13 : vector<1x8x128xf32> to vector<8x128xf32>
    %15 = vector.shape_cast %12 : vector<8x128xf32> to vector<1x8x128xf32>
    tpu.vector_store %arg5[%c0_13, %c0_14, %c0_15], %15 {strides = array<i32>} : memref<8x8x128xf32, #tpu.memory_space<vmem>>, vector<1x8x128xf32>,
    %cst = arith.constant 0.000000e+00 : f32
    %16 = vector.broadcast %cst : f32 to vector<8x128xf32>
    %17 = arith.select %9, %12, %16 : vector<8x128xi1>, vector<8x128xf32>
    %cst_16 = arith.constant dense<0.000000e+00> : vector<8xf32>
    %18 = vector.multi_reduction <add>, %17, %cst_16 [1] : vector<8x128xf32> to vector<8xf32>
    %19 = vector.shape_cast %18 : vector<8xf32> to vector<8x1xf32>
    %cst_17 = arith.constant 0.000000e+00 : f32
    %20 = vector.broadcast %cst_17 : f32 to vector<8x128xf32>
    %21 = arith.select %11, %12, %20 : vector<8x128xi1>, vector<8x128xf32>
    %cst_18 = arith.constant dense<0.000000e+00> : vector<8xf32>
    %22 = vector.multi_reduction <add>, %21, %cst_18 [1] : vector<8x128xf32> to vector<8xf32>
    %23 = vector.shape_cast %22 : vector<8xf32> to vector<8x1xf32>
    %c1_i32_19 = arith.constant 1 : i32
    %c7_i32 = arith.constant 7 : i32
    %24 = arith.addi %c1_i32_19, %c7_i32 : i32
    %c1_i32_20 = arith.constant 1 : i32
    %25:2 = scf.for %arg6 = %c1_i32_19 to %24 step %c1_i32_20 iter_args(%arg7 = %19, %arg8 = %23) -> (vector<8x1xf32>, vector<8x1xf32>)  : i32 {
      %26 = arith.index_cast %arg6 : i32 to index
      %27 = memref.load %arg0[%26] : memref<8xf32, #tpu.memory_space<smem>>
      %c1_i32_22 = arith.constant 1 : i32
      %28 = arith.subi %arg6, %c1_i32_22 : i32
      %29 = arith.index_cast %28 : i32 to index
      %30 = memref.load %arg0[%29] : memref<8xf32, #tpu.memory_space<smem>>
      %31 = arith.subf %27, %30 : f32
      %cst_23 = arith.constant 8.000000e+00 : f32
      %32 = arith.divf %31, %cst_23 : f32
      %cst_24 = arith.constant 5.000000e-01 : f32
      %33 = arith.mulf %cst_24, %32 : f32
      %cst_25 = arith.constant 6.000000e+00 : f32
      %34 = arith.divf %32, %cst_25 : f32
      %c0_i32_26 = arith.constant 0 : i32
      %35 = vector.broadcast %arg7 : vector<8x1xf32> to vector<8x128xf32>
      %36 = vector.broadcast %0 : vector<1x128xf32> to vector<8x128xf32>
      %37 = arith.mulf %35, %36 : vector<8x128xf32>
      %38 = vector.broadcast %arg8 : vector<8x1xf32> to vector<8x128xf32>
      %39 = vector.broadcast %1 : vector<1x128xf32> to vector<8x128xf32>
      %40 = arith.mulf %38, %39 : vector<8x128xf32>
      %41 = arith.addf %37, %40 : vector<8x128xf32>
      %42 = vector.broadcast %2 : vector<1x128xf32> to vector<8x128xf32>
      %43 = arith.addf %41, %42 : vector<8x128xf32>
      %cst_27 = arith.constant 0.000000e+00 : f32
      %44 = vector.broadcast %cst_27 : f32 to vector<8x128xf32>
      %45 = arith.maximumf %43, %44 : vector<8x128xf32>
      %cst_28 = arith.constant dense<0.000000e+00> : vector<8x128xf32>
      %46 = tpu.matmul %45, %6, %cst_28 {dimension_numbers = #tpu.dot_dimension_numbers<[1], [0], [0], [1], [0, 0, 1, 1], [], []>} : vector<8x128xf32>, vector<128x128xf32>, vector<8x128xf32> -> vector<8x128xf32>
      %47 = vector.broadcast %5 : vector<1x128xf32> to vector<8x128xf32>
      %48 = arith.addf %46, %47 : vector<8x128xf32>
      %cst_29 = arith.constant 0.000000e+00 : f32
      %49 = vector.broadcast %cst_29 : f32 to vector<8x128xf32>
      %50 = arith.maximumf %48, %49 : vector<8x128xf32>
      %51 = vector.broadcast %3 : vector<1x128xf32> to vector<8x128xf32>
      %52 = arith.mulf %50, %51 : vector<8x128xf32>
      %cst_30 = arith.constant dense<0.000000e+00> : vector<8xf32>
      %53 = vector.multi_reduction <add>, %52, %cst_30 [1] : vector<8x128xf32> to vector<8xf32>
      %54 = vector.shape_cast %53 : vector<8xf32> to vector<8x1xf32>
      %55 = vector.broadcast %4 : vector<1x128xf32> to vector<8x128xf32>
      %56 = arith.mulf %50, %55 : vector<8x128xf32>
      %cst_31 = arith.constant dense<0.000000e+00> : vector<8xf32>
      %57 = vector.multi_reduction <add>, %56, %cst_31 [1] : vector<8x128xf32> to vector<8xf32>
      %58 = vector.shape_cast %57 : vector<8xf32> to vector<8x1xf32>
      %59 = vector.broadcast %33 : f32 to vector<8x1xf32>
      %60 = arith.mulf %59, %54 : vector<8x1xf32>
      %61 = arith.addf %arg7, %60 : vector<8x1xf32>
      %62 = vector.broadcast %33 : f32 to vector<8x1xf32>
      %63 = arith.mulf %62, %58 : vector<8x1xf32>
      %64 = arith.addf %arg8, %63 : vector<8x1xf32>
      %65 = vector.broadcast %61 : vector<8x1xf32> to vector<8x128xf32>
      %66 = vector.broadcast %0 : vector<1x128xf32> to vector<8x128xf32>
      %67 = arith.mulf %65, %66 : vector<8x128xf32>
      %68 = vector.broadcast %64 : vector<8x1xf32> to vector<8x128xf32>
      %69 = vector.broadcast %1 : vector<1x128xf32> to vector<8x128xf32>
      %70 = arith.mulf %68, %69 : vector<8x128xf32>
      %71 = arith.addf %67, %70 : vector<8x128xf32>
      %72 = vector.broadcast %2 : vector<1x128xf32> to vector<8x128xf32>
      %73 = arith.addf %71, %72 : vector<8x128xf32>
      %cst_32 = arith.constant 0.000000e+00 : f32
      %74 = vector.broadcast %cst_32 : f32 to vector<8x128xf32>
      %75 = arith.maximumf %73, %74 : vector<8x128xf32>
      %cst_33 = arith.constant dense<0.000000e+00> : vector<8x128xf32>
      %76 = tpu.matmul %75, %6, %cst_33 {dimension_numbers = #tpu.dot_dimension_numbers<[1], [0], [0], [1], [0, 0, 1, 1], [], []>} : vector<8x128xf32>, vector<128x128xf32>, vector<8x128xf32> -> vector<8x128xf32>
      %77 = vector.broadcast %5 : vector<1x128xf32> to vector<8x128xf32>
      %78 = arith.addf %76, %77 : vector<8x128xf32>
      %cst_34 = arith.constant 0.000000e+00 : f32
      %79 = vector.broadcast %cst_34 : f32 to vector<8x128xf32>
      %80 = arith.maximumf %78, %79 : vector<8x128xf32>
      %81 = vector.broadcast %3 : vector<1x128xf32> to vector<8x128xf32>
      %82 = arith.mulf %80, %81 : vector<8x128xf32>
      %cst_35 = arith.constant dense<0.000000e+00> : vector<8xf32>
      %83 = vector.multi_reduction <add>, %82, %cst_35 [1] : vector<8x128xf32> to vector<8xf32>
      %84 = vector.shape_cast %83 : vector<8xf32> to vector<8x1xf32>
      %85 = vector.broadcast %4 : vector<1x128xf32> to vector<8x128xf32>
      %86 = arith.mulf %80, %85 : vector<8x128xf32>
      %cst_36 = arith.constant dense<0.000000e+00> : vector<8xf32>
      %87 = vector.multi_reduction <add>, %86, %cst_36 [1] : vector<8x128xf32> to vector<8xf32>
      %88 = vector.shape_cast %87 : vector<8xf32> to vector<8x1xf32>
      %89 = vector.broadcast %33 : f32 to vector<8x1xf32>
      %90 = arith.mulf %89, %84 : vector<8x1xf32>
      %91 = arith.addf %arg7, %90 : vector<8x1xf32>
      %92 = vector.broadcast %33 : f32 to vector<8x1xf32>
      %93 = arith.mulf %92, %88 : vector<8x1xf32>
      %94 = arith.addf %arg8, %93 : vector<8x1xf32>
      %95 = vector.broadcast %91 : vector<8x1xf32> to vector<8x128xf32>
      %96 = vector.broadcast %0 : vector<1x128xf32> to vector<8x128xf32>
      %97 = arith.mulf %95, %96 : vector<8x128xf32>
      %98 = vector.broadcast %94 : vector<8x1xf32> to vector<8x128xf32>
      %99 = vector.broadcast %1 : vector<1x128xf32> to vector<8x128xf32>
      %100 = arith.mulf %98, %99 : vector<8x128xf32>
      %101 = arith.addf %97, %100 : vector<8x128xf32>
      %102 = vector.broadcast %2 : vector<1x128xf32> to vector<8x128xf32>
      %103 = arith.addf %101, %102 : vector<8x128xf32>
      %cst_37 = arith.constant 0.000000e+00 : f32
      %104 = vector.broadcast %cst_37 : f32 to vector<8x128xf32>
      %105 = arith.maximumf %103, %104 : vector<8x128xf32>
      %cst_38 = arith.constant dense<0.000000e+00> : vector<8x128xf32>
      %106 = tpu.matmul %105, %6, %cst_38 {dimension_numbers = #tpu.dot_dimension_numbers<[1], [0], [0], [1], [0, 0, 1, 1], [], []>} : vector<8x128xf32>, vector<128x128xf32>, vector<8x128xf32> -> vector<8x128xf32>
      %107 = vector.broadcast %5 : vector<1x128xf32> to vector<8x128xf32>
      %108 = arith.addf %106, %107 : vector<8x128xf32>
      %cst_39 = arith.constant 0.000000e+00 : f32
      %109 = vector.broadcast %cst_39 : f32 to vector<8x128xf32>
      %110 = arith.maximumf %108, %109 : vector<8x128xf32>
      %111 = vector.broadcast %3 : vector<1x128xf32> to vector<8x128xf32>
      %112 = arith.mulf %110, %111 : vector<8x128xf32>
      %cst_40 = arith.constant dense<0.000000e+00> : vector<8xf32>
      %113 = vector.multi_reduction <add>, %112, %cst_40 [1] : vector<8x128xf32> to vector<8xf32>
      %114 = vector.shape_cast %113 : vector<8xf32> to vector<8x1xf32>
      %115 = vector.broadcast %4 : vector<1x128xf32> to vector<8x128xf32>
      %116 = arith.mulf %110, %115 : vector<8x128xf32>
      %cst_41 = arith.constant dense<0.000000e+00> : vector<8xf32>
      %117 = vector.multi_reduction <add>, %116, %cst_41 [1] : vector<8x128xf32> to vector<8xf32>
      %118 = vector.shape_cast %117 : vector<8xf32> to vector<8x1xf32>
      %119 = vector.broadcast %32 : f32 to vector<8x1xf32>
      %120 = arith.mulf %119, %114 : vector<8x1xf32>
      %121 = arith.addf %arg7, %120 : vector<8x1xf32>
      %122 = vector.broadcast %32 : f32 to vector<8x1xf32>
      %123 = arith.mulf %122, %118 : vector<8x1xf32>
      %124 = arith.addf %arg8, %123 : vector<8x1xf32>
      %125 = vector.broadcast %121 : vector<8x1xf32> to vector<8x128xf32>
      %126 = vector.broadcast %0 : vector<1x128xf32> to vector<8x128xf32>
      %127 = arith.mulf %125, %126 : vector<8x128xf32>
      %128 = vector.broadcast %124 : vector<8x1xf32> to vector<8x128xf32>
      %129 = vector.broadcast %1 : vector<1x128xf32> to vector<8x128xf32>
      %130 = arith.mulf %128, %129 : vector<8x128xf32>
      %131 = arith.addf %127, %130 : vector<8x128xf32>
      %132 = vector.broadcast %2 : vector<1x128xf32> to vector<8x128xf32>
      %133 = arith.addf %131, %132 : vector<8x128xf32>
      %cst_42 = arith.constant 0.000000e+00 : f32
      %134 = vector.broadcast %cst_42 : f32 to vector<8x128xf32>
      %135 = arith.maximumf %133, %134 : vector<8x128xf32>
      %cst_43 = arith.constant dense<0.000000e+00> : vector<8x128xf32>
      %136 = tpu.matmul %135, %6, %cst_43 {dimension_numbers = #tpu.dot_dimension_numbers<[1], [0], [0], [1], [0, 0, 1, 1], [], []>} : vector<8x128xf32>, vector<128x128xf32>, vector<8x128xf32> -> vector<8x128xf32>
      %137 = vector.broadcast %5 : vector<1x128xf32> to vector<8x128xf32>
      %138 = arith.addf %136, %137 : vector<8x128xf32>
      %cst_44 = arith.constant 0.000000e+00 : f32
      %139 = vector.broadcast %cst_44 : f32 to vector<8x128xf32>
      %140 = arith.maximumf %138, %139 : vector<8x128xf32>
      %141 = vector.broadcast %3 : vector<1x128xf32> to vector<8x128xf32>
      %142 = arith.mulf %140, %141 : vector<8x128xf32>
      %cst_45 = arith.constant dense<0.000000e+00> : vector<8xf32>
      %143 = vector.multi_reduction <add>, %142, %cst_45 [1] : vector<8x128xf32> to vector<8xf32>
      %144 = vector.shape_cast %143 : vector<8xf32> to vector<8x1xf32>
      %145 = vector.broadcast %4 : vector<1x128xf32> to vector<8x128xf32>
      %146 = arith.mulf %140, %145 : vector<8x128xf32>
      %cst_46 = arith.constant dense<0.000000e+00> : vector<8xf32>
      %147 = vector.multi_reduction <add>, %146, %cst_46 [1] : vector<8x128xf32> to vector<8xf32>
      %148 = vector.shape_cast %147 : vector<8xf32> to vector<8x1xf32>
      %cst_47 = arith.constant 2.000000e+00 : f32
      %149 = vector.broadcast %cst_47 : f32 to vector<8x1xf32>
      %150 = arith.mulf %149, %84 : vector<8x1xf32>
      %151 = arith.addf %54, %150 : vector<8x1xf32>
      %cst_48 = arith.constant 2.000000e+00 : f32
      %152 = vector.broadcast %cst_48 : f32 to vector<8x1xf32>
      %153 = arith.mulf %152, %114 : vector<8x1xf32>
      %154 = arith.addf %151, %153 : vector<8x1xf32>
      %155 = arith.addf %154, %144 : vector<8x1xf32>
      %156 = vector.broadcast %34 : f32 to vector<8x1xf32>
      %157 = arith.mulf %156, %155 : vector<8x1xf32>
      %158 = arith.addf %arg7, %157 : vector<8x1xf32>
      %cst_49 = arith.constant 2.000000e+00 : f32
      %159 = vector.broadcast %cst_49 : f32 to vector<8x1xf32>
      %160 = arith.mulf %159, %88 : vector<8x1xf32>
      %161 = arith.addf %58, %160 : vector<8x1xf32>
      %cst_50 = arith.constant 2.000000e+00 : f32
      %162 = vector.broadcast %cst_50 : f32 to vector<8x1xf32>
      %163 = arith.mulf %162, %118 : vector<8x1xf32>
      %164 = arith.addf %161, %163 : vector<8x1xf32>
      %165 = arith.addf %164, %148 : vector<8x1xf32>
      %166 = vector.broadcast %34 : f32 to vector<8x1xf32>
      %167 = arith.mulf %166, %165 : vector<8x1xf32>
      %168 = arith.addf %arg8, %167 : vector<8x1xf32>
      %c1_i32_51 = arith.constant 1 : i32
      %169 = vector.broadcast %158 : vector<8x1xf32> to vector<8x128xf32>
      %170 = vector.broadcast %0 : vector<1x128xf32> to vector<8x128xf32>
      %171 = arith.mulf %169, %170 : vector<8x128xf32>
      %172 = vector.broadcast %168 : vector<8x1xf32> to vector<8x128xf32>
      %173 = vector.broadcast %1 : vector<1x128xf32> to vector<8x128xf32>
      %174 = arith.mulf %172, %173 : vector<8x128xf32>
      %175 = arith.addf %171, %174 : vector<8x128xf32>
      %176 = vector.broadcast %2 : vector<1x128xf32> to vector<8x128xf32>
      %177 = arith.addf %175, %176 : vector<8x128xf32>
      %cst_52 = arith.constant 0.000000e+00 : f32
      %178 = vector.broadcast %cst_52 : f32 to vector<8x128xf32>
      %179 = arith.maximumf %177, %178 : vector<8x128xf32>
      %cst_53 = arith.constant dense<0.000000e+00> : vector<8x128xf32>
      %180 = tpu.matmul %179, %6, %cst_53 {dimension_numbers = #tpu.dot_dimension_numbers<[1], [0], [0], [1], [0, 0, 1, 1], [], []>} : vector<8x128xf32>, vector<128x128xf32>, vector<8x128xf32> -> vector<8x128xf32>
      %181 = vector.broadcast %5 : vector<1x128xf32> to vector<8x128xf32>
      %182 = arith.addf %180, %181 : vector<8x128xf32>
      %cst_54 = arith.constant 0.000000e+00 : f32
      %183 = vector.broadcast %cst_54 : f32 to vector<8x128xf32>
      %184 = arith.maximumf %182, %183 : vector<8x128xf32>
      %185 = vector.broadcast %3 : vector<1x128xf32> to vector<8x128xf32>
      %186 = arith.mulf %184, %185 : vector<8x128xf32>
      %cst_55 = arith.constant dense<0.000000e+00> : vector<8xf32>
      %187 = vector.multi_reduction <add>, %186, %cst_55 [1] : vector<8x128xf32> to vector<8xf32>
      %188 = vector.shape_cast %187 : vector<8xf32> to vector<8x1xf32>
      %189 = vector.broadcast %4 : vector<1x128xf32> to vector<8x128xf32>
      %190 = arith.mulf %184, %189 : vector<8x128xf32>
      %cst_56 = arith.constant dense<0.000000e+00> : vector<8xf32>
      %191 = vector.multi_reduction <add>, %190, %cst_56 [1] : vector<8x128xf32> to vector<8xf32>
      %192 = vector.shape_cast %191 : vector<8xf32> to vector<8x1xf32>
      %193 = vector.broadcast %33 : f32 to vector<8x1xf32>
      %194 = arith.mulf %193, %188 : vector<8x1xf32>
      %195 = arith.addf %158, %194 : vector<8x1xf32>
      %196 = vector.broadcast %33 : f32 to vector<8x1xf32>
      %197 = arith.mulf %196, %192 : vector<8x1xf32>
      %198 = arith.addf %168, %197 : vector<8x1xf32>
      %199 = vector.broadcast %195 : vector<8x1xf32> to vector<8x128xf32>
      %200 = vector.broadcast %0 : vector<1x128xf32> to vector<8x128xf32>
      %201 = arith.mulf %199, %200 : vector<8x128xf32>
      %202 = vector.broadcast %198 : vector<8x1xf32> to vector<8x128xf32>
      %203 = vector.broadcast %1 : vector<1x128xf32> to vector<8x128xf32>
      %204 = arith.mulf %202, %203 : vector<8x128xf32>
      %205 = arith.addf %201, %204 : vector<8x128xf32>
      %206 = vector.broadcast %2 : vector<1x128xf32> to vector<8x128xf32>
      %207 = arith.addf %205, %206 : vector<8x128xf32>
      %cst_57 = arith.constant 0.000000e+00 : f32
      %208 = vector.broadcast %cst_57 : f32 to vector<8x128xf32>
      %209 = arith.maximumf %207, %208 : vector<8x128xf32>
      %cst_58 = arith.constant dense<0.000000e+00> : vector<8x128xf32>
      %210 = tpu.matmul %209, %6, %cst_58 {dimension_numbers = #tpu.dot_dimension_numbers<[1], [0], [0], [1], [0, 0, 1, 1], [], []>} : vector<8x128xf32>, vector<128x128xf32>, vector<8x128xf32> -> vector<8x128xf32>
      %211 = vector.broadcast %5 : vector<1x128xf32> to vector<8x128xf32>
      %212 = arith.addf %210, %211 : vector<8x128xf32>
      %cst_59 = arith.constant 0.000000e+00 : f32
      %213 = vector.broadcast %cst_59 : f32 to vector<8x128xf32>
      %214 = arith.maximumf %212, %213 : vector<8x128xf32>
      %215 = vector.broadcast %3 : vector<1x128xf32> to vector<8x128xf32>
      %216 = arith.mulf %214, %215 : vector<8x128xf32>
      %cst_60 = arith.constant dense<0.000000e+00> : vector<8xf32>
      %217 = vector.multi_reduction <add>, %216, %cst_60 [1] : vector<8x128xf32> to vector<8xf32>
      %218 = vector.shape_cast %217 : vector<8xf32> to vector<8x1xf32>
      %219 = vector.broadcast %4 : vector<1x128xf32> to vector<8x128xf32>
      %220 = arith.mulf %214, %219 : vector<8x128xf32>
      %cst_61 = arith.constant dense<0.000000e+00> : vector<8xf32>
      %221 = vector.multi_reduction <add>, %220, %cst_61 [1] : vector<8x128xf32> to vector<8xf32>
      %222 = vector.shape_cast %221 : vector<8xf32> to vector<8x1xf32>
      %223 = vector.broadcast %33 : f32 to vector<8x1xf32>
      %224 = arith.mulf %223, %218 : vector<8x1xf32>
      %225 = arith.addf %158, %224 : vector<8x1xf32>
      %226 = vector.broadcast %33 : f32 to vector<8x1xf32>
      %227 = arith.mulf %226, %222 : vector<8x1xf32>
      %228 = arith.addf %168, %227 : vector<8x1xf32>
      %229 = vector.broadcast %225 : vector<8x1xf32> to vector<8x128xf32>
      %230 = vector.broadcast %0 : vector<1x128xf32> to vector<8x128xf32>
      %231 = arith.mulf %229, %230 : vector<8x128xf32>
      %232 = vector.broadcast %228 : vector<8x1xf32> to vector<8x128xf32>
      %233 = vector.broadcast %1 : vector<1x128xf32> to vector<8x128xf32>
      %234 = arith.mulf %232, %233 : vector<8x128xf32>
      %235 = arith.addf %231, %234 : vector<8x128xf32>
      %236 = vector.broadcast %2 : vector<1x128xf32> to vector<8x128xf32>
      %237 = arith.addf %235, %236 : vector<8x128xf32>
      %cst_62 = arith.constant 0.000000e+00 : f32
      %238 = vector.broadcast %cst_62 : f32 to vector<8x128xf32>
      %239 = arith.maximumf %237, %238 : vector<8x128xf32>
      %cst_63 = arith.constant dense<0.000000e+00> : vector<8x128xf32>
      %240 = tpu.matmul %239, %6, %cst_63 {dimension_numbers = #tpu.dot_dimension_numbers<[1], [0], [0], [1], [0, 0, 1, 1], [], []>} : vector<8x128xf32>, vector<128x128xf32>, vector<8x128xf32> -> vector<8x128xf32>
      %241 = vector.broadcast %5 : vector<1x128xf32> to vector<8x128xf32>
      %242 = arith.addf %240, %241 : vector<8x128xf32>
      %cst_64 = arith.constant 0.000000e+00 : f32
      %243 = vector.broadcast %cst_64 : f32 to vector<8x128xf32>
      %244 = arith.maximumf %242, %243 : vector<8x128xf32>
      %245 = vector.broadcast %3 : vector<1x128xf32> to vector<8x128xf32>
      %246 = arith.mulf %244, %245 : vector<8x128xf32>
      %cst_65 = arith.constant dense<0.000000e+00> : vector<8xf32>
      %247 = vector.multi_reduction <add>, %246, %cst_65 [1] : vector<8x128xf32> to vector<8xf32>
      %248 = vector.shape_cast %247 : vector<8xf32> to vector<8x1xf32>
      %249 = vector.broadcast %4 : vector<1x128xf32> to vector<8x128xf32>
      %250 = arith.mulf %244, %249 : vector<8x128xf32>
      %cst_66 = arith.constant dense<0.000000e+00> : vector<8xf32>
      %251 = vector.multi_reduction <add>, %250, %cst_66 [1] : vector<8x128xf32> to vector<8xf32>
      %252 = vector.shape_cast %251 : vector<8xf32> to vector<8x1xf32>
      %253 = vector.broadcast %32 : f32 to vector<8x1xf32>
      %254 = arith.mulf %253, %248 : vector<8x1xf32>
      %255 = arith.addf %158, %254 : vector<8x1xf32>
      %256 = vector.broadcast %32 : f32 to vector<8x1xf32>
      %257 = arith.mulf %256, %252 : vector<8x1xf32>
      %258 = arith.addf %168, %257 : vector<8x1xf32>
      %259 = vector.broadcast %255 : vector<8x1xf32> to vector<8x128xf32>
      %260 = vector.broadcast %0 : vector<1x128xf32> to vector<8x128xf32>
      %261 = arith.mulf %259, %260 : vector<8x128xf32>
      %262 = vector.broadcast %258 : vector<8x1xf32> to vector<8x128xf32>
      %263 = vector.broadcast %1 : vector<1x128xf32> to vector<8x128xf32>
      %264 = arith.mulf %262, %263 : vector<8x128xf32>
      %265 = arith.addf %261, %264 : vector<8x128xf32>
      %266 = vector.broadcast %2 : vector<1x128xf32> to vector<8x128xf32>
      %267 = arith.addf %265, %266 : vector<8x128xf32>
      %cst_67 = arith.constant 0.000000e+00 : f32
      %268 = vector.broadcast %cst_67 : f32 to vector<8x128xf32>
      %269 = arith.maximumf %267, %268 : vector<8x128xf32>
      %cst_68 = arith.constant dense<0.000000e+00> : vector<8x128xf32>
      %270 = tpu.matmul %269, %6, %cst_68 {dimension_numbers = #tpu.dot_dimension_numbers<[1], [0], [0], [1], [0, 0, 1, 1], [], []>} : vector<8x128xf32>, vector<128x128xf32>, vector<8x128xf32> -> vector<8x128xf32>
      %271 = vector.broadcast %5 : vector<1x128xf32> to vector<8x128xf32>
      %272 = arith.addf %270, %271 : vector<8x128xf32>
      %cst_69 = arith.constant 0.000000e+00 : f32
      %273 = vector.broadcast %cst_69 : f32 to vector<8x128xf32>
      %274 = arith.maximumf %272, %273 : vector<8x128xf32>
      %275 = vector.broadcast %3 : vector<1x128xf32> to vector<8x128xf32>
      %276 = arith.mulf %274, %275 : vector<8x128xf32>
      %cst_70 = arith.constant dense<0.000000e+00> : vector<8xf32>
      %277 = vector.multi_reduction <add>, %276, %cst_70 [1] : vector<8x128xf32> to vector<8xf32>
      %278 = vector.shape_cast %277 : vector<8xf32> to vector<8x1xf32>
      %279 = vector.broadcast %4 : vector<1x128xf32> to vector<8x128xf32>
      %280 = arith.mulf %274, %279 : vector<8x128xf32>
      %cst_71 = arith.constant dense<0.000000e+00> : vector<8xf32>
      %281 = vector.multi_reduction <add>, %280, %cst_71 [1] : vector<8x128xf32> to vector<8xf32>
      %282 = vector.shape_cast %281 : vector<8xf32> to vector<8x1xf32>
      %cst_72 = arith.constant 2.000000e+00 : f32
      %283 = vector.broadcast %cst_72 : f32 to vector<8x1xf32>
      %284 = arith.mulf %283, %218 : vector<8x1xf32>
      %285 = arith.addf %188, %284 : vector<8x1xf32>
      %cst_73 = arith.constant 2.000000e+00 : f32
      %286 = vector.broadcast %cst_73 : f32 to vector<8x1xf32>
      %287 = arith.mulf %286, %248 : vector<8x1xf32>
      %288 = arith.addf %285, %287 : vector<8x1xf32>
      %289 = arith.addf %288, %278 : vector<8x1xf32>
      %290 = vector.broadcast %34 : f32 to vector<8x1xf32>
      %291 = arith.mulf %290, %289 : vector<8x1xf32>
      %292 = arith.addf %158, %291 : vector<8x1xf32>
      %cst_74 = arith.constant 2.000000e+00 : f32
      %293 = vector.broadcast %cst_74 : f32 to vector<8x1xf32>
      %294 = arith.mulf %293, %222 : vector<8x1xf32>
      %295 = arith.addf %192, %294 : vector<8x1xf32>
      %cst_75 = arith.constant 2.000000e+00 : f32
      %296 = vector.broadcast %cst_75 : f32 to vector<8x1xf32>
      %297 = arith.mulf %296, %252 : vector<8x1xf32>
      %298 = arith.addf %295, %297 : vector<8x1xf32>
      %299 = arith.addf %298, %282 : vector<8x1xf32>
      %300 = vector.broadcast %34 : f32 to vector<8x1xf32>
      %301 = arith.mulf %300, %299 : vector<8x1xf32>
      %302 = arith.addf %168, %301 : vector<8x1xf32>
      %c2_i32 = arith.constant 2 : i32
      %303 = vector.broadcast %292 : vector<8x1xf32> to vector<8x128xf32>
      %304 = vector.broadcast %0 : vector<1x128xf32> to vector<8x128xf32>
      %305 = arith.mulf %303, %304 : vector<8x128xf32>
      %306 = vector.broadcast %302 : vector<8x1xf32> to vector<8x128xf32>
      %307 = vector.broadcast %1 : vector<1x128xf32> to vector<8x128xf32>
      %308 = arith.mulf %306, %307 : vector<8x128xf32>
      %309 = arith.addf %305, %308 : vector<8x128xf32>
      %310 = vector.broadcast %2 : vector<1x128xf32> to vector<8x128xf32>
      %311 = arith.addf %309, %310 : vector<8x128xf32>
      %cst_76 = arith.constant 0.000000e+00 : f32
      %312 = vector.broadcast %cst_76 : f32 to vector<8x128xf32>
      %313 = arith.maximumf %311, %312 : vector<8x128xf32>
      %cst_77 = arith.constant dense<0.000000e+00> : vector<8x128xf32>
      %314 = tpu.matmul %313, %6, %cst_77 {dimension_numbers = #tpu.dot_dimension_numbers<[1], [0], [0], [1], [0, 0, 1, 1], [], []>} : vector<8x128xf32>, vector<128x128xf32>, vector<8x128xf32> -> vector<8x128xf32>
      %315 = vector.broadcast %5 : vector<1x128xf32> to vector<8x128xf32>
      %316 = arith.addf %314, %315 : vector<8x128xf32>
      %cst_78 = arith.constant 0.000000e+00 : f32
      %317 = vector.broadcast %cst_78 : f32 to vector<8x128xf32>
      %318 = arith.maximumf %316, %317 : vector<8x128xf32>
      %319 = vector.broadcast %3 : vector<1x128xf32> to vector<8x128xf32>
      %320 = arith.mulf %318, %319 : vector<8x128xf32>
      %cst_79 = arith.constant dense<0.000000e+00> : vector<8xf32>
      %321 = vector.multi_reduction <add>, %320, %cst_79 [1] : vector<8x128xf32> to vector<8xf32>
      %322 = vector.shape_cast %321 : vector<8xf32> to vector<8x1xf32>
      %323 = vector.broadcast %4 : vector<1x128xf32> to vector<8x128xf32>
      %324 = arith.mulf %318, %323 : vector<8x128xf32>
      %cst_80 = arith.constant dense<0.000000e+00> : vector<8xf32>
      %325 = vector.multi_reduction <add>, %324, %cst_80 [1] : vector<8x128xf32> to vector<8xf32>
      %326 = vector.shape_cast %325 : vector<8xf32> to vector<8x1xf32>
      %327 = vector.broadcast %33 : f32 to vector<8x1xf32>
      %328 = arith.mulf %327, %322 : vector<8x1xf32>
      %329 = arith.addf %292, %328 : vector<8x1xf32>
      %330 = vector.broadcast %33 : f32 to vector<8x1xf32>
      %331 = arith.mulf %330, %326 : vector<8x1xf32>
      %332 = arith.addf %302, %331 : vector<8x1xf32>
      %333 = vector.broadcast %329 : vector<8x1xf32> to vector<8x128xf32>
      %334 = vector.broadcast %0 : vector<1x128xf32> to vector<8x128xf32>
      %335 = arith.mulf %333, %334 : vector<8x128xf32>
      %336 = vector.broadcast %332 : vector<8x1xf32> to vector<8x128xf32>
      %337 = vector.broadcast %1 : vector<1x128xf32> to vector<8x128xf32>
      %338 = arith.mulf %336, %337 : vector<8x128xf32>
      %339 = arith.addf %335, %338 : vector<8x128xf32>
      %340 = vector.broadcast %2 : vector<1x128xf32> to vector<8x128xf32>
      %341 = arith.addf %339, %340 : vector<8x128xf32>
      %cst_81 = arith.constant 0.000000e+00 : f32
      %342 = vector.broadcast %cst_81 : f32 to vector<8x128xf32>
      %343 = arith.maximumf %341, %342 : vector<8x128xf32>
      %cst_82 = arith.constant dense<0.000000e+00> : vector<8x128xf32>
      %344 = tpu.matmul %343, %6, %cst_82 {dimension_numbers = #tpu.dot_dimension_numbers<[1], [0], [0], [1], [0, 0, 1, 1], [], []>} : vector<8x128xf32>, vector<128x128xf32>, vector<8x128xf32> -> vector<8x128xf32>
      %345 = vector.broadcast %5 : vector<1x128xf32> to vector<8x128xf32>
      %346 = arith.addf %344, %345 : vector<8x128xf32>
      %cst_83 = arith.constant 0.000000e+00 : f32
      %347 = vector.broadcast %cst_83 : f32 to vector<8x128xf32>
      %348 = arith.maximumf %346, %347 : vector<8x128xf32>
      %349 = vector.broadcast %3 : vector<1x128xf32> to vector<8x128xf32>
      %350 = arith.mulf %348, %349 : vector<8x128xf32>
      %cst_84 = arith.constant dense<0.000000e+00> : vector<8xf32>
      %351 = vector.multi_reduction <add>, %350, %cst_84 [1] : vector<8x128xf32> to vector<8xf32>
      %352 = vector.shape_cast %351 : vector<8xf32> to vector<8x1xf32>
      %353 = vector.broadcast %4 : vector<1x128xf32> to vector<8x128xf32>
      %354 = arith.mulf %348, %353 : vector<8x128xf32>
      %cst_85 = arith.constant dense<0.000000e+00> : vector<8xf32>
      %355 = vector.multi_reduction <add>, %354, %cst_85 [1] : vector<8x128xf32> to vector<8xf32>
      %356 = vector.shape_cast %355 : vector<8xf32> to vector<8x1xf32>
      %357 = vector.broadcast %33 : f32 to vector<8x1xf32>
      %358 = arith.mulf %357, %352 : vector<8x1xf32>
      %359 = arith.addf %292, %358 : vector<8x1xf32>
      %360 = vector.broadcast %33 : f32 to vector<8x1xf32>
      %361 = arith.mulf %360, %356 : vector<8x1xf32>
      %362 = arith.addf %302, %361 : vector<8x1xf32>
      %363 = vector.broadcast %359 : vector<8x1xf32> to vector<8x128xf32>
      %364 = vector.broadcast %0 : vector<1x128xf32> to vector<8x128xf32>
      %365 = arith.mulf %363, %364 : vector<8x128xf32>
      %366 = vector.broadcast %362 : vector<8x1xf32> to vector<8x128xf32>
      %367 = vector.broadcast %1 : vector<1x128xf32> to vector<8x128xf32>
      %368 = arith.mulf %366, %367 : vector<8x128xf32>
      %369 = arith.addf %365, %368 : vector<8x128xf32>
      %370 = vector.broadcast %2 : vector<1x128xf32> to vector<8x128xf32>
      %371 = arith.addf %369, %370 : vector<8x128xf32>
      %cst_86 = arith.constant 0.000000e+00 : f32
      %372 = vector.broadcast %cst_86 : f32 to vector<8x128xf32>
      %373 = arith.maximumf %371, %372 : vector<8x128xf32>
      %cst_87 = arith.constant dense<0.000000e+00> : vector<8x128xf32>
      %374 = tpu.matmul %373, %6, %cst_87 {dimension_numbers = #tpu.dot_dimension_numbers<[1], [0], [0], [1], [0, 0, 1, 1], [], []>} : vector<8x128xf32>, vector<128x128xf32>, vector<8x128xf32> -> vector<8x128xf32>
      %375 = vector.broadcast %5 : vector<1x128xf32> to vector<8x128xf32>
      %376 = arith.addf %374, %375 : vector<8x128xf32>
      %cst_88 = arith.constant 0.000000e+00 : f32
      %377 = vector.broadcast %cst_88 : f32 to vector<8x128xf32>
      %378 = arith.maximumf %376, %377 : vector<8x128xf32>
      %379 = vector.broadcast %3 : vector<1x128xf32> to vector<8x128xf32>
      %380 = arith.mulf %378, %379 : vector<8x128xf32>
      %cst_89 = arith.constant dense<0.000000e+00> : vector<8xf32>
      %381 = vector.multi_reduction <add>, %380, %cst_89 [1] : vector<8x128xf32> to vector<8xf32>
      %382 = vector.shape_cast %381 : vector<8xf32> to vector<8x1xf32>
      %383 = vector.broadcast %4 : vector<1x128xf32> to vector<8x128xf32>
      %384 = arith.mulf %378, %383 : vector<8x128xf32>
      %cst_90 = arith.constant dense<0.000000e+00> : vector<8xf32>
      %385 = vector.multi_reduction <add>, %384, %cst_90 [1] : vector<8x128xf32> to vector<8xf32>
      %386 = vector.shape_cast %385 : vector<8xf32> to vector<8x1xf32>
      %387 = vector.broadcast %32 : f32 to vector<8x1xf32>
      %388 = arith.mulf %387, %382 : vector<8x1xf32>
      %389 = arith.addf %292, %388 : vector<8x1xf32>
      %390 = vector.broadcast %32 : f32 to vector<8x1xf32>
      %391 = arith.mulf %390, %386 : vector<8x1xf32>
      %392 = arith.addf %302, %391 : vector<8x1xf32>
      %393 = vector.broadcast %389 : vector<8x1xf32> to vector<8x128xf32>
      %394 = vector.broadcast %0 : vector<1x128xf32> to vector<8x128xf32>
      %395 = arith.mulf %393, %394 : vector<8x128xf32>
      %396 = vector.broadcast %392 : vector<8x1xf32> to vector<8x128xf32>
      %397 = vector.broadcast %1 : vector<1x128xf32> to vector<8x128xf32>
      %398 = arith.mulf %396, %397 : vector<8x128xf32>
      %399 = arith.addf %395, %398 : vector<8x128xf32>
      %400 = vector.broadcast %2 : vector<1x128xf32> to vector<8x128xf32>
      %401 = arith.addf %399, %400 : vector<8x128xf32>
      %cst_91 = arith.constant 0.000000e+00 : f32
      %402 = vector.broadcast %cst_91 : f32 to vector<8x128xf32>
      %403 = arith.maximumf %401, %402 : vector<8x128xf32>
      %cst_92 = arith.constant dense<0.000000e+00> : vector<8x128xf32>
      %404 = tpu.matmul %403, %6, %cst_92 {dimension_numbers = #tpu.dot_dimension_numbers<[1], [0], [0], [1], [0, 0, 1, 1], [], []>} : vector<8x128xf32>, vector<128x128xf32>, vector<8x128xf32> -> vector<8x128xf32>
      %405 = vector.broadcast %5 : vector<1x128xf32> to vector<8x128xf32>
      %406 = arith.addf %404, %405 : vector<8x128xf32>
      %cst_93 = arith.constant 0.000000e+00 : f32
      %407 = vector.broadcast %cst_93 : f32 to vector<8x128xf32>
      %408 = arith.maximumf %406, %407 : vector<8x128xf32>
      %409 = vector.broadcast %3 : vector<1x128xf32> to vector<8x128xf32>
      %410 = arith.mulf %408, %409 : vector<8x128xf32>
      %cst_94 = arith.constant dense<0.000000e+00> : vector<8xf32>
      %411 = vector.multi_reduction <add>, %410, %cst_94 [1] : vector<8x128xf32> to vector<8xf32>
      %412 = vector.shape_cast %411 : vector<8xf32> to vector<8x1xf32>
      %413 = vector.broadcast %4 : vector<1x128xf32> to vector<8x128xf32>
      %414 = arith.mulf %408, %413 : vector<8x128xf32>
      %cst_95 = arith.constant dense<0.000000e+00> : vector<8xf32>
      %415 = vector.multi_reduction <add>, %414, %cst_95 [1] : vector<8x128xf32> to vector<8xf32>
      %416 = vector.shape_cast %415 : vector<8xf32> to vector<8x1xf32>
      %cst_96 = arith.constant 2.000000e+00 : f32
      %417 = vector.broadcast %cst_96 : f32 to vector<8x1xf32>
      %418 = arith.mulf %417, %352 : vector<8x1xf32>
      %419 = arith.addf %322, %418 : vector<8x1xf32>
      %cst_97 = arith.constant 2.000000e+00 : f32
      %420 = vector.broadcast %cst_97 : f32 to vector<8x1xf32>
      %421 = arith.mulf %420, %382 : vector<8x1xf32>
      %422 = arith.addf %419, %421 : vector<8x1xf32>
      %423 = arith.addf %422, %412 : vector<8x1xf32>
      %424 = vector.broadcast %34 : f32 to vector<8x1xf32>
      %425 = arith.mulf %424, %423 : vector<8x1xf32>
      %426 = arith.addf %292, %425 : vector<8x1xf32>
      %cst_98 = arith.constant 2.000000e+00 : f32
      %427 = vector.broadcast %cst_98 : f32 to vector<8x1xf32>
      %428 = arith.mulf %427, %356 : vector<8x1xf32>
      %429 = arith.addf %326, %428 : vector<8x1xf32>
      %cst_99 = arith.constant 2.000000e+00 : f32
      %430 = vector.broadcast %cst_99 : f32 to vector<8x1xf32>
      %431 = arith.mulf %430, %386 : vector<8x1xf32>
      %432 = arith.addf %429, %431 : vector<8x1xf32>
      %433 = arith.addf %432, %416 : vector<8x1xf32>
      %434 = vector.broadcast %34 : f32 to vector<8x1xf32>
      %435 = arith.mulf %434, %433 : vector<8x1xf32>
      %436 = arith.addf %302, %435 : vector<8x1xf32>
      %c3_i32 = arith.constant 3 : i32
      %437 = vector.broadcast %426 : vector<8x1xf32> to vector<8x128xf32>
      %438 = vector.broadcast %0 : vector<1x128xf32> to vector<8x128xf32>
      %439 = arith.mulf %437, %438 : vector<8x128xf32>
      %440 = vector.broadcast %436 : vector<8x1xf32> to vector<8x128xf32>
      %441 = vector.broadcast %1 : vector<1x128xf32> to vector<8x128xf32>
      %442 = arith.mulf %440, %441 : vector<8x128xf32>
      %443 = arith.addf %439, %442 : vector<8x128xf32>
      %444 = vector.broadcast %2 : vector<1x128xf32> to vector<8x128xf32>
      %445 = arith.addf %443, %444 : vector<8x128xf32>
      %cst_100 = arith.constant 0.000000e+00 : f32
      %446 = vector.broadcast %cst_100 : f32 to vector<8x128xf32>
      %447 = arith.maximumf %445, %446 : vector<8x128xf32>
      %cst_101 = arith.constant dense<0.000000e+00> : vector<8x128xf32>
      %448 = tpu.matmul %447, %6, %cst_101 {dimension_numbers = #tpu.dot_dimension_numbers<[1], [0], [0], [1], [0, 0, 1, 1], [], []>} : vector<8x128xf32>, vector<128x128xf32>, vector<8x128xf32> -> vector<8x128xf32>
      %449 = vector.broadcast %5 : vector<1x128xf32> to vector<8x128xf32>
      %450 = arith.addf %448, %449 : vector<8x128xf32>
      %cst_102 = arith.constant 0.000000e+00 : f32
      %451 = vector.broadcast %cst_102 : f32 to vector<8x128xf32>
      %452 = arith.maximumf %450, %451 : vector<8x128xf32>
      %453 = vector.broadcast %3 : vector<1x128xf32> to vector<8x128xf32>
      %454 = arith.mulf %452, %453 : vector<8x128xf32>
      %cst_103 = arith.constant dense<0.000000e+00> : vector<8xf32>
      %455 = vector.multi_reduction <add>, %454, %cst_103 [1] : vector<8x128xf32> to vector<8xf32>
      %456 = vector.shape_cast %455 : vector<8xf32> to vector<8x1xf32>
      %457 = vector.broadcast %4 : vector<1x128xf32> to vector<8x128xf32>
      %458 = arith.mulf %452, %457 : vector<8x128xf32>
      %cst_104 = arith.constant dense<0.000000e+00> : vector<8xf32>
      %459 = vector.multi_reduction <add>, %458, %cst_104 [1] : vector<8x128xf32> to vector<8xf32>
      %460 = vector.shape_cast %459 : vector<8xf32> to vector<8x1xf32>
      %461 = vector.broadcast %33 : f32 to vector<8x1xf32>
      %462 = arith.mulf %461, %456 : vector<8x1xf32>
      %463 = arith.addf %426, %462 : vector<8x1xf32>
      %464 = vector.broadcast %33 : f32 to vector<8x1xf32>
      %465 = arith.mulf %464, %460 : vector<8x1xf32>
      %466 = arith.addf %436, %465 : vector<8x1xf32>
      %467 = vector.broadcast %463 : vector<8x1xf32> to vector<8x128xf32>
      %468 = vector.broadcast %0 : vector<1x128xf32> to vector<8x128xf32>
      %469 = arith.mulf %467, %468 : vector<8x128xf32>
      %470 = vector.broadcast %466 : vector<8x1xf32> to vector<8x128xf32>
      %471 = vector.broadcast %1 : vector<1x128xf32> to vector<8x128xf32>
      %472 = arith.mulf %470, %471 : vector<8x128xf32>
      %473 = arith.addf %469, %472 : vector<8x128xf32>
      %474 = vector.broadcast %2 : vector<1x128xf32> to vector<8x128xf32>
      %475 = arith.addf %473, %474 : vector<8x128xf32>
      %cst_105 = arith.constant 0.000000e+00 : f32
      %476 = vector.broadcast %cst_105 : f32 to vector<8x128xf32>
      %477 = arith.maximumf %475, %476 : vector<8x128xf32>
      %cst_106 = arith.constant dense<0.000000e+00> : vector<8x128xf32>
      %478 = tpu.matmul %477, %6, %cst_106 {dimension_numbers = #tpu.dot_dimension_numbers<[1], [0], [0], [1], [0, 0, 1, 1], [], []>} : vector<8x128xf32>, vector<128x128xf32>, vector<8x128xf32> -> vector<8x128xf32>
      %479 = vector.broadcast %5 : vector<1x128xf32> to vector<8x128xf32>
      %480 = arith.addf %478, %479 : vector<8x128xf32>
      %cst_107 = arith.constant 0.000000e+00 : f32
      %481 = vector.broadcast %cst_107 : f32 to vector<8x128xf32>
      %482 = arith.maximumf %480, %481 : vector<8x128xf32>
      %483 = vector.broadcast %3 : vector<1x128xf32> to vector<8x128xf32>
      %484 = arith.mulf %482, %483 : vector<8x128xf32>
      %cst_108 = arith.constant dense<0.000000e+00> : vector<8xf32>
      %485 = vector.multi_reduction <add>, %484, %cst_108 [1] : vector<8x128xf32> to vector<8xf32>
      %486 = vector.shape_cast %485 : vector<8xf32> to vector<8x1xf32>
      %487 = vector.broadcast %4 : vector<1x128xf32> to vector<8x128xf32>
      %488 = arith.mulf %482, %487 : vector<8x128xf32>
      %cst_109 = arith.constant dense<0.000000e+00> : vector<8xf32>
      %489 = vector.multi_reduction <add>, %488, %cst_109 [1] : vector<8x128xf32> to vector<8xf32>
      %490 = vector.shape_cast %489 : vector<8xf32> to vector<8x1xf32>
      %491 = vector.broadcast %33 : f32 to vector<8x1xf32>
      %492 = arith.mulf %491, %486 : vector<8x1xf32>
      %493 = arith.addf %426, %492 : vector<8x1xf32>
      %494 = vector.broadcast %33 : f32 to vector<8x1xf32>
      %495 = arith.mulf %494, %490 : vector<8x1xf32>
      %496 = arith.addf %436, %495 : vector<8x1xf32>
      %497 = vector.broadcast %493 : vector<8x1xf32> to vector<8x128xf32>
      %498 = vector.broadcast %0 : vector<1x128xf32> to vector<8x128xf32>
      %499 = arith.mulf %497, %498 : vector<8x128xf32>
      %500 = vector.broadcast %496 : vector<8x1xf32> to vector<8x128xf32>
      %501 = vector.broadcast %1 : vector<1x128xf32> to vector<8x128xf32>
      %502 = arith.mulf %500, %501 : vector<8x128xf32>
      %503 = arith.addf %499, %502 : vector<8x128xf32>
      %504 = vector.broadcast %2 : vector<1x128xf32> to vector<8x128xf32>
      %505 = arith.addf %503, %504 : vector<8x128xf32>
      %cst_110 = arith.constant 0.000000e+00 : f32
      %506 = vector.broadcast %cst_110 : f32 to vector<8x128xf32>
      %507 = arith.maximumf %505, %506 : vector<8x128xf32>
      %cst_111 = arith.constant dense<0.000000e+00> : vector<8x128xf32>
      %508 = tpu.matmul %507, %6, %cst_111 {dimension_numbers = #tpu.dot_dimension_numbers<[1], [0], [0], [1], [0, 0, 1, 1], [], []>} : vector<8x128xf32>, vector<128x128xf32>, vector<8x128xf32> -> vector<8x128xf32>
      %509 = vector.broadcast %5 : vector<1x128xf32> to vector<8x128xf32>
      %510 = arith.addf %508, %509 : vector<8x128xf32>
      %cst_112 = arith.constant 0.000000e+00 : f32
      %511 = vector.broadcast %cst_112 : f32 to vector<8x128xf32>
      %512 = arith.maximumf %510, %511 : vector<8x128xf32>
      %513 = vector.broadcast %3 : vector<1x128xf32> to vector<8x128xf32>
      %514 = arith.mulf %512, %513 : vector<8x128xf32>
      %cst_113 = arith.constant dense<0.000000e+00> : vector<8xf32>
      %515 = vector.multi_reduction <add>, %514, %cst_113 [1] : vector<8x128xf32> to vector<8xf32>
      %516 = vector.shape_cast %515 : vector<8xf32> to vector<8x1xf32>
      %517 = vector.broadcast %4 : vector<1x128xf32> to vector<8x128xf32>
      %518 = arith.mulf %512, %517 : vector<8x128xf32>
      %cst_114 = arith.constant dense<0.000000e+00> : vector<8xf32>
      %519 = vector.multi_reduction <add>, %518, %cst_114 [1] : vector<8x128xf32> to vector<8xf32>
      %520 = vector.shape_cast %519 : vector<8xf32> to vector<8x1xf32>
      %521 = vector.broadcast %32 : f32 to vector<8x1xf32>
      %522 = arith.mulf %521, %516 : vector<8x1xf32>
      %523 = arith.addf %426, %522 : vector<8x1xf32>
      %524 = vector.broadcast %32 : f32 to vector<8x1xf32>
      %525 = arith.mulf %524, %520 : vector<8x1xf32>
      %526 = arith.addf %436, %525 : vector<8x1xf32>
      %527 = vector.broadcast %523 : vector<8x1xf32> to vector<8x128xf32>
      %528 = vector.broadcast %0 : vector<1x128xf32> to vector<8x128xf32>
      %529 = arith.mulf %527, %528 : vector<8x128xf32>
      %530 = vector.broadcast %526 : vector<8x1xf32> to vector<8x128xf32>
      %531 = vector.broadcast %1 : vector<1x128xf32> to vector<8x128xf32>
      %532 = arith.mulf %530, %531 : vector<8x128xf32>
      %533 = arith.addf %529, %532 : vector<8x128xf32>
      %534 = vector.broadcast %2 : vector<1x128xf32> to vector<8x128xf32>
      %535 = arith.addf %533, %534 : vector<8x128xf32>
      %cst_115 = arith.constant 0.000000e+00 : f32
      %536 = vector.broadcast %cst_115 : f32 to vector<8x128xf32>
      %537 = arith.maximumf %535, %536 : vector<8x128xf32>
      %cst_116 = arith.constant dense<0.000000e+00> : vector<8x128xf32>
      %538 = tpu.matmul %537, %6, %cst_116 {dimension_numbers = #tpu.dot_dimension_numbers<[1], [0], [0], [1], [0, 0, 1, 1], [], []>} : vector<8x128xf32>, vector<128x128xf32>, vector<8x128xf32> -> vector<8x128xf32>
      %539 = vector.broadcast %5 : vector<1x128xf32> to vector<8x128xf32>
      %540 = arith.addf %538, %539 : vector<8x128xf32>
      %cst_117 = arith.constant 0.000000e+00 : f32
      %541 = vector.broadcast %cst_117 : f32 to vector<8x128xf32>
      %542 = arith.maximumf %540, %541 : vector<8x128xf32>
      %543 = vector.broadcast %3 : vector<1x128xf32> to vector<8x128xf32>
      %544 = arith.mulf %542, %543 : vector<8x128xf32>
      %cst_118 = arith.constant dense<0.000000e+00> : vector<8xf32>
      %545 = vector.multi_reduction <add>, %544, %cst_118 [1] : vector<8x128xf32> to vector<8xf32>
      %546 = vector.shape_cast %545 : vector<8xf32> to vector<8x1xf32>
      %547 = vector.broadcast %4 : vector<1x128xf32> to vector<8x128xf32>
      %548 = arith.mulf %542, %547 : vector<8x128xf32>
      %cst_119 = arith.constant dense<0.000000e+00> : vector<8xf32>
      %549 = vector.multi_reduction <add>, %548, %cst_119 [1] : vector<8x128xf32> to vector<8xf32>
      %550 = vector.shape_cast %549 : vector<8xf32> to vector<8x1xf32>
      %cst_120 = arith.constant 2.000000e+00 : f32
      %551 = vector.broadcast %cst_120 : f32 to vector<8x1xf32>
      %552 = arith.mulf %551, %486 : vector<8x1xf32>
      %553 = arith.addf %456, %552 : vector<8x1xf32>
      %cst_121 = arith.constant 2.000000e+00 : f32
      %554 = vector.broadcast %cst_121 : f32 to vector<8x1xf32>
      %555 = arith.mulf %554, %516 : vector<8x1xf32>
      %556 = arith.addf %553, %555 : vector<8x1xf32>
      %557 = arith.addf %556, %546 : vector<8x1xf32>
      %558 = vector.broadcast %34 : f32 to vector<8x1xf32>
      %559 = arith.mulf %558, %557 : vector<8x1xf32>
      %560 = arith.addf %426, %559 : vector<8x1xf32>
      %cst_122 = arith.constant 2.000000e+00 : f32
      %561 = vector.broadcast %cst_122 : f32 to vector<8x1xf32>
      %562 = arith.mulf %561, %490 : vector<8x1xf32>
      %563 = arith.addf %460, %562 : vector<8x1xf32>
      %cst_123 = arith.constant 2.000000e+00 : f32
      %564 = vector.broadcast %cst_123 : f32 to vector<8x1xf32>
      %565 = arith.mulf %564, %520 : vector<8x1xf32>
      %566 = arith.addf %563, %565 : vector<8x1xf32>
      %567 = arith.addf %566, %550 : vector<8x1xf32>
      %568 = vector.broadcast %34 : f32 to vector<8x1xf32>
      %569 = arith.mulf %568, %567 : vector<8x1xf32>
      %570 = arith.addf %436, %569 : vector<8x1xf32>
      %c4_i32 = arith.constant 4 : i32
      %571 = vector.broadcast %560 : vector<8x1xf32> to vector<8x128xf32>
      %572 = vector.broadcast %0 : vector<1x128xf32> to vector<8x128xf32>
      %573 = arith.mulf %571, %572 : vector<8x128xf32>
      %574 = vector.broadcast %570 : vector<8x1xf32> to vector<8x128xf32>
      %575 = vector.broadcast %1 : vector<1x128xf32> to vector<8x128xf32>
      %576 = arith.mulf %574, %575 : vector<8x128xf32>
      %577 = arith.addf %573, %576 : vector<8x128xf32>
      %578 = vector.broadcast %2 : vector<1x128xf32> to vector<8x128xf32>
      %579 = arith.addf %577, %578 : vector<8x128xf32>
      %cst_124 = arith.constant 0.000000e+00 : f32
      %580 = vector.broadcast %cst_124 : f32 to vector<8x128xf32>
      %581 = arith.maximumf %579, %580 : vector<8x128xf32>
      %cst_125 = arith.constant dense<0.000000e+00> : vector<8x128xf32>
      %582 = tpu.matmul %581, %6, %cst_125 {dimension_numbers = #tpu.dot_dimension_numbers<[1], [0], [0], [1], [0, 0, 1, 1], [], []>} : vector<8x128xf32>, vector<128x128xf32>, vector<8x128xf32> -> vector<8x128xf32>
      %583 = vector.broadcast %5 : vector<1x128xf32> to vector<8x128xf32>
      %584 = arith.addf %582, %583 : vector<8x128xf32>
      %cst_126 = arith.constant 0.000000e+00 : f32
      %585 = vector.broadcast %cst_126 : f32 to vector<8x128xf32>
      %586 = arith.maximumf %584, %585 : vector<8x128xf32>
      %587 = vector.broadcast %3 : vector<1x128xf32> to vector<8x128xf32>
      %588 = arith.mulf %586, %587 : vector<8x128xf32>
      %cst_127 = arith.constant dense<0.000000e+00> : vector<8xf32>
      %589 = vector.multi_reduction <add>, %588, %cst_127 [1] : vector<8x128xf32> to vector<8xf32>
      %590 = vector.shape_cast %589 : vector<8xf32> to vector<8x1xf32>
      %591 = vector.broadcast %4 : vector<1x128xf32> to vector<8x128xf32>
      %592 = arith.mulf %586, %591 : vector<8x128xf32>
      %cst_128 = arith.constant dense<0.000000e+00> : vector<8xf32>
      %593 = vector.multi_reduction <add>, %592, %cst_128 [1] : vector<8x128xf32> to vector<8xf32>
      %594 = vector.shape_cast %593 : vector<8xf32> to vector<8x1xf32>
      %595 = vector.broadcast %33 : f32 to vector<8x1xf32>
      %596 = arith.mulf %595, %590 : vector<8x1xf32>
      %597 = arith.addf %560, %596 : vector<8x1xf32>
      %598 = vector.broadcast %33 : f32 to vector<8x1xf32>
      %599 = arith.mulf %598, %594 : vector<8x1xf32>
      %600 = arith.addf %570, %599 : vector<8x1xf32>
      %601 = vector.broadcast %597 : vector<8x1xf32> to vector<8x128xf32>
      %602 = vector.broadcast %0 : vector<1x128xf32> to vector<8x128xf32>
      %603 = arith.mulf %601, %602 : vector<8x128xf32>
      %604 = vector.broadcast %600 : vector<8x1xf32> to vector<8x128xf32>
      %605 = vector.broadcast %1 : vector<1x128xf32> to vector<8x128xf32>
      %606 = arith.mulf %604, %605 : vector<8x128xf32>
      %607 = arith.addf %603, %606 : vector<8x128xf32>
      %608 = vector.broadcast %2 : vector<1x128xf32> to vector<8x128xf32>
      %609 = arith.addf %607, %608 : vector<8x128xf32>
      %cst_129 = arith.constant 0.000000e+00 : f32
      %610 = vector.broadcast %cst_129 : f32 to vector<8x128xf32>
      %611 = arith.maximumf %609, %610 : vector<8x128xf32>
      %cst_130 = arith.constant dense<0.000000e+00> : vector<8x128xf32>
      %612 = tpu.matmul %611, %6, %cst_130 {dimension_numbers = #tpu.dot_dimension_numbers<[1], [0], [0], [1], [0, 0, 1, 1], [], []>} : vector<8x128xf32>, vector<128x128xf32>, vector<8x128xf32> -> vector<8x128xf32>
      %613 = vector.broadcast %5 : vector<1x128xf32> to vector<8x128xf32>
      %614 = arith.addf %612, %613 : vector<8x128xf32>
      %cst_131 = arith.constant 0.000000e+00 : f32
      %615 = vector.broadcast %cst_131 : f32 to vector<8x128xf32>
      %616 = arith.maximumf %614, %615 : vector<8x128xf32>
      %617 = vector.broadcast %3 : vector<1x128xf32> to vector<8x128xf32>
      %618 = arith.mulf %616, %617 : vector<8x128xf32>
      %cst_132 = arith.constant dense<0.000000e+00> : vector<8xf32>
      %619 = vector.multi_reduction <add>, %618, %cst_132 [1] : vector<8x128xf32> to vector<8xf32>
      %620 = vector.shape_cast %619 : vector<8xf32> to vector<8x1xf32>
      %621 = vector.broadcast %4 : vector<1x128xf32> to vector<8x128xf32>
      %622 = arith.mulf %616, %621 : vector<8x128xf32>
      %cst_133 = arith.constant dense<0.000000e+00> : vector<8xf32>
      %623 = vector.multi_reduction <add>, %622, %cst_133 [1] : vector<8x128xf32> to vector<8xf32>
      %624 = vector.shape_cast %623 : vector<8xf32> to vector<8x1xf32>
      %625 = vector.broadcast %33 : f32 to vector<8x1xf32>
      %626 = arith.mulf %625, %620 : vector<8x1xf32>
      %627 = arith.addf %560, %626 : vector<8x1xf32>
      %628 = vector.broadcast %33 : f32 to vector<8x1xf32>
      %629 = arith.mulf %628, %624 : vector<8x1xf32>
      %630 = arith.addf %570, %629 : vector<8x1xf32>
      %631 = vector.broadcast %627 : vector<8x1xf32> to vector<8x128xf32>
      %632 = vector.broadcast %0 : vector<1x128xf32> to vector<8x128xf32>
      %633 = arith.mulf %631, %632 : vector<8x128xf32>
      %634 = vector.broadcast %630 : vector<8x1xf32> to vector<8x128xf32>
      %635 = vector.broadcast %1 : vector<1x128xf32> to vector<8x128xf32>
      %636 = arith.mulf %634, %635 : vector<8x128xf32>
      %637 = arith.addf %633, %636 : vector<8x128xf32>
      %638 = vector.broadcast %2 : vector<1x128xf32> to vector<8x128xf32>
      %639 = arith.addf %637, %638 : vector<8x128xf32>
      %cst_134 = arith.constant 0.000000e+00 : f32
      %640 = vector.broadcast %cst_134 : f32 to vector<8x128xf32>
      %641 = arith.maximumf %639, %640 : vector<8x128xf32>
      %cst_135 = arith.constant dense<0.000000e+00> : vector<8x128xf32>
      %642 = tpu.matmul %641, %6, %cst_135 {dimension_numbers = #tpu.dot_dimension_numbers<[1], [0], [0], [1], [0, 0, 1, 1], [], []>} : vector<8x128xf32>, vector<128x128xf32>, vector<8x128xf32> -> vector<8x128xf32>
      %643 = vector.broadcast %5 : vector<1x128xf32> to vector<8x128xf32>
      %644 = arith.addf %642, %643 : vector<8x128xf32>
      %cst_136 = arith.constant 0.000000e+00 : f32
      %645 = vector.broadcast %cst_136 : f32 to vector<8x128xf32>
      %646 = arith.maximumf %644, %645 : vector<8x128xf32>
      %647 = vector.broadcast %3 : vector<1x128xf32> to vector<8x128xf32>
      %648 = arith.mulf %646, %647 : vector<8x128xf32>
      %cst_137 = arith.constant dense<0.000000e+00> : vector<8xf32>
      %649 = vector.multi_reduction <add>, %648, %cst_137 [1] : vector<8x128xf32> to vector<8xf32>
      %650 = vector.shape_cast %649 : vector<8xf32> to vector<8x1xf32>
      %651 = vector.broadcast %4 : vector<1x128xf32> to vector<8x128xf32>
      %652 = arith.mulf %646, %651 : vector<8x128xf32>
      %cst_138 = arith.constant dense<0.000000e+00> : vector<8xf32>
      %653 = vector.multi_reduction <add>, %652, %cst_138 [1] : vector<8x128xf32> to vector<8xf32>
      %654 = vector.shape_cast %653 : vector<8xf32> to vector<8x1xf32>
      %655 = vector.broadcast %32 : f32 to vector<8x1xf32>
      %656 = arith.mulf %655, %650 : vector<8x1xf32>
      %657 = arith.addf %560, %656 : vector<8x1xf32>
      %658 = vector.broadcast %32 : f32 to vector<8x1xf32>
      %659 = arith.mulf %658, %654 : vector<8x1xf32>
      %660 = arith.addf %570, %659 : vector<8x1xf32>
      %661 = vector.broadcast %657 : vector<8x1xf32> to vector<8x128xf32>
      %662 = vector.broadcast %0 : vector<1x128xf32> to vector<8x128xf32>
      %663 = arith.mulf %661, %662 : vector<8x128xf32>
      %664 = vector.broadcast %660 : vector<8x1xf32> to vector<8x128xf32>
      %665 = vector.broadcast %1 : vector<1x128xf32> to vector<8x128xf32>
      %666 = arith.mulf %664, %665 : vector<8x128xf32>
      %667 = arith.addf %663, %666 : vector<8x128xf32>
      %668 = vector.broadcast %2 : vector<1x128xf32> to vector<8x128xf32>
      %669 = arith.addf %667, %668 : vector<8x128xf32>
      %cst_139 = arith.constant 0.000000e+00 : f32
      %670 = vector.broadcast %cst_139 : f32 to vector<8x128xf32>
      %671 = arith.maximumf %669, %670 : vector<8x128xf32>
      %cst_140 = arith.constant dense<0.000000e+00> : vector<8x128xf32>
      %672 = tpu.matmul %671, %6, %cst_140 {dimension_numbers = #tpu.dot_dimension_numbers<[1], [0], [0], [1], [0, 0, 1, 1], [], []>} : vector<8x128xf32>, vector<128x128xf32>, vector<8x128xf32> -> vector<8x128xf32>
      %673 = vector.broadcast %5 : vector<1x128xf32> to vector<8x128xf32>
      %674 = arith.addf %672, %673 : vector<8x128xf32>
      %cst_141 = arith.constant 0.000000e+00 : f32
      %675 = vector.broadcast %cst_141 : f32 to vector<8x128xf32>
      %676 = arith.maximumf %674, %675 : vector<8x128xf32>
      %677 = vector.broadcast %3 : vector<1x128xf32> to vector<8x128xf32>
      %678 = arith.mulf %676, %677 : vector<8x128xf32>
      %cst_142 = arith.constant dense<0.000000e+00> : vector<8xf32>
      %679 = vector.multi_reduction <add>, %678, %cst_142 [1] : vector<8x128xf32> to vector<8xf32>
      %680 = vector.shape_cast %679 : vector<8xf32> to vector<8x1xf32>
      %681 = vector.broadcast %4 : vector<1x128xf32> to vector<8x128xf32>
      %682 = arith.mulf %676, %681 : vector<8x128xf32>
      %cst_143 = arith.constant dense<0.000000e+00> : vector<8xf32>
      %683 = vector.multi_reduction <add>, %682, %cst_143 [1] : vector<8x128xf32> to vector<8xf32>
      %684 = vector.shape_cast %683 : vector<8xf32> to vector<8x1xf32>
      %cst_144 = arith.constant 2.000000e+00 : f32
      %685 = vector.broadcast %cst_144 : f32 to vector<8x1xf32>
      %686 = arith.mulf %685, %620 : vector<8x1xf32>
      %687 = arith.addf %590, %686 : vector<8x1xf32>
      %cst_145 = arith.constant 2.000000e+00 : f32
      %688 = vector.broadcast %cst_145 : f32 to vector<8x1xf32>
      %689 = arith.mulf %688, %650 : vector<8x1xf32>
      %690 = arith.addf %687, %689 : vector<8x1xf32>
      %691 = arith.addf %690, %680 : vector<8x1xf32>
      %692 = vector.broadcast %34 : f32 to vector<8x1xf32>
      %693 = arith.mulf %692, %691 : vector<8x1xf32>
      %694 = arith.addf %560, %693 : vector<8x1xf32>
      %cst_146 = arith.constant 2.000000e+00 : f32
      %695 = vector.broadcast %cst_146 : f32 to vector<8x1xf32>
      %696 = arith.mulf %695, %624 : vector<8x1xf32>
      %697 = arith.addf %594, %696 : vector<8x1xf32>
      %cst_147 = arith.constant 2.000000e+00 : f32
      %698 = vector.broadcast %cst_147 : f32 to vector<8x1xf32>
      %699 = arith.mulf %698, %654 : vector<8x1xf32>
      %700 = arith.addf %697, %699 : vector<8x1xf32>
      %701 = arith.addf %700, %684 : vector<8x1xf32>
      %702 = vector.broadcast %34 : f32 to vector<8x1xf32>
      %703 = arith.mulf %702, %701 : vector<8x1xf32>
      %704 = arith.addf %570, %703 : vector<8x1xf32>
      %c5_i32 = arith.constant 5 : i32
      %705 = vector.broadcast %694 : vector<8x1xf32> to vector<8x128xf32>
      %706 = vector.broadcast %0 : vector<1x128xf32> to vector<8x128xf32>
      %707 = arith.mulf %705, %706 : vector<8x128xf32>
      %708 = vector.broadcast %704 : vector<8x1xf32> to vector<8x128xf32>
      %709 = vector.broadcast %1 : vector<1x128xf32> to vector<8x128xf32>
      %710 = arith.mulf %708, %709 : vector<8x128xf32>
      %711 = arith.addf %707, %710 : vector<8x128xf32>
      %712 = vector.broadcast %2 : vector<1x128xf32> to vector<8x128xf32>
      %713 = arith.addf %711, %712 : vector<8x128xf32>
      %cst_148 = arith.constant 0.000000e+00 : f32
      %714 = vector.broadcast %cst_148 : f32 to vector<8x128xf32>
      %715 = arith.maximumf %713, %714 : vector<8x128xf32>
      %cst_149 = arith.constant dense<0.000000e+00> : vector<8x128xf32>
      %716 = tpu.matmul %715, %6, %cst_149 {dimension_numbers = #tpu.dot_dimension_numbers<[1], [0], [0], [1], [0, 0, 1, 1], [], []>} : vector<8x128xf32>, vector<128x128xf32>, vector<8x128xf32> -> vector<8x128xf32>
      %717 = vector.broadcast %5 : vector<1x128xf32> to vector<8x128xf32>
      %718 = arith.addf %716, %717 : vector<8x128xf32>
      %cst_150 = arith.constant 0.000000e+00 : f32
      %719 = vector.broadcast %cst_150 : f32 to vector<8x128xf32>
      %720 = arith.maximumf %718, %719 : vector<8x128xf32>
      %721 = vector.broadcast %3 : vector<1x128xf32> to vector<8x128xf32>
      %722 = arith.mulf %720, %721 : vector<8x128xf32>
      %cst_151 = arith.constant dense<0.000000e+00> : vector<8xf32>
      %723 = vector.multi_reduction <add>, %722, %cst_151 [1] : vector<8x128xf32> to vector<8xf32>
      %724 = vector.shape_cast %723 : vector<8xf32> to vector<8x1xf32>
      %725 = vector.broadcast %4 : vector<1x128xf32> to vector<8x128xf32>
      %726 = arith.mulf %720, %725 : vector<8x128xf32>
      %cst_152 = arith.constant dense<0.000000e+00> : vector<8xf32>
      %727 = vector.multi_reduction <add>, %726, %cst_152 [1] : vector<8x128xf32> to vector<8xf32>
      %728 = vector.shape_cast %727 : vector<8xf32> to vector<8x1xf32>
      %729 = vector.broadcast %33 : f32 to vector<8x1xf32>
      %730 = arith.mulf %729, %724 : vector<8x1xf32>
      %731 = arith.addf %694, %730 : vector<8x1xf32>
      %732 = vector.broadcast %33 : f32 to vector<8x1xf32>
      %733 = arith.mulf %732, %728 : vector<8x1xf32>
      %734 = arith.addf %704, %733 : vector<8x1xf32>
      %735 = vector.broadcast %731 : vector<8x1xf32> to vector<8x128xf32>
      %736 = vector.broadcast %0 : vector<1x128xf32> to vector<8x128xf32>
      %737 = arith.mulf %735, %736 : vector<8x128xf32>
      %738 = vector.broadcast %734 : vector<8x1xf32> to vector<8x128xf32>
      %739 = vector.broadcast %1 : vector<1x128xf32> to vector<8x128xf32>
      %740 = arith.mulf %738, %739 : vector<8x128xf32>
      %741 = arith.addf %737, %740 : vector<8x128xf32>
      %742 = vector.broadcast %2 : vector<1x128xf32> to vector<8x128xf32>
      %743 = arith.addf %741, %742 : vector<8x128xf32>
      %cst_153 = arith.constant 0.000000e+00 : f32
      %744 = vector.broadcast %cst_153 : f32 to vector<8x128xf32>
      %745 = arith.maximumf %743, %744 : vector<8x128xf32>
      %cst_154 = arith.constant dense<0.000000e+00> : vector<8x128xf32>
      %746 = tpu.matmul %745, %6, %cst_154 {dimension_numbers = #tpu.dot_dimension_numbers<[1], [0], [0], [1], [0, 0, 1, 1], [], []>} : vector<8x128xf32>, vector<128x128xf32>, vector<8x128xf32> -> vector<8x128xf32>
      %747 = vector.broadcast %5 : vector<1x128xf32> to vector<8x128xf32>
      %748 = arith.addf %746, %747 : vector<8x128xf32>
      %cst_155 = arith.constant 0.000000e+00 : f32
      %749 = vector.broadcast %cst_155 : f32 to vector<8x128xf32>
      %750 = arith.maximumf %748, %749 : vector<8x128xf32>
      %751 = vector.broadcast %3 : vector<1x128xf32> to vector<8x128xf32>
      %752 = arith.mulf %750, %751 : vector<8x128xf32>
      %cst_156 = arith.constant dense<0.000000e+00> : vector<8xf32>
      %753 = vector.multi_reduction <add>, %752, %cst_156 [1] : vector<8x128xf32> to vector<8xf32>
      %754 = vector.shape_cast %753 : vector<8xf32> to vector<8x1xf32>
      %755 = vector.broadcast %4 : vector<1x128xf32> to vector<8x128xf32>
      %756 = arith.mulf %750, %755 : vector<8x128xf32>
      %cst_157 = arith.constant dense<0.000000e+00> : vector<8xf32>
      %757 = vector.multi_reduction <add>, %756, %cst_157 [1] : vector<8x128xf32> to vector<8xf32>
      %758 = vector.shape_cast %757 : vector<8xf32> to vector<8x1xf32>
      %759 = vector.broadcast %33 : f32 to vector<8x1xf32>
      %760 = arith.mulf %759, %754 : vector<8x1xf32>
      %761 = arith.addf %694, %760 : vector<8x1xf32>
      %762 = vector.broadcast %33 : f32 to vector<8x1xf32>
      %763 = arith.mulf %762, %758 : vector<8x1xf32>
      %764 = arith.addf %704, %763 : vector<8x1xf32>
      %765 = vector.broadcast %761 : vector<8x1xf32> to vector<8x128xf32>
      %766 = vector.broadcast %0 : vector<1x128xf32> to vector<8x128xf32>
      %767 = arith.mulf %765, %766 : vector<8x128xf32>
      %768 = vector.broadcast %764 : vector<8x1xf32> to vector<8x128xf32>
      %769 = vector.broadcast %1 : vector<1x128xf32> to vector<8x128xf32>
      %770 = arith.mulf %768, %769 : vector<8x128xf32>
      %771 = arith.addf %767, %770 : vector<8x128xf32>
      %772 = vector.broadcast %2 : vector<1x128xf32> to vector<8x128xf32>
      %773 = arith.addf %771, %772 : vector<8x128xf32>
      %cst_158 = arith.constant 0.000000e+00 : f32
      %774 = vector.broadcast %cst_158 : f32 to vector<8x128xf32>
      %775 = arith.maximumf %773, %774 : vector<8x128xf32>
      %cst_159 = arith.constant dense<0.000000e+00> : vector<8x128xf32>
      %776 = tpu.matmul %775, %6, %cst_159 {dimension_numbers = #tpu.dot_dimension_numbers<[1], [0], [0], [1], [0, 0, 1, 1], [], []>} : vector<8x128xf32>, vector<128x128xf32>, vector<8x128xf32> -> vector<8x128xf32>
      %777 = vector.broadcast %5 : vector<1x128xf32> to vector<8x128xf32>
      %778 = arith.addf %776, %777 : vector<8x128xf32>
      %cst_160 = arith.constant 0.000000e+00 : f32
      %779 = vector.broadcast %cst_160 : f32 to vector<8x128xf32>
      %780 = arith.maximumf %778, %779 : vector<8x128xf32>
      %781 = vector.broadcast %3 : vector<1x128xf32> to vector<8x128xf32>
      %782 = arith.mulf %780, %781 : vector<8x128xf32>
      %cst_161 = arith.constant dense<0.000000e+00> : vector<8xf32>
      %783 = vector.multi_reduction <add>, %782, %cst_161 [1] : vector<8x128xf32> to vector<8xf32>
      %784 = vector.shape_cast %783 : vector<8xf32> to vector<8x1xf32>
      %785 = vector.broadcast %4 : vector<1x128xf32> to vector<8x128xf32>
      %786 = arith.mulf %780, %785 : vector<8x128xf32>
      %cst_162 = arith.constant dense<0.000000e+00> : vector<8xf32>
      %787 = vector.multi_reduction <add>, %786, %cst_162 [1] : vector<8x128xf32> to vector<8xf32>
      %788 = vector.shape_cast %787 : vector<8xf32> to vector<8x1xf32>
      %789 = vector.broadcast %32 : f32 to vector<8x1xf32>
      %790 = arith.mulf %789, %784 : vector<8x1xf32>
      %791 = arith.addf %694, %790 : vector<8x1xf32>
      %792 = vector.broadcast %32 : f32 to vector<8x1xf32>
      %793 = arith.mulf %792, %788 : vector<8x1xf32>
      %794 = arith.addf %704, %793 : vector<8x1xf32>
      %795 = vector.broadcast %791 : vector<8x1xf32> to vector<8x128xf32>
      %796 = vector.broadcast %0 : vector<1x128xf32> to vector<8x128xf32>
      %797 = arith.mulf %795, %796 : vector<8x128xf32>
      %798 = vector.broadcast %794 : vector<8x1xf32> to vector<8x128xf32>
      %799 = vector.broadcast %1 : vector<1x128xf32> to vector<8x128xf32>
      %800 = arith.mulf %798, %799 : vector<8x128xf32>
      %801 = arith.addf %797, %800 : vector<8x128xf32>
      %802 = vector.broadcast %2 : vector<1x128xf32> to vector<8x128xf32>
      %803 = arith.addf %801, %802 : vector<8x128xf32>
      %cst_163 = arith.constant 0.000000e+00 : f32
      %804 = vector.broadcast %cst_163 : f32 to vector<8x128xf32>
      %805 = arith.maximumf %803, %804 : vector<8x128xf32>
      %cst_164 = arith.constant dense<0.000000e+00> : vector<8x128xf32>
      %806 = tpu.matmul %805, %6, %cst_164 {dimension_numbers = #tpu.dot_dimension_numbers<[1], [0], [0], [1], [0, 0, 1, 1], [], []>} : vector<8x128xf32>, vector<128x128xf32>, vector<8x128xf32> -> vector<8x128xf32>
      %807 = vector.broadcast %5 : vector<1x128xf32> to vector<8x128xf32>
      %808 = arith.addf %806, %807 : vector<8x128xf32>
      %cst_165 = arith.constant 0.000000e+00 : f32
      %809 = vector.broadcast %cst_165 : f32 to vector<8x128xf32>
      %810 = arith.maximumf %808, %809 : vector<8x128xf32>
      %811 = vector.broadcast %3 : vector<1x128xf32> to vector<8x128xf32>
      %812 = arith.mulf %810, %811 : vector<8x128xf32>
      %cst_166 = arith.constant dense<0.000000e+00> : vector<8xf32>
      %813 = vector.multi_reduction <add>, %812, %cst_166 [1] : vector<8x128xf32> to vector<8xf32>
      %814 = vector.shape_cast %813 : vector<8xf32> to vector<8x1xf32>
      %815 = vector.broadcast %4 : vector<1x128xf32> to vector<8x128xf32>
      %816 = arith.mulf %810, %815 : vector<8x128xf32>
      %cst_167 = arith.constant dense<0.000000e+00> : vector<8xf32>
      %817 = vector.multi_reduction <add>, %816, %cst_167 [1] : vector<8x128xf32> to vector<8xf32>
      %818 = vector.shape_cast %817 : vector<8xf32> to vector<8x1xf32>
      %cst_168 = arith.constant 2.000000e+00 : f32
      %819 = vector.broadcast %cst_168 : f32 to vector<8x1xf32>
      %820 = arith.mulf %819, %754 : vector<8x1xf32>
      %821 = arith.addf %724, %820 : vector<8x1xf32>
      %cst_169 = arith.constant 2.000000e+00 : f32
      %822 = vector.broadcast %cst_169 : f32 to vector<8x1xf32>
      %823 = arith.mulf %822, %784 : vector<8x1xf32>
      %824 = arith.addf %821, %823 : vector<8x1xf32>
      %825 = arith.addf %824, %814 : vector<8x1xf32>
      %826 = vector.broadcast %34 : f32 to vector<8x1xf32>
      %827 = arith.mulf %826, %825 : vector<8x1xf32>
      %828 = arith.addf %694, %827 : vector<8x1xf32>
      %cst_170 = arith.constant 2.000000e+00 : f32
      %829 = vector.broadcast %cst_170 : f32 to vector<8x1xf32>
      %830 = arith.mulf %829, %758 : vector<8x1xf32>
      %831 = arith.addf %728, %830 : vector<8x1xf32>
      %cst_171 = arith.constant 2.000000e+00 : f32
      %832 = vector.broadcast %cst_171 : f32 to vector<8x1xf32>
      %833 = arith.mulf %832, %788 : vector<8x1xf32>
      %834 = arith.addf %831, %833 : vector<8x1xf32>
      %835 = arith.addf %834, %818 : vector<8x1xf32>
      %836 = vector.broadcast %34 : f32 to vector<8x1xf32>
      %837 = arith.mulf %836, %835 : vector<8x1xf32>
      %838 = arith.addf %704, %837 : vector<8x1xf32>
      %c6_i32 = arith.constant 6 : i32
      %839 = vector.broadcast %828 : vector<8x1xf32> to vector<8x128xf32>
      %840 = vector.broadcast %0 : vector<1x128xf32> to vector<8x128xf32>
      %841 = arith.mulf %839, %840 : vector<8x128xf32>
      %842 = vector.broadcast %838 : vector<8x1xf32> to vector<8x128xf32>
      %843 = vector.broadcast %1 : vector<1x128xf32> to vector<8x128xf32>
      %844 = arith.mulf %842, %843 : vector<8x128xf32>
      %845 = arith.addf %841, %844 : vector<8x128xf32>
      %846 = vector.broadcast %2 : vector<1x128xf32> to vector<8x128xf32>
      %847 = arith.addf %845, %846 : vector<8x128xf32>
      %cst_172 = arith.constant 0.000000e+00 : f32
      %848 = vector.broadcast %cst_172 : f32 to vector<8x128xf32>
      %849 = arith.maximumf %847, %848 : vector<8x128xf32>
      %cst_173 = arith.constant dense<0.000000e+00> : vector<8x128xf32>
      %850 = tpu.matmul %849, %6, %cst_173 {dimension_numbers = #tpu.dot_dimension_numbers<[1], [0], [0], [1], [0, 0, 1, 1], [], []>} : vector<8x128xf32>, vector<128x128xf32>, vector<8x128xf32> -> vector<8x128xf32>
      %851 = vector.broadcast %5 : vector<1x128xf32> to vector<8x128xf32>
      %852 = arith.addf %850, %851 : vector<8x128xf32>
      %cst_174 = arith.constant 0.000000e+00 : f32
      %853 = vector.broadcast %cst_174 : f32 to vector<8x128xf32>
      %854 = arith.maximumf %852, %853 : vector<8x128xf32>
      %855 = vector.broadcast %3 : vector<1x128xf32> to vector<8x128xf32>
      %856 = arith.mulf %854, %855 : vector<8x128xf32>
      %cst_175 = arith.constant dense<0.000000e+00> : vector<8xf32>
      %857 = vector.multi_reduction <add>, %856, %cst_175 [1] : vector<8x128xf32> to vector<8xf32>
      %858 = vector.shape_cast %857 : vector<8xf32> to vector<8x1xf32>
      %859 = vector.broadcast %4 : vector<1x128xf32> to vector<8x128xf32>
      %860 = arith.mulf %854, %859 : vector<8x128xf32>
      %cst_176 = arith.constant dense<0.000000e+00> : vector<8xf32>
      %861 = vector.multi_reduction <add>, %860, %cst_176 [1] : vector<8x128xf32> to vector<8xf32>
      %862 = vector.shape_cast %861 : vector<8xf32> to vector<8x1xf32>
      %863 = vector.broadcast %33 : f32 to vector<8x1xf32>
      %864 = arith.mulf %863, %858 : vector<8x1xf32>
      %865 = arith.addf %828, %864 : vector<8x1xf32>
      %866 = vector.broadcast %33 : f32 to vector<8x1xf32>
      %867 = arith.mulf %866, %862 : vector<8x1xf32>
      %868 = arith.addf %838, %867 : vector<8x1xf32>
      %869 = vector.broadcast %865 : vector<8x1xf32> to vector<8x128xf32>
      %870 = vector.broadcast %0 : vector<1x128xf32> to vector<8x128xf32>
      %871 = arith.mulf %869, %870 : vector<8x128xf32>
      %872 = vector.broadcast %868 : vector<8x1xf32> to vector<8x128xf32>
      %873 = vector.broadcast %1 : vector<1x128xf32> to vector<8x128xf32>
      %874 = arith.mulf %872, %873 : vector<8x128xf32>
      %875 = arith.addf %871, %874 : vector<8x128xf32>
      %876 = vector.broadcast %2 : vector<1x128xf32> to vector<8x128xf32>
      %877 = arith.addf %875, %876 : vector<8x128xf32>
      %cst_177 = arith.constant 0.000000e+00 : f32
      %878 = vector.broadcast %cst_177 : f32 to vector<8x128xf32>
      %879 = arith.maximumf %877, %878 : vector<8x128xf32>
      %cst_178 = arith.constant dense<0.000000e+00> : vector<8x128xf32>
      %880 = tpu.matmul %879, %6, %cst_178 {dimension_numbers = #tpu.dot_dimension_numbers<[1], [0], [0], [1], [0, 0, 1, 1], [], []>} : vector<8x128xf32>, vector<128x128xf32>, vector<8x128xf32> -> vector<8x128xf32>
      %881 = vector.broadcast %5 : vector<1x128xf32> to vector<8x128xf32>
      %882 = arith.addf %880, %881 : vector<8x128xf32>
      %cst_179 = arith.constant 0.000000e+00 : f32
      %883 = vector.broadcast %cst_179 : f32 to vector<8x128xf32>
      %884 = arith.maximumf %882, %883 : vector<8x128xf32>
      %885 = vector.broadcast %3 : vector<1x128xf32> to vector<8x128xf32>
      %886 = arith.mulf %884, %885 : vector<8x128xf32>
      %cst_180 = arith.constant dense<0.000000e+00> : vector<8xf32>
      %887 = vector.multi_reduction <add>, %886, %cst_180 [1] : vector<8x128xf32> to vector<8xf32>
      %888 = vector.shape_cast %887 : vector<8xf32> to vector<8x1xf32>
      %889 = vector.broadcast %4 : vector<1x128xf32> to vector<8x128xf32>
      %890 = arith.mulf %884, %889 : vector<8x128xf32>
      %cst_181 = arith.constant dense<0.000000e+00> : vector<8xf32>
      %891 = vector.multi_reduction <add>, %890, %cst_181 [1] : vector<8x128xf32> to vector<8xf32>
      %892 = vector.shape_cast %891 : vector<8xf32> to vector<8x1xf32>
      %893 = vector.broadcast %33 : f32 to vector<8x1xf32>
      %894 = arith.mulf %893, %888 : vector<8x1xf32>
      %895 = arith.addf %828, %894 : vector<8x1xf32>
      %896 = vector.broadcast %33 : f32 to vector<8x1xf32>
      %897 = arith.mulf %896, %892 : vector<8x1xf32>
      %898 = arith.addf %838, %897 : vector<8x1xf32>
      %899 = vector.broadcast %895 : vector<8x1xf32> to vector<8x128xf32>
      %900 = vector.broadcast %0 : vector<1x128xf32> to vector<8x128xf32>
      %901 = arith.mulf %899, %900 : vector<8x128xf32>
      %902 = vector.broadcast %898 : vector<8x1xf32> to vector<8x128xf32>
      %903 = vector.broadcast %1 : vector<1x128xf32> to vector<8x128xf32>
      %904 = arith.mulf %902, %903 : vector<8x128xf32>
      %905 = arith.addf %901, %904 : vector<8x128xf32>
      %906 = vector.broadcast %2 : vector<1x128xf32> to vector<8x128xf32>
      %907 = arith.addf %905, %906 : vector<8x128xf32>
      %cst_182 = arith.constant 0.000000e+00 : f32
      %908 = vector.broadcast %cst_182 : f32 to vector<8x128xf32>
      %909 = arith.maximumf %907, %908 : vector<8x128xf32>
      %cst_183 = arith.constant dense<0.000000e+00> : vector<8x128xf32>
      %910 = tpu.matmul %909, %6, %cst_183 {dimension_numbers = #tpu.dot_dimension_numbers<[1], [0], [0], [1], [0, 0, 1, 1], [], []>} : vector<8x128xf32>, vector<128x128xf32>, vector<8x128xf32> -> vector<8x128xf32>
      %911 = vector.broadcast %5 : vector<1x128xf32> to vector<8x128xf32>
      %912 = arith.addf %910, %911 : vector<8x128xf32>
      %cst_184 = arith.constant 0.000000e+00 : f32
      %913 = vector.broadcast %cst_184 : f32 to vector<8x128xf32>
      %914 = arith.maximumf %912, %913 : vector<8x128xf32>
      %915 = vector.broadcast %3 : vector<1x128xf32> to vector<8x128xf32>
      %916 = arith.mulf %914, %915 : vector<8x128xf32>
      %cst_185 = arith.constant dense<0.000000e+00> : vector<8xf32>
      %917 = vector.multi_reduction <add>, %916, %cst_185 [1] : vector<8x128xf32> to vector<8xf32>
      %918 = vector.shape_cast %917 : vector<8xf32> to vector<8x1xf32>
      %919 = vector.broadcast %4 : vector<1x128xf32> to vector<8x128xf32>
      %920 = arith.mulf %914, %919 : vector<8x128xf32>
      %cst_186 = arith.constant dense<0.000000e+00> : vector<8xf32>
      %921 = vector.multi_reduction <add>, %920, %cst_186 [1] : vector<8x128xf32> to vector<8xf32>
      %922 = vector.shape_cast %921 : vector<8xf32> to vector<8x1xf32>
      %923 = vector.broadcast %32 : f32 to vector<8x1xf32>
      %924 = arith.mulf %923, %918 : vector<8x1xf32>
      %925 = arith.addf %828, %924 : vector<8x1xf32>
      %926 = vector.broadcast %32 : f32 to vector<8x1xf32>
      %927 = arith.mulf %926, %922 : vector<8x1xf32>
      %928 = arith.addf %838, %927 : vector<8x1xf32>
      %929 = vector.broadcast %925 : vector<8x1xf32> to vector<8x128xf32>
      %930 = vector.broadcast %0 : vector<1x128xf32> to vector<8x128xf32>
      %931 = arith.mulf %929, %930 : vector<8x128xf32>
      %932 = vector.broadcast %928 : vector<8x1xf32> to vector<8x128xf32>
      %933 = vector.broadcast %1 : vector<1x128xf32> to vector<8x128xf32>
      %934 = arith.mulf %932, %933 : vector<8x128xf32>
      %935 = arith.addf %931, %934 : vector<8x128xf32>
      %936 = vector.broadcast %2 : vector<1x128xf32> to vector<8x128xf32>
      %937 = arith.addf %935, %936 : vector<8x128xf32>
      %cst_187 = arith.constant 0.000000e+00 : f32
      %938 = vector.broadcast %cst_187 : f32 to vector<8x128xf32>
      %939 = arith.maximumf %937, %938 : vector<8x128xf32>
      %cst_188 = arith.constant dense<0.000000e+00> : vector<8x128xf32>
      %940 = tpu.matmul %939, %6, %cst_188 {dimension_numbers = #tpu.dot_dimension_numbers<[1], [0], [0], [1], [0, 0, 1, 1], [], []>} : vector<8x128xf32>, vector<128x128xf32>, vector<8x128xf32> -> vector<8x128xf32>
      %941 = vector.broadcast %5 : vector<1x128xf32> to vector<8x128xf32>
      %942 = arith.addf %940, %941 : vector<8x128xf32>
      %cst_189 = arith.constant 0.000000e+00 : f32
      %943 = vector.broadcast %cst_189 : f32 to vector<8x128xf32>
      %944 = arith.maximumf %942, %943 : vector<8x128xf32>
      %945 = vector.broadcast %3 : vector<1x128xf32> to vector<8x128xf32>
      %946 = arith.mulf %944, %945 : vector<8x128xf32>
      %cst_190 = arith.constant dense<0.000000e+00> : vector<8xf32>
      %947 = vector.multi_reduction <add>, %946, %cst_190 [1] : vector<8x128xf32> to vector<8xf32>
      %948 = vector.shape_cast %947 : vector<8xf32> to vector<8x1xf32>
      %949 = vector.broadcast %4 : vector<1x128xf32> to vector<8x128xf32>
      %950 = arith.mulf %944, %949 : vector<8x128xf32>
      %cst_191 = arith.constant dense<0.000000e+00> : vector<8xf32>
      %951 = vector.multi_reduction <add>, %950, %cst_191 [1] : vector<8x128xf32> to vector<8xf32>
      %952 = vector.shape_cast %951 : vector<8xf32> to vector<8x1xf32>
      %cst_192 = arith.constant 2.000000e+00 : f32
      %953 = vector.broadcast %cst_192 : f32 to vector<8x1xf32>
      %954 = arith.mulf %953, %888 : vector<8x1xf32>
      %955 = arith.addf %858, %954 : vector<8x1xf32>
      %cst_193 = arith.constant 2.000000e+00 : f32
      %956 = vector.broadcast %cst_193 : f32 to vector<8x1xf32>
      %957 = arith.mulf %956, %918 : vector<8x1xf32>
      %958 = arith.addf %955, %957 : vector<8x1xf32>
      %959 = arith.addf %958, %948 : vector<8x1xf32>
      %960 = vector.broadcast %34 : f32 to vector<8x1xf32>
      %961 = arith.mulf %960, %959 : vector<8x1xf32>
      %962 = arith.addf %828, %961 : vector<8x1xf32>
      %cst_194 = arith.constant 2.000000e+00 : f32
      %963 = vector.broadcast %cst_194 : f32 to vector<8x1xf32>
      %964 = arith.mulf %963, %892 : vector<8x1xf32>
      %965 = arith.addf %862, %964 : vector<8x1xf32>
      %cst_195 = arith.constant 2.000000e+00 : f32
      %966 = vector.broadcast %cst_195 : f32 to vector<8x1xf32>
      %967 = arith.mulf %966, %922 : vector<8x1xf32>
      %968 = arith.addf %965, %967 : vector<8x1xf32>
      %969 = arith.addf %968, %952 : vector<8x1xf32>
      %970 = vector.broadcast %34 : f32 to vector<8x1xf32>
      %971 = arith.mulf %970, %969 : vector<8x1xf32>
      %972 = arith.addf %838, %971 : vector<8x1xf32>
      %c7_i32_196 = arith.constant 7 : i32
      %973 = vector.broadcast %962 : vector<8x1xf32> to vector<8x128xf32>
      %974 = vector.broadcast %0 : vector<1x128xf32> to vector<8x128xf32>
      %975 = arith.mulf %973, %974 : vector<8x128xf32>
      %976 = vector.broadcast %972 : vector<8x1xf32> to vector<8x128xf32>
      %977 = vector.broadcast %1 : vector<1x128xf32> to vector<8x128xf32>
      %978 = arith.mulf %976, %977 : vector<8x128xf32>
      %979 = arith.addf %975, %978 : vector<8x128xf32>
      %980 = vector.broadcast %2 : vector<1x128xf32> to vector<8x128xf32>
      %981 = arith.addf %979, %980 : vector<8x128xf32>
      %cst_197 = arith.constant 0.000000e+00 : f32
      %982 = vector.broadcast %cst_197 : f32 to vector<8x128xf32>
      %983 = arith.maximumf %981, %982 : vector<8x128xf32>
      %cst_198 = arith.constant dense<0.000000e+00> : vector<8x128xf32>
      %984 = tpu.matmul %983, %6, %cst_198 {dimension_numbers = #tpu.dot_dimension_numbers<[1], [0], [0], [1], [0, 0, 1, 1], [], []>} : vector<8x128xf32>, vector<128x128xf32>, vector<8x128xf32> -> vector<8x128xf32>
      %985 = vector.broadcast %5 : vector<1x128xf32> to vector<8x128xf32>
      %986 = arith.addf %984, %985 : vector<8x128xf32>
      %cst_199 = arith.constant 0.000000e+00 : f32
      %987 = vector.broadcast %cst_199 : f32 to vector<8x128xf32>
      %988 = arith.maximumf %986, %987 : vector<8x128xf32>
      %989 = vector.broadcast %3 : vector<1x128xf32> to vector<8x128xf32>
      %990 = arith.mulf %988, %989 : vector<8x128xf32>
      %cst_200 = arith.constant dense<0.000000e+00> : vector<8xf32>
      %991 = vector.multi_reduction <add>, %990, %cst_200 [1] : vector<8x128xf32> to vector<8xf32>
      %992 = vector.shape_cast %991 : vector<8xf32> to vector<8x1xf32>
      %993 = vector.broadcast %4 : vector<1x128xf32> to vector<8x128xf32>
      %994 = arith.mulf %988, %993 : vector<8x128xf32>
      %cst_201 = arith.constant dense<0.000000e+00> : vector<8xf32>
      %995 = vector.multi_reduction <add>, %994, %cst_201 [1] : vector<8x128xf32> to vector<8xf32>
      %996 = vector.shape_cast %995 : vector<8xf32> to vector<8x1xf32>
      %997 = vector.broadcast %33 : f32 to vector<8x1xf32>
      %998 = arith.mulf %997, %992 : vector<8x1xf32>
      %999 = arith.addf %962, %998 : vector<8x1xf32>
      %1000 = vector.broadcast %33 : f32 to vector<8x1xf32>
      %1001 = arith.mulf %1000, %996 : vector<8x1xf32>
      %1002 = arith.addf %972, %1001 : vector<8x1xf32>
      %1003 = vector.broadcast %999 : vector<8x1xf32> to vector<8x128xf32>
      %1004 = vector.broadcast %0 : vector<1x128xf32> to vector<8x128xf32>
      %1005 = arith.mulf %1003, %1004 : vector<8x128xf32>
      %1006 = vector.broadcast %1002 : vector<8x1xf32> to vector<8x128xf32>
      %1007 = vector.broadcast %1 : vector<1x128xf32> to vector<8x128xf32>
      %1008 = arith.mulf %1006, %1007 : vector<8x128xf32>
      %1009 = arith.addf %1005, %1008 : vector<8x128xf32>
      %1010 = vector.broadcast %2 : vector<1x128xf32> to vector<8x128xf32>
      %1011 = arith.addf %1009, %1010 : vector<8x128xf32>
      %cst_202 = arith.constant 0.000000e+00 : f32
      %1012 = vector.broadcast %cst_202 : f32 to vector<8x128xf32>
      %1013 = arith.maximumf %1011, %1012 : vector<8x128xf32>
      %cst_203 = arith.constant dense<0.000000e+00> : vector<8x128xf32>
      %1014 = tpu.matmul %1013, %6, %cst_203 {dimension_numbers = #tpu.dot_dimension_numbers<[1], [0], [0], [1], [0, 0, 1, 1], [], []>} : vector<8x128xf32>, vector<128x128xf32>, vector<8x128xf32> -> vector<8x128xf32>
      %1015 = vector.broadcast %5 : vector<1x128xf32> to vector<8x128xf32>
      %1016 = arith.addf %1014, %1015 : vector<8x128xf32>
      %cst_204 = arith.constant 0.000000e+00 : f32
      %1017 = vector.broadcast %cst_204 : f32 to vector<8x128xf32>
      %1018 = arith.maximumf %1016, %1017 : vector<8x128xf32>
      %1019 = vector.broadcast %3 : vector<1x128xf32> to vector<8x128xf32>
      %1020 = arith.mulf %1018, %1019 : vector<8x128xf32>
      %cst_205 = arith.constant dense<0.000000e+00> : vector<8xf32>
      %1021 = vector.multi_reduction <add>, %1020, %cst_205 [1] : vector<8x128xf32> to vector<8xf32>
      %1022 = vector.shape_cast %1021 : vector<8xf32> to vector<8x1xf32>
      %1023 = vector.broadcast %4 : vector<1x128xf32> to vector<8x128xf32>
      %1024 = arith.mulf %1018, %1023 : vector<8x128xf32>
      %cst_206 = arith.constant dense<0.000000e+00> : vector<8xf32>
      %1025 = vector.multi_reduction <add>, %1024, %cst_206 [1] : vector<8x128xf32> to vector<8xf32>
      %1026 = vector.shape_cast %1025 : vector<8xf32> to vector<8x1xf32>
      %1027 = vector.broadcast %33 : f32 to vector<8x1xf32>
      %1028 = arith.mulf %1027, %1022 : vector<8x1xf32>
      %1029 = arith.addf %962, %1028 : vector<8x1xf32>
      %1030 = vector.broadcast %33 : f32 to vector<8x1xf32>
      %1031 = arith.mulf %1030, %1026 : vector<8x1xf32>
      %1032 = arith.addf %972, %1031 : vector<8x1xf32>
      %1033 = vector.broadcast %1029 : vector<8x1xf32> to vector<8x128xf32>
      %1034 = vector.broadcast %0 : vector<1x128xf32> to vector<8x128xf32>
      %1035 = arith.mulf %1033, %1034 : vector<8x128xf32>
      %1036 = vector.broadcast %1032 : vector<8x1xf32> to vector<8x128xf32>
      %1037 = vector.broadcast %1 : vector<1x128xf32> to vector<8x128xf32>
      %1038 = arith.mulf %1036, %1037 : vector<8x128xf32>
      %1039 = arith.addf %1035, %1038 : vector<8x128xf32>
      %1040 = vector.broadcast %2 : vector<1x128xf32> to vector<8x128xf32>
      %1041 = arith.addf %1039, %1040 : vector<8x128xf32>
      %cst_207 = arith.constant 0.000000e+00 : f32
      %1042 = vector.broadcast %cst_207 : f32 to vector<8x128xf32>
      %1043 = arith.maximumf %1041, %1042 : vector<8x128xf32>
      %cst_208 = arith.constant dense<0.000000e+00> : vector<8x128xf32>
      %1044 = tpu.matmul %1043, %6, %cst_208 {dimension_numbers = #tpu.dot_dimension_numbers<[1], [0], [0], [1], [0, 0, 1, 1], [], []>} : vector<8x128xf32>, vector<128x128xf32>, vector<8x128xf32> -> vector<8x128xf32>
      %1045 = vector.broadcast %5 : vector<1x128xf32> to vector<8x128xf32>
      %1046 = arith.addf %1044, %1045 : vector<8x128xf32>
      %cst_209 = arith.constant 0.000000e+00 : f32
      %1047 = vector.broadcast %cst_209 : f32 to vector<8x128xf32>
      %1048 = arith.maximumf %1046, %1047 : vector<8x128xf32>
      %1049 = vector.broadcast %3 : vector<1x128xf32> to vector<8x128xf32>
      %1050 = arith.mulf %1048, %1049 : vector<8x128xf32>
      %cst_210 = arith.constant dense<0.000000e+00> : vector<8xf32>
      %1051 = vector.multi_reduction <add>, %1050, %cst_210 [1] : vector<8x128xf32> to vector<8xf32>
      %1052 = vector.shape_cast %1051 : vector<8xf32> to vector<8x1xf32>
      %1053 = vector.broadcast %4 : vector<1x128xf32> to vector<8x128xf32>
      %1054 = arith.mulf %1048, %1053 : vector<8x128xf32>
      %cst_211 = arith.constant dense<0.000000e+00> : vector<8xf32>
      %1055 = vector.multi_reduction <add>, %1054, %cst_211 [1] : vector<8x128xf32> to vector<8xf32>
      %1056 = vector.shape_cast %1055 : vector<8xf32> to vector<8x1xf32>
      %1057 = vector.broadcast %32 : f32 to vector<8x1xf32>
      %1058 = arith.mulf %1057, %1052 : vector<8x1xf32>
      %1059 = arith.addf %962, %1058 : vector<8x1xf32>
      %1060 = vector.broadcast %32 : f32 to vector<8x1xf32>
      %1061 = arith.mulf %1060, %1056 : vector<8x1xf32>
      %1062 = arith.addf %972, %1061 : vector<8x1xf32>
      %1063 = vector.broadcast %1059 : vector<8x1xf32> to vector<8x128xf32>
      %1064 = vector.broadcast %0 : vector<1x128xf32> to vector<8x128xf32>
      %1065 = arith.mulf %1063, %1064 : vector<8x128xf32>
      %1066 = vector.broadcast %1062 : vector<8x1xf32> to vector<8x128xf32>
      %1067 = vector.broadcast %1 : vector<1x128xf32> to vector<8x128xf32>
      %1068 = arith.mulf %1066, %1067 : vector<8x128xf32>
      %1069 = arith.addf %1065, %1068 : vector<8x128xf32>
      %1070 = vector.broadcast %2 : vector<1x128xf32> to vector<8x128xf32>
      %1071 = arith.addf %1069, %1070 : vector<8x128xf32>
      %cst_212 = arith.constant 0.000000e+00 : f32
      %1072 = vector.broadcast %cst_212 : f32 to vector<8x128xf32>
      %1073 = arith.maximumf %1071, %1072 : vector<8x128xf32>
      %cst_213 = arith.constant dense<0.000000e+00> : vector<8x128xf32>
      %1074 = tpu.matmul %1073, %6, %cst_213 {dimension_numbers = #tpu.dot_dimension_numbers<[1], [0], [0], [1], [0, 0, 1, 1], [], []>} : vector<8x128xf32>, vector<128x128xf32>, vector<8x128xf32> -> vector<8x128xf32>
      %1075 = vector.broadcast %5 : vector<1x128xf32> to vector<8x128xf32>
      %1076 = arith.addf %1074, %1075 : vector<8x128xf32>
      %cst_214 = arith.constant 0.000000e+00 : f32
      %1077 = vector.broadcast %cst_214 : f32 to vector<8x128xf32>
      %1078 = arith.maximumf %1076, %1077 : vector<8x128xf32>
      %1079 = vector.broadcast %3 : vector<1x128xf32> to vector<8x128xf32>
      %1080 = arith.mulf %1078, %1079 : vector<8x128xf32>
      %cst_215 = arith.constant dense<0.000000e+00> : vector<8xf32>
      %1081 = vector.multi_reduction <add>, %1080, %cst_215 [1] : vector<8x128xf32> to vector<8xf32>
      %1082 = vector.shape_cast %1081 : vector<8xf32> to vector<8x1xf32>
      %1083 = vector.broadcast %4 : vector<1x128xf32> to vector<8x128xf32>
      %1084 = arith.mulf %1078, %1083 : vector<8x128xf32>
      %cst_216 = arith.constant dense<0.000000e+00> : vector<8xf32>
      %1085 = vector.multi_reduction <add>, %1084, %cst_216 [1] : vector<8x128xf32> to vector<8xf32>
      %1086 = vector.shape_cast %1085 : vector<8xf32> to vector<8x1xf32>
      %cst_217 = arith.constant 2.000000e+00 : f32
      %1087 = vector.broadcast %cst_217 : f32 to vector<8x1xf32>
      %1088 = arith.mulf %1087, %1022 : vector<8x1xf32>
      %1089 = arith.addf %992, %1088 : vector<8x1xf32>
      %cst_218 = arith.constant 2.000000e+00 : f32
      %1090 = vector.broadcast %cst_218 : f32 to vector<8x1xf32>
      %1091 = arith.mulf %1090, %1052 : vector<8x1xf32>
      %1092 = arith.addf %1089, %1091 : vector<8x1xf32>
      %1093 = arith.addf %1092, %1082 : vector<8x1xf32>
      %1094 = vector.broadcast %34 : f32 to vector<8x1xf32>
      %1095 = arith.mulf %1094, %1093 : vector<8x1xf32>
      %1096 = arith.addf %962, %1095 : vector<8x1xf32>
      %cst_219 = arith.constant 2.000000e+00 : f32
      %1097 = vector.broadcast %cst_219 : f32 to vector<8x1xf32>
      %1098 = arith.mulf %1097, %1026 : vector<8x1xf32>
      %1099 = arith.addf %996, %1098 : vector<8x1xf32>
      %cst_220 = arith.constant 2.000000e+00 : f32
      %1100 = vector.broadcast %cst_220 : f32 to vector<8x1xf32>
      %1101 = arith.mulf %1100, %1056 : vector<8x1xf32>
      %1102 = arith.addf %1099, %1101 : vector<8x1xf32>
      %1103 = arith.addf %1102, %1086 : vector<8x1xf32>
      %1104 = vector.broadcast %34 : f32 to vector<8x1xf32>
      %1105 = arith.mulf %1104, %1103 : vector<8x1xf32>
      %1106 = arith.addf %972, %1105 : vector<8x1xf32>
      %cst_221 = arith.constant 0.000000e+00 : f32
      %1107 = vector.shape_cast %1096 : vector<8x1xf32> to vector<8x1xf32>
      %1108 = vector.broadcast %1107 : vector<8x1xf32> to vector<8x128xf32>
      %1109 = vector.broadcast %cst_221 : f32 to vector<8x128xf32>
      %1110 = arith.select %9, %1108, %1109 : vector<8x128xi1>, vector<8x128xf32>
      %cst_222 = arith.constant 0.000000e+00 : f32
      %1111 = vector.shape_cast %1106 : vector<8x1xf32> to vector<8x1xf32>
      %1112 = vector.broadcast %1111 : vector<8x1xf32> to vector<8x128xf32>
      %1113 = vector.broadcast %cst_222 : f32 to vector<8x128xf32>
      %1114 = arith.select %11, %1112, %1113 : vector<8x128xi1>, vector<8x128xf32>
      %1115 = arith.addf %1110, %1114 : vector<8x128xf32>
      %1116 = arith.index_cast %arg6 : i32 to index
      %c0_223 = arith.constant 0 : index
      %c0_224 = arith.constant 0 : index
      %1117 = vector.load %arg5[%1116, %c0_223, %c0_224] : memref<8x8x128xf32, #tpu.memory_space<vmem>>, vector<1x8x128xf32>
      %1118 = vector.shape_cast %1117 : vector<1x8x128xf32> to vector<8x128xf32>
      %1119 = vector.shape_cast %1115 : vector<8x128xf32> to vector<1x8x128xf32>
      tpu.vector_store %arg5[%1116, %c0_223, %c0_224], %1119 {strides = array<i32>} : memref<8x8x128xf32, #tpu.memory_space<vmem>>, vector<1x8x128xf32>,
      scf.yield %1096, %1106 : vector<8x1xf32>, vector<8x1xf32>
    }
    %c7_i32_21 = arith.constant 7 : i32
    return
  }
}

</mosaic_0001>

<llo_original>
// kernel: tpu_custom_call.1
$region0: #{tpu_custom_call.1}
  #allocation0 [shape = 'u32[]', space=smem, size = 0x4, offset = 0x4, fixed_abs, tag = 'smem constant byte address 0x4 - core index']
  #allocation1 [shape = 'u32[144,128]{1,0:T(1,128)}', space=vmem, size = 0x12000, scoped, tag = 'internal scratch']
  %s0 = inlined_call_operand.hbm [shape: f32[8], index: 0, kind: input, shape index: {}]
  %s1 = inlined_call_operand.hbm [shape: f32[8,128], index: 1, kind: input, shape index: {}]
  %s2 = inlined_call_operand.hbm [shape: f32[8,128], index: 2, kind: input, shape index: {}]
  %s3 = inlined_call_operand.hbm [shape: f32[128,128], index: 3, kind: input, shape index: {}]
  %s4 = inlined_call_operand.hbm [shape: f32[8,128], index: 4, kind: input, shape index: {}]
  %s5 = inlined_call_operand.hbm [shape: f32[8,8,128], index: 5, kind: output, shape index: {}]
  %s6 = sld [smem:[#allocation0]]
  $region57: #{tpu_custom_call.1} parent=0
    _
  %s8 = ssub.s32 1, %s6
  %s9 = scalar_select 0, %s8, %s6
  $region1: #{tpu_custom_call.1} parent=0
    #allocation2 [shape = 'u8[512]{0}', space=smem, size = 0x200, scoped, tag = 'input window, operand 0, single buffered']
    #allocation3 [shape = 's32[1]{0}', space=sflag, size = 0x4, scoped, tag = 'scoped memory for tpu_custom_call.1']
    #allocation4 [shape = 's32[1]{0}', space=sflag, size = 0x4, scoped, tag = 'scoped memory for tpu_custom_call.1']
    #allocation5 [shape = 's32[1]{0}', space=sflag, size = 0x4, scoped, tag = 'scoped memory for tpu_custom_call.1']
    #allocation6 [shape = 'u8[4096]{0}', space=vmem, size = 0x1000, scoped, tag = 'input window, operand 1, single buffered']
    #allocation7 [shape = 'u8[4096]{0}', space=vmem, size = 0x1000, scoped, tag = 'input window, operand 2, single buffered']
    #allocation8 [shape = 's32[1]{0}', space=sflag, size = 0x4, scoped, tag = 'scoped memory for tpu_custom_call.1']
    #allocation9 [shape = 'u8[65536]{0}', space=vmem, size = 0x10000, scoped, tag = 'input window, operand 3, single buffered']
    #allocation10 [shape = 'u8[4096]{0}', space=vmem, size = 0x1000, scoped, tag = 'input window, operand 4, single buffered']
    #allocation11 [shape = 's32[1]{0}', space=sflag, size = 0x4, scoped, tag = 'scoped memory for tpu_custom_call.1']
    #allocation12 [shape = 'u8[32768]{0}', space=vmem, size = 0x8000, scoped, tag = 'output window, operand 0, single buffered']
    %10 = vsyncpa [#allocation5], 0
    %11 = vsyncpa [#allocation3], 0
    %12 = vsyncpa [#allocation8], 0
    %13 = vsyncpa [#allocation11], 0
    %14 = vsyncpa [#allocation4], 0
    // Predicated region
    $region2: #{tpu_custom_call.1} parent=1 // pred_check
      _
    $region3: #{tpu_custom_call.1} parent=1 // pred_check_branch
      %16 = sbr.rel (0) target = $region5
    $region4: #{tpu_custom_call.1} parent=1 // pred_region
      %s18 = ssub.s32 16, 16
      %19 = vsyncadd [#allocation5], %s18
      %22 = dma.hbm_to_smem %s0, 16, [#allocation2], [#allocation5]
    $region5: #{tpu_custom_call.1} parent=1 // pred_fallthru
      _
    // Predicated region
    $region6: #{tpu_custom_call.1} parent=1 // pred_check
      _
    $region7: #{tpu_custom_call.1} parent=1 // pred_check_branch
      %24 = sbr.rel (0) target = $region9
    $region8: #{tpu_custom_call.1} parent=1 // pred_region
      %s26 = ssub.s32 128, 128
      %27 = vsyncadd [#allocation3], %s26
      %s29 = sshll.u32 [#allocation6], 4
      %s30 = int_to_ptr.vmem [resolvable:$true] %s29
      %32 = dma.hbm_to_vmem [thread:$0]  %s1, 128, %s30, [#allocation3]
    $region9: #{tpu_custom_call.1} parent=1 // pred_fallthru
      _
    // Predicated region
    $region10: #{tpu_custom_call.1} parent=1 // pred_check
      _
    $region11: #{tpu_custom_call.1} parent=1 // pred_check_branch
      %34 = sbr.rel (0) target = $region13
    $region12: #{tpu_custom_call.1} parent=1 // pred_region
      %s36 = ssub.s32 128, 128
      %37 = vsyncadd [#allocation8], %s36
      %s39 = sshll.u32 [#allocation7], 4
      %s40 = int_to_ptr.vmem [resolvable:$true] %s39
      %42 = dma.hbm_to_vmem [thread:$0]  %s2, 128, %s40, [#allocation8]
    $region13: #{tpu_custom_call.1} parent=1 // pred_fallthru
      _
    // Predicated region
    $region14: #{tpu_custom_call.1} parent=1 // pred_check
      _
    $region15: #{tpu_custom_call.1} parent=1 // pred_check_branch
      %44 = sbr.rel (0) target = $region17
    $region16: #{tpu_custom_call.1} parent=1 // pred_region
      %s46 = ssub.s32 2048, 2048
      %47 = vsyncadd [#allocation8], %s46
      %s48 = sshll.u32 [#allocation9], 4
      %s49 = int_to_ptr.vmem [resolvable:$true] %s48
      %54 = dma.hbm_to_vmem [thread:$0]  %s3, 2048, %s49, [#allocation8], 128, 128, 8
    $region17: #{tpu_custom_call.1} parent=1 // pred_fallthru
      _
    // Predicated region
    $region18: #{tpu_custom_call.1} parent=1 // pred_check
      _
    $region19: #{tpu_custom_call.1} parent=1 // pred_check_branch
      %56 = sbr.rel (0) target = $region21
    $region20: #{tpu_custom_call.1} parent=1 // pred_region
      %s58 = ssub.s32 128, 128
      %59 = vsyncadd [#allocation11], %s58
      %s61 = sshll.u32 [#allocation10], 4
      %s62 = int_to_ptr.vmem [resolvable:$true] %s61
      %64 = dma.hbm_to_vmem [thread:$0]  %s4, 128, %s62, [#allocation11]
    $region21: #{tpu_custom_call.1} parent=1 // pred_fallthru
      _
    // Predicated region
    $region22: #{tpu_custom_call.1} parent=1 // pred_check
      _
    $region23: #{tpu_custom_call.1} parent=1 // pred_check_branch
      %66 = sbr.rel (0) target = $region25
    $region24: #{tpu_custom_call.1} parent=1 // pred_region
      %67 = dma.done [#allocation5], 16
    $region25: #{tpu_custom_call.1} parent=1 // pred_fallthru
      _
    // Predicated region
    $region26: #{tpu_custom_call.1} parent=1 // pred_check
      _
    $region27: #{tpu_custom_call.1} parent=1 // pred_check_branch
      %69 = sbr.rel (0) target = $region29
    $region28: #{tpu_custom_call.1} parent=1 // pred_region
      %70 = dma.done [#allocation3], 128
    $region29: #{tpu_custom_call.1} parent=1 // pred_fallthru
      _
    // Predicated region
    $region30: #{tpu_custom_call.1} parent=1 // pred_check
      _
    $region31: #{tpu_custom_call.1} parent=1 // pred_check_branch
      %72 = sbr.rel (0) target = $region33
    $region32: #{tpu_custom_call.1} parent=1 // pred_region
      %73 = dma.done [#allocation8], 128
    $region33: #{tpu_custom_call.1} parent=1 // pred_fallthru
      _
    // Predicated region
    $region34: #{tpu_custom_call.1} parent=1 // pred_check
      _
    $region35: #{tpu_custom_call.1} parent=1 // pred_check_branch
      %75 = sbr.rel (0) target = $region37
    $region36: #{tpu_custom_call.1} parent=1 // pred_region
      %76 = dma.done [#allocation8], 2048
    $region37: #{tpu_custom_call.1} parent=1 // pred_fallthru
      _
    // Predicated region
    $region38: #{tpu_custom_call.1} parent=1 // pred_check
      _
    $region39: #{tpu_custom_call.1} parent=1 // pred_check_branch
      %78 = sbr.rel (0) target = $region41
    $region40: #{tpu_custom_call.1} parent=1 // pred_region
      %79 = dma.done [#allocation11], 128
    $region41: #{tpu_custom_call.1} parent=1 // pred_fallthru
      _
    %80 = sfence
    %v81 = vld [vmem:[#allocation7] sm:$0x1]
    %v82 = vld [vmem:[#allocation7 + $0x1] sm:$0x1]
    %v83 = vld [vmem:[#allocation7 + $0x2] sm:$0x1]
    %v84 = vld [vmem:[#allocation10] sm:$0x1]
    %v85 = vld [vmem:[#allocation10 + $0x1] sm:$0x1]
    %v86 = vld [vmem:[#allocation10 + $0x2] sm:$0x1]
    %v87 = vld [vmem:[#allocation9] sm:$0xff]
    %v88 = vld [vmem:[#allocation9 + $0x8] sm:$0xff]
    %v89 = vld [vmem:[#allocation9 + $0x10] sm:$0xff]
    %v90 = vld [vmem:[#allocation9 + $0x18] sm:$0xff]
    %v91 = vld [vmem:[#allocation9 + $0x20] sm:$0xff]
    %v92 = vld [vmem:[#allocation9 + $0x28] sm:$0xff]
    %v93 = vld [vmem:[#allocation9 + $0x30] sm:$0xff]
    %v94 = vld [vmem:[#allocation9 + $0x38] sm:$0xff]
    %v95 = vld [vmem:[#allocation9 + $0x40] sm:$0xff]
    %v96 = vld [vmem:[#allocation9 + $0x48] sm:$0xff]
    %v97 = vld [vmem:[#allocation9 + $0x50] sm:$0xff]
    %v98 = vld [vmem:[#allocation9 + $0x58] sm:$0xff]
    %v99 = vld [vmem:[#allocation9 + $0x60] sm:$0xff]
    %v100 = vld [vmem:[#allocation9 + $0x68] sm:$0xff]
    %v101 = vld [vmem:[#allocation9 + $0x70] sm:$0xff]
    %v102 = vld [vmem:[#allocation9 + $0x78] sm:$0xff]
    %v103 = vlaneseq
    %v104 = vand.u32 %v103, 127
    %vm105 = vcmp.eq.s32.totalorder %v104, 0
    %vm106 = vcmp.eq.s32.totalorder %v104, 1
    %v107 = vld [vmem:[#allocation6] sm:$0xff]
    %108 = vst [vmem:[#allocation12] sm:$0xff] %v107
    %v109 = vsel %vm105, %v107, 0.0
    %110 = vadd.xlane.f32.xlu0 %v109
    %v111 = vpop.xlane.xlu0 %110
    %v112 = vsel %vm106, %v107, 0.0
    %113 = vadd.xlane.f32.xlu0 %v112
    %v114 = vpop.xlane.xlu0 %113
    loop: start=1, step=1, limit=8
    $region42: #{tpu_custom_call.1} parent=1 // loop_pre_header
      _
    $region43: #{tpu_custom_call.1} parent=1 // loop_header
      %s116 = sphi 1, %s120
      %p117 = scmp.ge.s32.totalorder %s116, 8
      %v121 = vphi %v111, %v2985
      %v122 = vphi %v114, %v2992
    $region44: #{tpu_custom_call.1} parent=1 // loop_header_branch
      %119 = sbr.rel (%p117) target = $region48
    $region45: #{tpu_custom_call.1} parent=1 // loop_body
      %s123 = sld [smem:[#allocation2 + %s116]]
      %s124 = ssub.s32 %s116, 1
      %s125 = sld [smem:[#allocation2 + %s124]]
      %s126 = ssub.f32 %s123, %s125
      %v127 = vrcp.pop 8.0
      %s128 = vtos %v127
      %s129 = smul.f32 %s126, %s128
      %s130 = smul.f32 %s129, 0.5
      %v131 = vrcp.pop 6.0
      %s132 = vtos %v131
      %s133 = smul.f32 %s129, %s132
      %v134 = vlaneseq
      %v135 = vshrl.u32 %v134, 7
      %v136 = vsub.s32 0, %v135
      %v137 = vrot.slane %v81, %v136
      %v138 = vmul.f32 %v121, %v137
      %v139 = vlaneseq
      %v140 = vshrl.u32 %v139, 7
      %v141 = vsub.s32 0, %v140
      %v142 = vrot.slane %v82, %v141
      %v143 = vmul.f32 %v122, %v142
      %v144 = vadd.f32 %v138, %v143
      %v145 = vlaneseq
      %v146 = vshrl.u32 %v145, 7
      %v147 = vsub.s32 0, %v146
      %v148 = vrot.slane %v83, %v147
      %v149 = vadd.f32 %v144, %v148
      %v150 = vmax.f32 %v149, 0.0
      %v151 = vlaneseq
      %v152 = vshrl.u32 %v151, 7
      %v153 = vsub.s32 0, %v152
      %v154 = vrot.slane %v86, %v153
      %155 = vmatprep.subr.mxu0 0.0
      %156 = vmatpush1.msra.mxu0 %v102
      %157 = vmatprep.subr.mxu0 0.0
      %158 = vmatpush1.msra.mxu0 %v101
      %159 = vmatprep.subr.mxu0 0.0
      %160 = vmatpush1.msra.mxu0 %v100
      %161 = vmatprep.subr.mxu0 0.0
      %162 = vmatpush1.msra.mxu0 %v99
      %163 = vmatprep.subr.mxu0 0.0
      %164 = vmatpush1.msra.mxu0 %v98
      %165 = vmatprep.subr.mxu0 0.0
      %166 = vmatpush1.msra.mxu0 %v97
      %167 = vmatprep.subr.mxu0 0.0
      %168 = vmatpush1.msra.mxu0 %v96
      %169 = vmatprep.subr.mxu0 0.0
      %170 = vmatpush1.msra.mxu0 %v95
      %171 = vmatprep.subr.mxu0 0.0
      %172 = vmatpush1.msra.mxu0 %v94
      %173 = vmatprep.subr.mxu0 0.0
      %174 = vmatpush1.msra.mxu0 %v93
      %175 = vmatprep.subr.mxu0 0.0
      %176 = vmatpush1.msra.mxu0 %v92
      %177 = vmatprep.subr.mxu0 0.0
      %178 = vmatpush1.msra.mxu0 %v91
      %179 = vmatprep.subr.mxu0 0.0
      %180 = vmatpush1.msra.mxu0 %v90
      %181 = vmatprep.subr.mxu0 0.0
      %182 = vmatpush1.msra.mxu0 %v89
      %183 = vmatprep.subr.mxu0 0.0
      %184 = vmatpush1.msra.mxu0 %v88
      %185 = vmatprep.subr.mxu0 0.0
      %186 = vmatpush1.msra.mxu0 %v87
      %187 = vmatprep.subr.mxu0 0.0
      %188 = vmatpush2.msra.mxu0 0.0
      %189 = vmatprep.subr.mxu0 0.0
      %190 = vmatpush2.msra.mxu0 0.0
      %191 = vmatprep.subr.mxu0 0.0
      %192 = vmatpush2.msra.mxu0 0.0
      %193 = vmatprep.subr.mxu0 0.0
      %194 = vmatpush2.msra.mxu0 0.0
      %195 = vmatprep.subr.mxu0 0.0
      %196 = vmatpush2.msra.mxu0 0.0
      %197 = vmatprep.subr.mxu0 0.0
      %198 = vmatpush2.msra.mxu0 0.0
      %199 = vmatprep.subr.mxu0 0.0
      %200 = vmatpush2.msra.mxu0 0.0
      %201 = vmatprep.subr.mxu0 0.0
      %202 = vmatpush2.msra.mxu0 0.0
      %203 = vmatprep.subr.mxu0 0.0
      %204 = vmatpush2.msra.mxu0 0.0
      %205 = vmatprep.subr.mxu0 0.0
      %206 = vmatpush2.msra.mxu0 0.0
      %207 = vmatprep.subr.mxu0 0.0
      %208 = vmatpush2.msra.mxu0 0.0
      %209 = vmatprep.subr.mxu0 0.0
      %210 = vmatpush2.msra.mxu0 0.0
      %211 = vmatprep.subr.mxu0 0.0
      %212 = vmatpush2.msra.mxu0 0.0
      %213 = vmatprep.subr.mxu0 0.0
      %214 = vmatpush2.msra.mxu0 0.0
      %215 = vmatprep.subr.mxu0 0.0
      %216 = vmatpush2.msra.mxu0 0.0
      %217 = vmatprep.subr.mxu0 0.0
      %218 = vmatpush2.msra.mxu0 0.0
      %219 = vmatprep.mubr.f32.mxu0 0.0
      %220 = vmatmul.mubr.f32.gmra.mxu0 %v150
      %v221 = vpop.f32.mrf.mxu0
      %v222 = vadd.f32 %v154, %v221
      %v223 = vpop.f32.mrf.mxu0
      %224 = vdwg.mxu0
      %v225 = vmax.f32 %v222, 0.0
      %v226 = vlaneseq
      %v227 = vshrl.u32 %v226, 7
      %v228 = vsub.s32 0, %v227
      %v229 = vrot.slane %v84, %v228
      %v230 = vmul.f32 %v225, %v229
      %231 = vadd.xlane.f32.xlu0 %v230
      %v232 = vpop.xlane.xlu0 %231
      %v233 = vlaneseq
      %v234 = vshrl.u32 %v233, 7
      %v235 = vsub.s32 0, %v234
      %v236 = vrot.slane %v85, %v235
      %v237 = vmul.f32 %v225, %v236
      %238 = vadd.xlane.f32.xlu0 %v237
      %v239 = vpop.xlane.xlu0 %238
      %v240 = vstv %s130
      %v241 = vmul.f32 %v240, %v232
      %v242 = vadd.f32 %v121, %v241
      %v243 = vmul.f32 %v240, %v239
      %v244 = vadd.f32 %v122, %v243
      %v245 = vmul.f32 %v242, %v137
      %v246 = vmul.f32 %v244, %v142
      %v247 = vadd.f32 %v245, %v246
      %v248 = vadd.f32 %v247, %v148
      %v249 = vmax.f32 %v248, 0.0
      %250 = vmatprep.subr.mxu0 0.0
      %251 = vmatpush1.msra.mxu0 %v102
      %252 = vmatprep.subr.mxu0 0.0
      %253 = vmatpush1.msra.mxu0 %v101
      %254 = vmatprep.subr.mxu0 0.0
      %255 = vmatpush1.msra.mxu0 %v100
      %256 = vmatprep.subr.mxu0 0.0
      %257 = vmatpush1.msra.mxu0 %v99
      %258 = vmatprep.subr.mxu0 0.0
      %259 = vmatpush1.msra.mxu0 %v98
      %260 = vmatprep.subr.mxu0 0.0
      %261 = vmatpush1.msra.mxu0 %v97
      %262 = vmatprep.subr.mxu0 0.0
      %263 = vmatpush1.msra.mxu0 %v96
      %264 = vmatprep.subr.mxu0 0.0
      %265 = vmatpush1.msra.mxu0 %v95
      %266 = vmatprep.subr.mxu0 0.0
      %267 = vmatpush1.msra.mxu0 %v94
      %268 = vmatprep.subr.mxu0 0.0
      %269 = vmatpush1.msra.mxu0 %v93
      %270 = vmatprep.subr.mxu0 0.0
      %271 = vmatpush1.msra.mxu0 %v92
      %272 = vmatprep.subr.mxu0 0.0
      %273 = vmatpush1.msra.mxu0 %v91
      %274 = vmatprep.subr.mxu0 0.0
      %275 = vmatpush1.msra.mxu0 %v90
      %276 = vmatprep.subr.mxu0 0.0
      %277 = vmatpush1.msra.mxu0 %v89
      %278 = vmatprep.subr.mxu0 0.0
      %279 = vmatpush1.msra.mxu0 %v88
      %280 = vmatprep.subr.mxu0 0.0
      %281 = vmatpush1.msra.mxu0 %v87
      %282 = vmatprep.subr.mxu0 0.0
      %283 = vmatpush2.msra.mxu0 0.0
      %284 = vmatprep.subr.mxu0 0.0
      %285 = vmatpush2.msra.mxu0 0.0
      %286 = vmatprep.subr.mxu0 0.0
      %287 = vmatpush2.msra.mxu0 0.0
      %288 = vmatprep.subr.mxu0 0.0
      %289 = vmatpush2.msra.mxu0 0.0
      %290 = vmatprep.subr.mxu0 0.0
      %291 = vmatpush2.msra.mxu0 0.0
      %292 = vmatprep.subr.mxu0 0.0
      %293 = vmatpush2.msra.mxu0 0.0
      %294 = vmatprep.subr.mxu0 0.0
      %295 = vmatpush2.msra.mxu0 0.0
      %296 = vmatprep.subr.mxu0 0.0
      %297 = vmatpush2.msra.mxu0 0.0
      %298 = vmatprep.subr.mxu0 0.0
      %299 = vmatpush2.msra.mxu0 0.0
      %300 = vmatprep.subr.mxu0 0.0
      %301 = vmatpush2.msra.mxu0 0.0
      %302 = vmatprep.subr.mxu0 0.0
      %303 = vmatpush2.msra.mxu0 0.0
      %304 = vmatprep.subr.mxu0 0.0
      %305 = vmatpush2.msra.mxu0 0.0
      %306 = vmatprep.subr.mxu0 0.0
      %307 = vmatpush2.msra.mxu0 0.0
      %308 = vmatprep.subr.mxu0 0.0
      %309 = vmatpush2.msra.mxu0 0.0
      %310 = vmatprep.subr.mxu0 0.0
      %311 = vmatpush2.msra.mxu0 0.0
      %312 = vmatprep.subr.mxu0 0.0
      %313 = vmatpush2.msra.mxu0 0.0
      %314 = vmatprep.mubr.f32.mxu0 0.0
      %315 = vmatmul.mubr.f32.gmra.mxu0 %v249
      %v316 = vpop.f32.mrf.mxu0
      %v317 = vadd.f32 %v154, %v316
      %v318 = vpop.f32.mrf.mxu0
      %319 = vdwg.mxu0
      %v320 = vmax.f32 %v317, 0.0
      %v321 = vmul.f32 %v320, %v229
      %322 = vadd.xlane.f32.xlu0 %v321
      %v323 = vpop.xlane.xlu0 %322
      %v324 = vmul.f32 %v320, %v236
      %325 = vadd.xlane.f32.xlu0 %v324
      %v326 = vpop.xlane.xlu0 %325
      %v327 = vmul.f32 %v240, %v323
      %v328 = vadd.f32 %v121, %v327
      %v329 = vmul.f32 %v240, %v326
      %v330 = vadd.f32 %v122, %v329
      %v331 = vmul.f32 %v328, %v137
      %v332 = vmul.f32 %v330, %v142
      %v333 = vadd.f32 %v331, %v332
      %v334 = vadd.f32 %v333, %v148
      %v335 = vmax.f32 %v334, 0.0
      %336 = vmatprep.subr.mxu0 0.0
      %337 = vmatpush1.msra.mxu0 %v102
      %338 = vmatprep.subr.mxu0 0.0
      %339 = vmatpush1.msra.mxu0 %v101
      %340 = vmatprep.subr.mxu0 0.0
      %341 = vmatpush1.msra.mxu0 %v100
      %342 = vmatprep.subr.mxu0 0.0
      %343 = vmatpush1.msra.mxu0 %v99
      %344 = vmatprep.subr.mxu0 0.0
      %345 = vmatpush1.msra.mxu0 %v98
      %346 = vmatprep.subr.mxu0 0.0
      %347 = vmatpush1.msra.mxu0 %v97
      %348 = vmatprep.subr.mxu0 0.0
      %349 = vmatpush1.msra.mxu0 %v96
      %350 = vmatprep.subr.mxu0 0.0
      %351 = vmatpush1.msra.mxu0 %v95
      %352 = vmatprep.subr.mxu0 0.0
      %353 = vmatpush1.msra.mxu0 %v94
      %354 = vmatprep.subr.mxu0 0.0
      %355 = vmatpush1.msra.mxu0 %v93
      %356 = vmatprep.subr.mxu0 0.0
      %357 = vmatpush1.msra.mxu0 %v92
      %358 = vmatprep.subr.mxu0 0.0
      %359 = vmatpush1.msra.mxu0 %v91
      %360 = vmatprep.subr.mxu0 0.0
      %361 = vmatpush1.msra.mxu0 %v90
      %362 = vmatprep.subr.mxu0 0.0
      %363 = vmatpush1.msra.mxu0 %v89
      %364 = vmatprep.subr.mxu0 0.0
      %365 = vmatpush1.msra.mxu0 %v88
      %366 = vmatprep.subr.mxu0 0.0
      %367 = vmatpush1.msra.mxu0 %v87
      %368 = vmatprep.subr.mxu0 0.0
      %369 = vmatpush2.msra.mxu0 0.0
      %370 = vmatprep.subr.mxu0 0.0
      %371 = vmatpush2.msra.mxu0 0.0
      %372 = vmatprep.subr.mxu0 0.0
      %373 = vmatpush2.msra.mxu0 0.0
      %374 = vmatprep.subr.mxu0 0.0
      %375 = vmatpush2.msra.mxu0 0.0
      %376 = vmatprep.subr.mxu0 0.0
      %377 = vmatpush2.msra.mxu0 0.0
      %378 = vmatprep.subr.mxu0 0.0
      %379 = vmatpush2.msra.mxu0 0.0
      %380 = vmatprep.subr.mxu0 0.0
      %381 = vmatpush2.msra.mxu0 0.0
      %382 = vmatprep.subr.mxu0 0.0
      %383 = vmatpush2.msra.mxu0 0.0
      %384 = vmatprep.subr.mxu0 0.0
      %385 = vmatpush2.msra.mxu0 0.0
      %386 = vmatprep.subr.mxu0 0.0
      %387 = vmatpush2.msra.mxu0 0.0
      %388 = vmatprep.subr.mxu0 0.0
      %389 = vmatpush2.msra.mxu0 0.0
      %390 = vmatprep.subr.mxu0 0.0
      %391 = vmatpush2.msra.mxu0 0.0
      %392 = vmatprep.subr.mxu0 0.0
      %393 = vmatpush2.msra.mxu0 0.0
      %394 = vmatprep.subr.mxu0 0.0
      %395 = vmatpush2.msra.mxu0 0.0
      %396 = vmatprep.subr.mxu0 0.0
      %397 = vmatpush2.msra.mxu0 0.0
      %398 = vmatprep.subr.mxu0 0.0
      %399 = vmatpush2.msra.mxu0 0.0
      %400 = vmatprep.mubr.f32.mxu0 0.0
      %401 = vmatmul.mubr.f32.gmra.mxu0 %v335
      %v402 = vpop.f32.mrf.mxu0
      %v403 = vadd.f32 %v154, %v402
      %v404 = vpop.f32.mrf.mxu0
      %405 = vdwg.mxu0
      %v406 = vmax.f32 %v403, 0.0
      %v407 = vmul.f32 %v406, %v229
      %408 = vadd.xlane.f32.xlu0 %v407
      %v409 = vpop.xlane.xlu0 %408
      %v410 = vmul.f32 %v406, %v236
      %411 = vadd.xlane.f32.xlu0 %v410
      %v412 = vpop.xlane.xlu0 %411
      %v413 = vstv %s129
      %v414 = vmul.f32 %v413, %v409
      %v415 = vadd.f32 %v121, %v414
      %v416 = vmul.f32 %v413, %v412
      %v417 = vadd.f32 %v122, %v416
      %v418 = vmul.f32 %v415, %v137
      %v419 = vmul.f32 %v417, %v142
      %v420 = vadd.f32 %v418, %v419
      %v421 = vadd.f32 %v420, %v148
      %v422 = vmax.f32 %v421, 0.0
      %423 = vmatprep.subr.mxu0 0.0
      %424 = vmatpush1.msra.mxu0 %v102
      %425 = vmatprep.subr.mxu0 0.0
      %426 = vmatpush1.msra.mxu0 %v101
      %427 = vmatprep.subr.mxu0 0.0
      %428 = vmatpush1.msra.mxu0 %v100
      %429 = vmatprep.subr.mxu0 0.0
      %430 = vmatpush1.msra.mxu0 %v99
      %431 = vmatprep.subr.mxu0 0.0
      %432 = vmatpush1.msra.mxu0 %v98
      %433 = vmatprep.subr.mxu0 0.0
      %434 = vmatpush1.msra.mxu0 %v97
      %435 = vmatprep.subr.mxu0 0.0
      %436 = vmatpush1.msra.mxu0 %v96
      %437 = vmatprep.subr.mxu0 0.0
      %438 = vmatpush1.msra.mxu0 %v95
      %439 = vmatprep.subr.mxu0 0.0
      %440 = vmatpush1.msra.mxu0 %v94
      %441 = vmatprep.subr.mxu0 0.0
      %442 = vmatpush1.msra.mxu0 %v93
      %443 = vmatprep.subr.mxu0 0.0
      %444 = vmatpush1.msra.mxu0 %v92
      %445 = vmatprep.subr.mxu0 0.0
      %446 = vmatpush1.msra.mxu0 %v91
      %447 = vmatprep.subr.mxu0 0.0
      %448 = vmatpush1.msra.mxu0 %v90
      %449 = vmatprep.subr.mxu0 0.0
      %450 = vmatpush1.msra.mxu0 %v89
      %451 = vmatprep.subr.mxu0 0.0
      %452 = vmatpush1.msra.mxu0 %v88
      %453 = vmatprep.subr.mxu0 0.0
      %454 = vmatpush1.msra.mxu0 %v87
      %455 = vmatprep.subr.mxu0 0.0
      %456 = vmatpush2.msra.mxu0 0.0
      %457 = vmatprep.subr.mxu0 0.0
      %458 = vmatpush2.msra.mxu0 0.0
      %459 = vmatprep.subr.mxu0 0.0
      %460 = vmatpush2.msra.mxu0 0.0
      %461 = vmatprep.subr.mxu0 0.0
      %462 = vmatpush2.msra.mxu0 0.0
      %463 = vmatprep.subr.mxu0 0.0
      %464 = vmatpush2.msra.mxu0 0.0
      %465 = vmatprep.subr.mxu0 0.0
      %466 = vmatpush2.msra.mxu0 0.0
      %467 = vmatprep.subr.mxu0 0.0
      %468 = vmatpush2.msra.mxu0 0.0
      %469 = vmatprep.subr.mxu0 0.0
      %470 = vmatpush2.msra.mxu0 0.0
      %471 = vmatprep.subr.mxu0 0.0
      %472 = vmatpush2.msra.mxu0 0.0
      %473 = vmatprep.subr.mxu0 0.0
      %474 = vmatpush2.msra.mxu0 0.0
      %475 = vmatprep.subr.mxu0 0.0
      %476 = vmatpush2.msra.mxu0 0.0
      %477 = vmatprep.subr.mxu0 0.0
      %478 = vmatpush2.msra.mxu0 0.0
      %479 = vmatprep.subr.mxu0 0.0
      %480 = vmatpush2.msra.mxu0 0.0
      %481 = vmatprep.subr.mxu0 0.0
      %482 = vmatpush2.msra.mxu0 0.0
      %483 = vmatprep.subr.mxu0 0.0
      %484 = vmatpush2.msra.mxu0 0.0
      %485 = vmatprep.subr.mxu0 0.0
      %486 = vmatpush2.msra.mxu0 0.0
      %487 = vmatprep.mubr.f32.mxu0 0.0
      %488 = vmatmul.mubr.f32.gmra.mxu0 %v422
      %v489 = vpop.f32.mrf.mxu0
      %v490 = vadd.f32 %v154, %v489
      %v491 = vpop.f32.mrf.mxu0
      %492 = vdwg.mxu0
      %v493 = vmax.f32 %v490, 0.0
      %v494 = vmul.f32 %v493, %v229
      %495 = vadd.xlane.f32.xlu0 %v494
      %v496 = vpop.xlane.xlu0 %495
      %v497 = vmul.f32 %v493, %v236
      %498 = vadd.xlane.f32.xlu0 %v497
      %v499 = vpop.xlane.xlu0 %498
      %v500 = vmul.f32 %v323, 2.0
      %v501 = vadd.f32 %v232, %v500
      %v502 = vmul.f32 %v409, 2.0
      %v503 = vadd.f32 %v501, %v502
      %v504 = vadd.f32 %v503, %v496
      %v505 = vstv %s133
      %v506 = vmul.f32 %v505, %v504
      %v507 = vadd.f32 %v121, %v506
      %v508 = vmul.f32 %v326, 2.0
      %v509 = vadd.f32 %v239, %v508
      %v510 = vmul.f32 %v412, 2.0
      %v511 = vadd.f32 %v509, %v510
      %v512 = vadd.f32 %v511, %v499
      %v513 = vmul.f32 %v505, %v512
      %v514 = vadd.f32 %v122, %v513
      %v515 = vmul.f32 %v507, %v137
      %v516 = vmul.f32 %v514, %v142
      %v517 = vadd.f32 %v515, %v516
      %v518 = vadd.f32 %v517, %v148
      %v519 = vmax.f32 %v518, 0.0
      %520 = vmatprep.subr.mxu0 0.0
      %521 = vmatpush1.msra.mxu0 %v102
      %522 = vmatprep.subr.mxu0 0.0
      %523 = vmatpush1.msra.mxu0 %v101
      %524 = vmatprep.subr.mxu0 0.0
      %525 = vmatpush1.msra.mxu0 %v100
      %526 = vmatprep.subr.mxu0 0.0
      %527 = vmatpush1.msra.mxu0 %v99
      %528 = vmatprep.subr.mxu0 0.0
      %529 = vmatpush1.msra.mxu0 %v98
      %530 = vmatprep.subr.mxu0 0.0
      %531 = vmatpush1.msra.mxu0 %v97
      %532 = vmatprep.subr.mxu0 0.0
      %533 = vmatpush1.msra.mxu0 %v96
      %534 = vmatprep.subr.mxu0 0.0
      %535 = vmatpush1.msra.mxu0 %v95
      %536 = vmatprep.subr.mxu0 0.0
      %537 = vmatpush1.msra.mxu0 %v94
      %538 = vmatprep.subr.mxu0 0.0
      %539 = vmatpush1.msra.mxu0 %v93
      %540 = vmatprep.subr.mxu0 0.0
      %541 = vmatpush1.msra.mxu0 %v92
      %542 = vmatprep.subr.mxu0 0.0
      %543 = vmatpush1.msra.mxu0 %v91
      %544 = vmatprep.subr.mxu0 0.0
      %545 = vmatpush1.msra.mxu0 %v90
      %546 = vmatprep.subr.mxu0 0.0
      %547 = vmatpush1.msra.mxu0 %v89
      %548 = vmatprep.subr.mxu0 0.0
      %549 = vmatpush1.msra.mxu0 %v88
      %550 = vmatprep.subr.mxu0 0.0
      %551 = vmatpush1.msra.mxu0 %v87
      %552 = vmatprep.subr.mxu0 0.0
      %553 = vmatpush2.msra.mxu0 0.0
      %554 = vmatprep.subr.mxu0 0.0
      %555 = vmatpush2.msra.mxu0 0.0
      %556 = vmatprep.subr.mxu0 0.0
      %557 = vmatpush2.msra.mxu0 0.0
      %558 = vmatprep.subr.mxu0 0.0
      %559 = vmatpush2.msra.mxu0 0.0
      %560 = vmatprep.subr.mxu0 0.0
      %561 = vmatpush2.msra.mxu0 0.0
      %562 = vmatprep.subr.mxu0 0.0
      %563 = vmatpush2.msra.mxu0 0.0
      %564 = vmatprep.subr.mxu0 0.0
      %565 = vmatpush2.msra.mxu0 0.0
      %566 = vmatprep.subr.mxu0 0.0
      %567 = vmatpush2.msra.mxu0 0.0
      %568 = vmatprep.subr.mxu0 0.0
      %569 = vmatpush2.msra.mxu0 0.0
      %570 = vmatprep.subr.mxu0 0.0
      %571 = vmatpush2.msra.mxu0 0.0
      %572 = vmatprep.subr.mxu0 0.0
      %573 = vmatpush2.msra.mxu0 0.0
      %574 = vmatprep.subr.mxu0 0.0
      %575 = vmatpush2.msra.mxu0 0.0
      %576 = vmatprep.subr.mxu0 0.0
      %577 = vmatpush2.msra.mxu0 0.0
      %578 = vmatprep.subr.mxu0 0.0
      %579 = vmatpush2.msra.mxu0 0.0
      %580 = vmatprep.subr.mxu0 0.0
      %581 = vmatpush2.msra.mxu0 0.0
      %582 = vmatprep.subr.mxu0 0.0
      %583 = vmatpush2.msra.mxu0 0.0
      %584 = vmatprep.mubr.f32.mxu0 0.0
      %585 = vmatmul.mubr.f32.gmra.mxu0 %v519
      %v586 = vpop.f32.mrf.mxu0
      %v587 = vadd.f32 %v154, %v586
      %v588 = vpop.f32.mrf.mxu0
      %589 = vdwg.mxu0
      %v590 = vmax.f32 %v587, 0.0
      %v591 = vmul.f32 %v590, %v229
      %592 = vadd.xlane.f32.xlu0 %v591
      %v593 = vpop.xlane.xlu0 %592
      %v594 = vmul.f32 %v590, %v236
      %595 = vadd.xlane.f32.xlu0 %v594
      %v596 = vpop.xlane.xlu0 %595
      %v597 = vmul.f32 %v240, %v593
      %v598 = vadd.f32 %v507, %v597
      %v599 = vmul.f32 %v240, %v596
      %v600 = vadd.f32 %v514, %v599
      %v601 = vmul.f32 %v598, %v137
      %v602 = vmul.f32 %v600, %v142
      %v603 = vadd.f32 %v601, %v602
      %v604 = vadd.f32 %v603, %v148
      %v605 = vmax.f32 %v604, 0.0
      %606 = vmatprep.subr.mxu0 0.0
      %607 = vmatpush1.msra.mxu0 %v102
      %608 = vmatprep.subr.mxu0 0.0
      %609 = vmatpush1.msra.mxu0 %v101
      %610 = vmatprep.subr.mxu0 0.0
      %611 = vmatpush1.msra.mxu0 %v100
      %612 = vmatprep.subr.mxu0 0.0
      %613 = vmatpush1.msra.mxu0 %v99
      %614 = vmatprep.subr.mxu0 0.0
      %615 = vmatpush1.msra.mxu0 %v98
      %616 = vmatprep.subr.mxu0 0.0
      %617 = vmatpush1.msra.mxu0 %v97
      %618 = vmatprep.subr.mxu0 0.0
      %619 = vmatpush1.msra.mxu0 %v96
      %620 = vmatprep.subr.mxu0 0.0
      %621 = vmatpush1.msra.mxu0 %v95
      %622 = vmatprep.subr.mxu0 0.0
      %623 = vmatpush1.msra.mxu0 %v94
      %624 = vmatprep.subr.mxu0 0.0
      %625 = vmatpush1.msra.mxu0 %v93
      %626 = vmatprep.subr.mxu0 0.0
      %627 = vmatpush1.msra.mxu0 %v92
      %628 = vmatprep.subr.mxu0 0.0
      %629 = vmatpush1.msra.mxu0 %v91
      %630 = vmatprep.subr.mxu0 0.0
      %631 = vmatpush1.msra.mxu0 %v90
      %632 = vmatprep.subr.mxu0 0.0
      %633 = vmatpush1.msra.mxu0 %v89
      %634 = vmatprep.subr.mxu0 0.0
      %635 = vmatpush1.msra.mxu0 %v88
      %636 = vmatprep.subr.mxu0 0.0
      %637 = vmatpush1.msra.mxu0 %v87
      %638 = vmatprep.subr.mxu0 0.0
      %639 = vmatpush2.msra.mxu0 0.0
      %640 = vmatprep.subr.mxu0 0.0
      %641 = vmatpush2.msra.mxu0 0.0
      %642 = vmatprep.subr.mxu0 0.0
      %643 = vmatpush2.msra.mxu0 0.0
      %644 = vmatprep.subr.mxu0 0.0
      %645 = vmatpush2.msra.mxu0 0.0
      %646 = vmatprep.subr.mxu0 0.0
      %647 = vmatpush2.msra.mxu0 0.0
      %648 = vmatprep.subr.mxu0 0.0
      %649 = vmatpush2.msra.mxu0 0.0
      %650 = vmatprep.subr.mxu0 0.0
      %651 = vmatpush2.msra.mxu0 0.0
      %652 = vmatprep.subr.mxu0 0.0
      %653 = vmatpush2.msra.mxu0 0.0
      %654 = vmatprep.subr.mxu0 0.0
      %655 = vmatpush2.msra.mxu0 0.0
      %656 = vmatprep.subr.mxu0 0.0
      %657 = vmatpush2.msra.mxu0 0.0
      %658 = vmatprep.subr.mxu0 0.0
      %659 = vmatpush2.msra.mxu0 0.0
      %660 = vmatprep.subr.mxu0 0.0
      %661 = vmatpush2.msra.mxu0 0.0
      %662 = vmatprep.subr.mxu0 0.0
      %663 = vmatpush2.msra.mxu0 0.0
      %664 = vmatprep.subr.mxu0 0.0
      %665 = vmatpush2.msra.mxu0 0.0
      %666 = vmatprep.subr.mxu0 0.0
      %667 = vmatpush2.msra.mxu0 0.0
      %668 = vmatprep.subr.mxu0 0.0
      %669 = vmatpush2.msra.mxu0 0.0
      %670 = vmatprep.mubr.f32.mxu0 0.0
      %671 = vmatmul.mubr.f32.gmra.mxu0 %v605
      %v672 = vpop.f32.mrf.mxu0
      %v673 = vadd.f32 %v154, %v672
      %v674 = vpop.f32.mrf.mxu0
      %675 = vdwg.mxu0
      %v676 = vmax.f32 %v673, 0.0
      %v677 = vmul.f32 %v676, %v229
      %678 = vadd.xlane.f32.xlu0 %v677
      %v679 = vpop.xlane.xlu0 %678
      %v680 = vmul.f32 %v676, %v236
      %681 = vadd.xlane.f32.xlu0 %v680
      %v682 = vpop.xlane.xlu0 %681
      %v683 = vmul.f32 %v240, %v679
      %v684 = vadd.f32 %v507, %v683
      %v685 = vmul.f32 %v240, %v682
      %v686 = vadd.f32 %v514, %v685
      %v687 = vmul.f32 %v684, %v137
      %v688 = vmul.f32 %v686, %v142
      %v689 = vadd.f32 %v687, %v688
      %v690 = vadd.f32 %v689, %v148
      %v691 = vmax.f32 %v690, 0.0
      %692 = vmatprep.subr.mxu0 0.0
      %693 = vmatpush1.msra.mxu0 %v102
      %694 = vmatprep.subr.mxu0 0.0
      %695 = vmatpush1.msra.mxu0 %v101
      %696 = vmatprep.subr.mxu0 0.0
      %697 = vmatpush1.msra.mxu0 %v100
      %698 = vmatprep.subr.mxu0 0.0
      %699 = vmatpush1.msra.mxu0 %v99
      %700 = vmatprep.subr.mxu0 0.0
      %701 = vmatpush1.msra.mxu0 %v98
      %702 = vmatprep.subr.mxu0 0.0
      %703 = vmatpush1.msra.mxu0 %v97
      %704 = vmatprep.subr.mxu0 0.0
      %705 = vmatpush1.msra.mxu0 %v96
      %706 = vmatprep.subr.mxu0 0.0
      %707 = vmatpush1.msra.mxu0 %v95
      %708 = vmatprep.subr.mxu0 0.0
      %709 = vmatpush1.msra.mxu0 %v94
      %710 = vmatprep.subr.mxu0 0.0
      %711 = vmatpush1.msra.mxu0 %v93
      %712 = vmatprep.subr.mxu0 0.0
      %713 = vmatpush1.msra.mxu0 %v92
      %714 = vmatprep.subr.mxu0 0.0
      %715 = vmatpush1.msra.mxu0 %v91
      %716 = vmatprep.subr.mxu0 0.0
      %717 = vmatpush1.msra.mxu0 %v90
      %718 = vmatprep.subr.mxu0 0.0
      %719 = vmatpush1.msra.mxu0 %v89
      %720 = vmatprep.subr.mxu0 0.0
      %721 = vmatpush1.msra.mxu0 %v88
      %722 = vmatprep.subr.mxu0 0.0
      %723 = vmatpush1.msra.mxu0 %v87
      %724 = vmatprep.subr.mxu0 0.0
      %725 = vmatpush2.msra.mxu0 0.0
      %726 = vmatprep.subr.mxu0 0.0
      %727 = vmatpush2.msra.mxu0 0.0
      %728 = vmatprep.subr.mxu0 0.0
      %729 = vmatpush2.msra.mxu0 0.0
      %730 = vmatprep.subr.mxu0 0.0
      %731 = vmatpush2.msra.mxu0 0.0
      %732 = vmatprep.subr.mxu0 0.0
      %733 = vmatpush2.msra.mxu0 0.0
      %734 = vmatprep.subr.mxu0 0.0
      %735 = vmatpush2.msra.mxu0 0.0
      %736 = vmatprep.subr.mxu0 0.0
      %737 = vmatpush2.msra.mxu0 0.0
      %738 = vmatprep.subr.mxu0 0.0
      %739 = vmatpush2.msra.mxu0 0.0
      %740 = vmatprep.subr.mxu0 0.0
      %741 = vmatpush2.msra.mxu0 0.0
      %742 = vmatprep.subr.mxu0 0.0
      %743 = vmatpush2.msra.mxu0 0.0
      %744 = vmatprep.subr.mxu0 0.0
      %745 = vmatpush2.msra.mxu0 0.0
      %746 = vmatprep.subr.mxu0 0.0
      %747 = vmatpush2.msra.mxu0 0.0
      %748 = vmatprep.subr.mxu0 0.0
      %749 = vmatpush2.msra.mxu0 0.0
      %750 = vmatprep.subr.mxu0 0.0
      %751 = vmatpush2.msra.mxu0 0.0
      %752 = vmatprep.subr.mxu0 0.0
      %753 = vmatpush2.msra.mxu0 0.0
      %754 = vmatprep.subr.mxu0 0.0
      %755 = vmatpush2.msra.mxu0 0.0
      %756 = vmatprep.mubr.f32.mxu0 0.0
      %757 = vmatmul.mubr.f32.gmra.mxu0 %v691
      %v758 = vpop.f32.mrf.mxu0
      %v759 = vadd.f32 %v154, %v758
      %v760 = vpop.f32.mrf.mxu0
      %761 = vdwg.mxu0
      %v762 = vmax.f32 %v759, 0.0
      %v763 = vmul.f32 %v762, %v229
      %764 = vadd.xlane.f32.xlu0 %v763
      %v765 = vpop.xlane.xlu0 %764
      %v766 = vmul.f32 %v762, %v236
      %767 = vadd.xlane.f32.xlu0 %v766
      %v768 = vpop.xlane.xlu0 %767
      %v769 = vmul.f32 %v413, %v765
      %v770 = vadd.f32 %v507, %v769
      %v771 = vmul.f32 %v413, %v768
      %v772 = vadd.f32 %v514, %v771
      %v773 = vmul.f32 %v770, %v137
      %v774 = vmul.f32 %v772, %v142
      %v775 = vadd.f32 %v773, %v774
      %v776 = vadd.f32 %v775, %v148
      %v777 = vmax.f32 %v776, 0.0
      %778 = vmatprep.subr.mxu0 0.0
      %779 = vmatpush1.msra.mxu0 %v102
      %780 = vmatprep.subr.mxu0 0.0
      %781 = vmatpush1.msra.mxu0 %v101
      %782 = vmatprep.subr.mxu0 0.0
      %783 = vmatpush1.msra.mxu0 %v100
      %784 = vmatprep.subr.mxu0 0.0
      %785 = vmatpush1.msra.mxu0 %v99
      %786 = vmatprep.subr.mxu0 0.0
      %787 = vmatpush1.msra.mxu0 %v98
      %788 = vmatprep.subr.mxu0 0.0
      %789 = vmatpush1.msra.mxu0 %v97
      %790 = vmatprep.subr.mxu0 0.0
      %791 = vmatpush1.msra.mxu0 %v96
      %792 = vmatprep.subr.mxu0 0.0
      %793 = vmatpush1.msra.mxu0 %v95
      %794 = vmatprep.subr.mxu0 0.0
      %795 = vmatpush1.msra.mxu0 %v94
      %796 = vmatprep.subr.mxu0 0.0
      %797 = vmatpush1.msra.mxu0 %v93
      %798 = vmatprep.subr.mxu0 0.0
      %799 = vmatpush1.msra.mxu0 %v92
      %800 = vmatprep.subr.mxu0 0.0
      %801 = vmatpush1.msra.mxu0 %v91
      %802 = vmatprep.subr.mxu0 0.0
      %803 = vmatpush1.msra.mxu0 %v90
      %804 = vmatprep.subr.mxu0 0.0
      %805 = vmatpush1.msra.mxu0 %v89
      %806 = vmatprep.subr.mxu0 0.0
      %807 = vmatpush1.msra.mxu0 %v88
      %808 = vmatprep.subr.mxu0 0.0
      %809 = vmatpush1.msra.mxu0 %v87
      %810 = vmatprep.subr.mxu0 0.0
      %811 = vmatpush2.msra.mxu0 0.0
      %812 = vmatprep.subr.mxu0 0.0
      %813 = vmatpush2.msra.mxu0 0.0
      %814 = vmatprep.subr.mxu0 0.0
      %815 = vmatpush2.msra.mxu0 0.0
      %816 = vmatprep.subr.mxu0 0.0
      %817 = vmatpush2.msra.mxu0 0.0
      %818 = vmatprep.subr.mxu0 0.0
      %819 = vmatpush2.msra.mxu0 0.0
      %820 = vmatprep.subr.mxu0 0.0
      %821 = vmatpush2.msra.mxu0 0.0
      %822 = vmatprep.subr.mxu0 0.0
      %823 = vmatpush2.msra.mxu0 0.0
      %824 = vmatprep.subr.mxu0 0.0
      %825 = vmatpush2.msra.mxu0 0.0
      %826 = vmatprep.subr.mxu0 0.0
      %827 = vmatpush2.msra.mxu0 0.0
      %828 = vmatprep.subr.mxu0 0.0
      %829 = vmatpush2.msra.mxu0 0.0
      %830 = vmatprep.subr.mxu0 0.0
      %831 = vmatpush2.msra.mxu0 0.0
      %832 = vmatprep.subr.mxu0 0.0
      %833 = vmatpush2.msra.mxu0 0.0
      %834 = vmatprep.subr.mxu0 0.0
      %835 = vmatpush2.msra.mxu0 0.0
      %836 = vmatprep.subr.mxu0 0.0
      %837 = vmatpush2.msra.mxu0 0.0
      %838 = vmatprep.subr.mxu0 0.0
      %839 = vmatpush2.msra.mxu0 0.0
      %840 = vmatprep.subr.mxu0 0.0
      %841 = vmatpush2.msra.mxu0 0.0
      %842 = vmatprep.mubr.f32.mxu0 0.0
      %843 = vmatmul.mubr.f32.gmra.mxu0 %v777
      %v844 = vpop.f32.mrf.mxu0
      %v845 = vadd.f32 %v154, %v844
      %v846 = vpop.f32.mrf.mxu0
      %847 = vdwg.mxu0
      %v848 = vmax.f32 %v845, 0.0
      %v849 = vmul.f32 %v848, %v229
      %850 = vadd.xlane.f32.xlu0 %v849
      %v851 = vpop.xlane.xlu0 %850
      %v852 = vmul.f32 %v848, %v236
      %853 = vadd.xlane.f32.xlu0 %v852
      %v854 = vpop.xlane.xlu0 %853
      %v855 = vmul.f32 %v679, 2.0
      %v856 = vadd.f32 %v593, %v855
      %v857 = vmul.f32 %v765, 2.0
      %v858 = vadd.f32 %v856, %v857
      %v859 = vadd.f32 %v858, %v851
      %v860 = vmul.f32 %v505, %v859
      %v861 = vadd.f32 %v507, %v860
      %v862 = vmul.f32 %v682, 2.0
      %v863 = vadd.f32 %v596, %v862
      %v864 = vmul.f32 %v768, 2.0
      %v865 = vadd.f32 %v863, %v864
      %v866 = vadd.f32 %v865, %v854
      %v867 = vmul.f32 %v505, %v866
      %v868 = vadd.f32 %v514, %v867
      %v869 = vmul.f32 %v861, %v137
      %v870 = vmul.f32 %v868, %v142
      %v871 = vadd.f32 %v869, %v870
      %v872 = vadd.f32 %v871, %v148
      %v873 = vmax.f32 %v872, 0.0
      %874 = vmatprep.subr.mxu0 0.0
      %875 = vmatpush1.msra.mxu0 %v102
      %876 = vmatprep.subr.mxu0 0.0
      %877 = vmatpush1.msra.mxu0 %v101
      %878 = vmatprep.subr.mxu0 0.0
      %879 = vmatpush1.msra.mxu0 %v100
      %880 = vmatprep.subr.mxu0 0.0
      %881 = vmatpush1.msra.mxu0 %v99
      %882 = vmatprep.subr.mxu0 0.0
      %883 = vmatpush1.msra.mxu0 %v98
      %884 = vmatprep.subr.mxu0 0.0
      %885 = vmatpush1.msra.mxu0 %v97
      %886 = vmatprep.subr.mxu0 0.0
      %887 = vmatpush1.msra.mxu0 %v96
      %888 = vmatprep.subr.mxu0 0.0
      %889 = vmatpush1.msra.mxu0 %v95
      %890 = vmatprep.subr.mxu0 0.0
      %891 = vmatpush1.msra.mxu0 %v94
      %892 = vmatprep.subr.mxu0 0.0
      %893 = vmatpush1.msra.mxu0 %v93
      %894 = vmatprep.subr.mxu0 0.0
      %895 = vmatpush1.msra.mxu0 %v92
      %896 = vmatprep.subr.mxu0 0.0
      %897 = vmatpush1.msra.mxu0 %v91
      %898 = vmatprep.subr.mxu0 0.0
      %899 = vmatpush1.msra.mxu0 %v90
      %900 = vmatprep.subr.mxu0 0.0
      %901 = vmatpush1.msra.mxu0 %v89
      %902 = vmatprep.subr.mxu0 0.0
      %903 = vmatpush1.msra.mxu0 %v88
      %904 = vmatprep.subr.mxu0 0.0
      %905 = vmatpush1.msra.mxu0 %v87
      %906 = vmatprep.subr.mxu0 0.0
      %907 = vmatpush2.msra.mxu0 0.0
      %908 = vmatprep.subr.mxu0 0.0
      %909 = vmatpush2.msra.mxu0 0.0
      %910 = vmatprep.subr.mxu0 0.0
      %911 = vmatpush2.msra.mxu0 0.0
      %912 = vmatprep.subr.mxu0 0.0
      %913 = vmatpush2.msra.mxu0 0.0
      %914 = vmatprep.subr.mxu0 0.0
      %915 = vmatpush2.msra.mxu0 0.0
      %916 = vmatprep.subr.mxu0 0.0
      %917 = vmatpush2.msra.mxu0 0.0
      %918 = vmatprep.subr.mxu0 0.0
      %919 = vmatpush2.msra.mxu0 0.0
      %920 = vmatprep.subr.mxu0 0.0
      %921 = vmatpush2.msra.mxu0 0.0
      %922 = vmatprep.subr.mxu0 0.0
      %923 = vmatpush2.msra.mxu0 0.0
      %924 = vmatprep.subr.mxu0 0.0
      %925 = vmatpush2.msra.mxu0 0.0
      %926 = vmatprep.subr.mxu0 0.0
      %927 = vmatpush2.msra.mxu0 0.0
      %928 = vmatprep.subr.mxu0 0.0
      %929 = vmatpush2.msra.mxu0 0.0
      %930 = vmatprep.subr.mxu0 0.0
      %931 = vmatpush2.msra.mxu0 0.0
      %932 = vmatprep.subr.mxu0 0.0
      %933 = vmatpush2.msra.mxu0 0.0
      %934 = vmatprep.subr.mxu0 0.0
      %935 = vmatpush2.msra.mxu0 0.0
      %936 = vmatprep.subr.mxu0 0.0
      %937 = vmatpush2.msra.mxu0 0.0
      %938 = vmatprep.mubr.f32.mxu0 0.0
      %939 = vmatmul.mubr.f32.gmra.mxu0 %v873
      %v940 = vpop.f32.mrf.mxu0
      %v941 = vadd.f32 %v154, %v940
      %v942 = vpop.f32.mrf.mxu0
      %943 = vdwg.mxu0
      %v944 = vmax.f32 %v941, 0.0
      %v945 = vmul.f32 %v944, %v229
      %946 = vadd.xlane.f32.xlu0 %v945
      %v947 = vpop.xlane.xlu0 %946
      %v948 = vmul.f32 %v944, %v236
      %949 = vadd.xlane.f32.xlu0 %v948
      %v950 = vpop.xlane.xlu0 %949
      %v951 = vmul.f32 %v240, %v947
      %v952 = vadd.f32 %v861, %v951
      %v953 = vmul.f32 %v240, %v950
      %v954 = vadd.f32 %v868, %v953
      %v955 = vmul.f32 %v952, %v137
      %v956 = vmul.f32 %v954, %v142
      %v957 = vadd.f32 %v955, %v956
      %v958 = vadd.f32 %v957, %v148
      %v959 = vmax.f32 %v958, 0.0
      %960 = vmatprep.subr.mxu0 0.0
      %961 = vmatpush1.msra.mxu0 %v102
      %962 = vmatprep.subr.mxu0 0.0
      %963 = vmatpush1.msra.mxu0 %v101
      %964 = vmatprep.subr.mxu0 0.0
      %965 = vmatpush1.msra.mxu0 %v100
      %966 = vmatprep.subr.mxu0 0.0
      %967 = vmatpush1.msra.mxu0 %v99
      %968 = vmatprep.subr.mxu0 0.0
      %969 = vmatpush1.msra.mxu0 %v98
      %970 = vmatprep.subr.mxu0 0.0
      %971 = vmatpush1.msra.mxu0 %v97
      %972 = vmatprep.subr.mxu0 0.0
      %973 = vmatpush1.msra.mxu0 %v96
      %974 = vmatprep.subr.mxu0 0.0
      %975 = vmatpush1.msra.mxu0 %v95
      %976 = vmatprep.subr.mxu0 0.0
      %977 = vmatpush1.msra.mxu0 %v94
      %978 = vmatprep.subr.mxu0 0.0
      %979 = vmatpush1.msra.mxu0 %v93
      %980 = vmatprep.subr.mxu0 0.0
      %981 = vmatpush1.msra.mxu0 %v92
      %982 = vmatprep.subr.mxu0 0.0
      %983 = vmatpush1.msra.mxu0 %v91
      %984 = vmatprep.subr.mxu0 0.0
      %985 = vmatpush1.msra.mxu0 %v90
      %986 = vmatprep.subr.mxu0 0.0
      %987 = vmatpush1.msra.mxu0 %v89
      %988 = vmatprep.subr.mxu0 0.0
      %989 = vmatpush1.msra.mxu0 %v88
      %990 = vmatprep.subr.mxu0 0.0
      %991 = vmatpush1.msra.mxu0 %v87
      %992 = vmatprep.subr.mxu0 0.0
      %993 = vmatpush2.msra.mxu0 0.0
      %994 = vmatprep.subr.mxu0 0.0
      %995 = vmatpush2.msra.mxu0 0.0
      %996 = vmatprep.subr.mxu0 0.0
      %997 = vmatpush2.msra.mxu0 0.0
      %998 = vmatprep.subr.mxu0 0.0
      %999 = vmatpush2.msra.mxu0 0.0
      %1000 = vmatprep.subr.mxu0 0.0
      %1001 = vmatpush2.msra.mxu0 0.0
      %1002 = vmatprep.subr.mxu0 0.0
      %1003 = vmatpush2.msra.mxu0 0.0
      %1004 = vmatprep.subr.mxu0 0.0
      %1005 = vmatpush2.msra.mxu0 0.0
      %1006 = vmatprep.subr.mxu0 0.0
      %1007 = vmatpush2.msra.mxu0 0.0
      %1008 = vmatprep.subr.mxu0 0.0
      %1009 = vmatpush2.msra.mxu0 0.0
      %1010 = vmatprep.subr.mxu0 0.0
      %1011 = vmatpush2.msra.mxu0 0.0
      %1012 = vmatprep.subr.mxu0 0.0
      %1013 = vmatpush2.msra.mxu0 0.0
      %1014 = vmatprep.subr.mxu0 0.0
      %1015 = vmatpush2.msra.mxu0 0.0
      %1016 = vmatprep.subr.mxu0 0.0
      %1017 = vmatpush2.msra.mxu0 0.0
      %1018 = vmatprep.subr.mxu0 0.0
      %1019 = vmatpush2.msra.mxu0 0.0
      %1020 = vmatprep.subr.mxu0 0.0
      %1021 = vmatpush2.msra.mxu0 0.0
      %1022 = vmatprep.subr.mxu0 0.0
      %1023 = vmatpush2.msra.mxu0 0.0
      %1024 = vmatprep.mubr.f32.mxu0 0.0
      %1025 = vmatmul.mubr.f32.gmra.mxu0 %v959
      %v1026 = vpop.f32.mrf.mxu0
      %v1027 = vadd.f32 %v154, %v1026
      %v1028 = vpop.f32.mrf.mxu0
      %1029 = vdwg.mxu0
      %v1030 = vmax.f32 %v1027, 0.0
      %v1031 = vmul.f32 %v1030, %v229
      %1032 = vadd.xlane.f32.xlu0 %v1031
      %v1033 = vpop.xlane.xlu0 %1032
      %v1034 = vmul.f32 %v1030, %v236
      %1035 = vadd.xlane.f32.xlu0 %v1034
      %v1036 = vpop.xlane.xlu0 %1035
      %v1037 = vmul.f32 %v240, %v1033
      %v1038 = vadd.f32 %v861, %v1037
      %v1039 = vmul.f32 %v240, %v1036
      %v1040 = vadd.f32 %v868, %v1039
      %v1041 = vmul.f32 %v1038, %v137
      %v1042 = vmul.f32 %v1040, %v142
      %v1043 = vadd.f32 %v1041, %v1042
      %v1044 = vadd.f32 %v1043, %v148
      %v1045 = vmax.f32 %v1044, 0.0
      %1046 = vmatprep.subr.mxu0 0.0
      %1047 = vmatpush1.msra.mxu0 %v102
      %1048 = vmatprep.subr.mxu0 0.0
      %1049 = vmatpush1.msra.mxu0 %v101
      %1050 = vmatprep.subr.mxu0 0.0
      %1051 = vmatpush1.msra.mxu0 %v100
      %1052 = vmatprep.subr.mxu0 0.0
      %1053 = vmatpush1.msra.mxu0 %v99
      %1054 = vmatprep.subr.mxu0 0.0
      %1055 = vmatpush1.msra.mxu0 %v98
      %1056 = vmatprep.subr.mxu0 0.0
      %1057 = vmatpush1.msra.mxu0 %v97
      %1058 = vmatprep.subr.mxu0 0.0
      %1059 = vmatpush1.msra.mxu0 %v96
      %1060 = vmatprep.subr.mxu0 0.0
      %1061 = vmatpush1.msra.mxu0 %v95
      %1062 = vmatprep.subr.mxu0 0.0
      %1063 = vmatpush1.msra.mxu0 %v94
      %1064 = vmatprep.subr.mxu0 0.0
      %1065 = vmatpush1.msra.mxu0 %v93
      %1066 = vmatprep.subr.mxu0 0.0
      %1067 = vmatpush1.msra.mxu0 %v92
      %1068 = vmatprep.subr.mxu0 0.0
      %1069 = vmatpush1.msra.mxu0 %v91
      %1070 = vmatprep.subr.mxu0 0.0
      %1071 = vmatpush1.msra.mxu0 %v90
      %1072 = vmatprep.subr.mxu0 0.0
      %1073 = vmatpush1.msra.mxu0 %v89
      %1074 = vmatprep.subr.mxu0 0.0
      %1075 = vmatpush1.msra.mxu0 %v88
      %1076 = vmatprep.subr.mxu0 0.0
      %1077 = vmatpush1.msra.mxu0 %v87
      %1078 = vmatprep.subr.mxu0 0.0
      %1079 = vmatpush2.msra.mxu0 0.0
      %1080 = vmatprep.subr.mxu0 0.0
      %1081 = vmatpush2.msra.mxu0 0.0
      %1082 = vmatprep.subr.mxu0 0.0
      %1083 = vmatpush2.msra.mxu0 0.0
      %1084 = vmatprep.subr.mxu0 0.0
      %1085 = vmatpush2.msra.mxu0 0.0
      %1086 = vmatprep.subr.mxu0 0.0
      %1087 = vmatpush2.msra.mxu0 0.0
      %1088 = vmatprep.subr.mxu0 0.0
      %1089 = vmatpush2.msra.mxu0 0.0
      %1090 = vmatprep.subr.mxu0 0.0
      %1091 = vmatpush2.msra.mxu0 0.0
      %1092 = vmatprep.subr.mxu0 0.0
      %1093 = vmatpush2.msra.mxu0 0.0
      %1094 = vmatprep.subr.mxu0 0.0
      %1095 = vmatpush2.msra.mxu0 0.0
      %1096 = vmatprep.subr.mxu0 0.0
      %1097 = vmatpush2.msra.mxu0 0.0
      %1098 = vmatprep.subr.mxu0 0.0
      %1099 = vmatpush2.msra.mxu0 0.0
      %1100 = vmatprep.subr.mxu0 0.0
      %1101 = vmatpush2.msra.mxu0 0.0
      %1102 = vmatprep.subr.mxu0 0.0
      %1103 = vmatpush2.msra.mxu0 0.0
      %1104 = vmatprep.subr.mxu0 0.0
      %1105 = vmatpush2.msra.mxu0 0.0
      %1106 = vmatprep.subr.mxu0 0.0
      %1107 = vmatpush2.msra.mxu0 0.0
      %1108 = vmatprep.subr.mxu0 0.0
      %1109 = vmatpush2.msra.mxu0 0.0
      %1110 = vmatprep.mubr.f32.mxu0 0.0
      %1111 = vmatmul.mubr.f32.gmra.mxu0 %v1045
      %v1112 = vpop.f32.mrf.mxu0
      %v1113 = vadd.f32 %v154, %v1112
      %v1114 = vpop.f32.mrf.mxu0
      %1115 = vdwg.mxu0
      %v1116 = vmax.f32 %v1113, 0.0
      %v1117 = vmul.f32 %v1116, %v229
      %1118 = vadd.xlane.f32.xlu0 %v1117
      %v1119 = vpop.xlane.xlu0 %1118
      %v1120 = vmul.f32 %v1116, %v236
      %1121 = vadd.xlane.f32.xlu0 %v1120
      %v1122 = vpop.xlane.xlu0 %1121
      %v1123 = vmul.f32 %v413, %v1119
      %v1124 = vadd.f32 %v861, %v1123
      %v1125 = vmul.f32 %v413, %v1122
      %v1126 = vadd.f32 %v868, %v1125
      %v1127 = vmul.f32 %v1124, %v137
      %v1128 = vmul.f32 %v1126, %v142
      %v1129 = vadd.f32 %v1127, %v1128
      %v1130 = vadd.f32 %v1129, %v148
      %v1131 = vmax.f32 %v1130, 0.0
      %1132 = vmatprep.subr.mxu0 0.0
      %1133 = vmatpush1.msra.mxu0 %v102
      %1134 = vmatprep.subr.mxu0 0.0
      %1135 = vmatpush1.msra.mxu0 %v101
      %1136 = vmatprep.subr.mxu0 0.0
      %1137 = vmatpush1.msra.mxu0 %v100
      %1138 = vmatprep.subr.mxu0 0.0
      %1139 = vmatpush1.msra.mxu0 %v99
      %1140 = vmatprep.subr.mxu0 0.0
      %1141 = vmatpush1.msra.mxu0 %v98
      %1142 = vmatprep.subr.mxu0 0.0
      %1143 = vmatpush1.msra.mxu0 %v97
      %1144 = vmatprep.subr.mxu0 0.0
      %1145 = vmatpush1.msra.mxu0 %v96
      %1146 = vmatprep.subr.mxu0 0.0
      %1147 = vmatpush1.msra.mxu0 %v95
      %1148 = vmatprep.subr.mxu0 0.0
      %1149 = vmatpush1.msra.mxu0 %v94
      %1150 = vmatprep.subr.mxu0 0.0
      %1151 = vmatpush1.msra.mxu0 %v93
      %1152 = vmatprep.subr.mxu0 0.0
      %1153 = vmatpush1.msra.mxu0 %v92
      %1154 = vmatprep.subr.mxu0 0.0
      %1155 = vmatpush1.msra.mxu0 %v91
      %1156 = vmatprep.subr.mxu0 0.0
      %1157 = vmatpush1.msra.mxu0 %v90
      %1158 = vmatprep.subr.mxu0 0.0
      %1159 = vmatpush1.msra.mxu0 %v89
      %1160 = vmatprep.subr.mxu0 0.0
      %1161 = vmatpush1.msra.mxu0 %v88
      %1162 = vmatprep.subr.mxu0 0.0
      %1163 = vmatpush1.msra.mxu0 %v87
      %1164 = vmatprep.subr.mxu0 0.0
      %1165 = vmatpush2.msra.mxu0 0.0
      %1166 = vmatprep.subr.mxu0 0.0
      %1167 = vmatpush2.msra.mxu0 0.0
      %1168 = vmatprep.subr.mxu0 0.0
      %1169 = vmatpush2.msra.mxu0 0.0
      %1170 = vmatprep.subr.mxu0 0.0
      %1171 = vmatpush2.msra.mxu0 0.0
      %1172 = vmatprep.subr.mxu0 0.0
      %1173 = vmatpush2.msra.mxu0 0.0
      %1174 = vmatprep.subr.mxu0 0.0
      %1175 = vmatpush2.msra.mxu0 0.0
      %1176 = vmatprep.subr.mxu0 0.0
      %1177 = vmatpush2.msra.mxu0 0.0
      %1178 = vmatprep.subr.mxu0 0.0
      %1179 = vmatpush2.msra.mxu0 0.0
      %1180 = vmatprep.subr.mxu0 0.0
      %1181 = vmatpush2.msra.mxu0 0.0
      %1182 = vmatprep.subr.mxu0 0.0
      %1183 = vmatpush2.msra.mxu0 0.0
      %1184 = vmatprep.subr.mxu0 0.0
      %1185 = vmatpush2.msra.mxu0 0.0
      %1186 = vmatprep.subr.mxu0 0.0
      %1187 = vmatpush2.msra.mxu0 0.0
      %1188 = vmatprep.subr.mxu0 0.0
      %1189 = vmatpush2.msra.mxu0 0.0
      %1190 = vmatprep.subr.mxu0 0.0
      %1191 = vmatpush2.msra.mxu0 0.0
      %1192 = vmatprep.subr.mxu0 0.0
      %1193 = vmatpush2.msra.mxu0 0.0
      %1194 = vmatprep.subr.mxu0 0.0
      %1195 = vmatpush2.msra.mxu0 0.0
      %1196 = vmatprep.mubr.f32.mxu0 0.0
      %1197 = vmatmul.mubr.f32.gmra.mxu0 %v1131
      %v1198 = vpop.f32.mrf.mxu0
      %v1199 = vadd.f32 %v154, %v1198
      %v1200 = vpop.f32.mrf.mxu0
      %1201 = vdwg.mxu0
      %v1202 = vmax.f32 %v1199, 0.0
      %v1203 = vmul.f32 %v1202, %v229
      %1204 = vadd.xlane.f32.xlu0 %v1203
      %v1205 = vpop.xlane.xlu0 %1204
      %v1206 = vmul.f32 %v1202, %v236
      %1207 = vadd.xlane.f32.xlu0 %v1206
      %v1208 = vpop.xlane.xlu0 %1207
      %v1209 = vmul.f32 %v1033, 2.0
      %v1210 = vadd.f32 %v947, %v1209
      %v1211 = vmul.f32 %v1119, 2.0
      %v1212 = vadd.f32 %v1210, %v1211
      %v1213 = vadd.f32 %v1212, %v1205
      %v1214 = vmul.f32 %v505, %v1213
      %v1215 = vadd.f32 %v861, %v1214
      %v1216 = vmul.f32 %v1036, 2.0
      %v1217 = vadd.f32 %v950, %v1216
      %v1218 = vmul.f32 %v1122, 2.0
      %v1219 = vadd.f32 %v1217, %v1218
      %v1220 = vadd.f32 %v1219, %v1208
      %v1221 = vmul.f32 %v505, %v1220
      %v1222 = vadd.f32 %v868, %v1221
      %v1223 = vmul.f32 %v1215, %v137
      %v1224 = vmul.f32 %v1222, %v142
      %v1225 = vadd.f32 %v1223, %v1224
      %v1226 = vadd.f32 %v1225, %v148
      %v1227 = vmax.f32 %v1226, 0.0
      %1228 = vmatprep.subr.mxu0 0.0
      %1229 = vmatpush1.msra.mxu0 %v102
      %1230 = vmatprep.subr.mxu0 0.0
      %1231 = vmatpush1.msra.mxu0 %v101
      %1232 = vmatprep.subr.mxu0 0.0
      %1233 = vmatpush1.msra.mxu0 %v100
      %1234 = vmatprep.subr.mxu0 0.0
      %1235 = vmatpush1.msra.mxu0 %v99
      %1236 = vmatprep.subr.mxu0 0.0
      %1237 = vmatpush1.msra.mxu0 %v98
      %1238 = vmatprep.subr.mxu0 0.0
      %1239 = vmatpush1.msra.mxu0 %v97
      %1240 = vmatprep.subr.mxu0 0.0
      %1241 = vmatpush1.msra.mxu0 %v96
      %1242 = vmatprep.subr.mxu0 0.0
      %1243 = vmatpush1.msra.mxu0 %v95
      %1244 = vmatprep.subr.mxu0 0.0
      %1245 = vmatpush1.msra.mxu0 %v94
      %1246 = vmatprep.subr.mxu0 0.0
      %1247 = vmatpush1.msra.mxu0 %v93
      %1248 = vmatprep.subr.mxu0 0.0
      %1249 = vmatpush1.msra.mxu0 %v92
      %1250 = vmatprep.subr.mxu0 0.0
      %1251 = vmatpush1.msra.mxu0 %v91
      %1252 = vmatprep.subr.mxu0 0.0
      %1253 = vmatpush1.msra.mxu0 %v90
      %1254 = vmatprep.subr.mxu0 0.0
      %1255 = vmatpush1.msra.mxu0 %v89
      %1256 = vmatprep.subr.mxu0 0.0
      %1257 = vmatpush1.msra.mxu0 %v88
      %1258 = vmatprep.subr.mxu0 0.0
      %1259 = vmatpush1.msra.mxu0 %v87
      %1260 = vmatprep.subr.mxu0 0.0
      %1261 = vmatpush2.msra.mxu0 0.0
      %1262 = vmatprep.subr.mxu0 0.0
      %1263 = vmatpush2.msra.mxu0 0.0
      %1264 = vmatprep.subr.mxu0 0.0
      %1265 = vmatpush2.msra.mxu0 0.0
      %1266 = vmatprep.subr.mxu0 0.0
      %1267 = vmatpush2.msra.mxu0 0.0
      %1268 = vmatprep.subr.mxu0 0.0
      %1269 = vmatpush2.msra.mxu0 0.0
      %1270 = vmatprep.subr.mxu0 0.0
      %1271 = vmatpush2.msra.mxu0 0.0
      %1272 = vmatprep.subr.mxu0 0.0
      %1273 = vmatpush2.msra.mxu0 0.0
      %1274 = vmatprep.subr.mxu0 0.0
      %1275 = vmatpush2.msra.mxu0 0.0
      %1276 = vmatprep.subr.mxu0 0.0
      %1277 = vmatpush2.msra.mxu0 0.0
      %1278 = vmatprep.subr.mxu0 0.0
      %1279 = vmatpush2.msra.mxu0 0.0
      %1280 = vmatprep.subr.mxu0 0.0
      %1281 = vmatpush2.msra.mxu0 0.0
      %1282 = vmatprep.subr.mxu0 0.0
      %1283 = vmatpush2.msra.mxu0 0.0
      %1284 = vmatprep.subr.mxu0 0.0
      %1285 = vmatpush2.msra.mxu0 0.0
      %1286 = vmatprep.subr.mxu0 0.0
      %1287 = vmatpush2.msra.mxu0 0.0
      %1288 = vmatprep.subr.mxu0 0.0
      %1289 = vmatpush2.msra.mxu0 0.0
      %1290 = vmatprep.subr.mxu0 0.0
      %1291 = vmatpush2.msra.mxu0 0.0
      %1292 = vmatprep.mubr.f32.mxu0 0.0
      %1293 = vmatmul.mubr.f32.gmra.mxu0 %v1227
      %v1294 = vpop.f32.mrf.mxu0
      %v1295 = vadd.f32 %v154, %v1294
      %v1296 = vpop.f32.mrf.mxu0
      %1297 = vdwg.mxu0
      %v1298 = vmax.f32 %v1295, 0.0
      %v1299 = vmul.f32 %v1298, %v229
      %1300 = vadd.xlane.f32.xlu0 %v1299
      %v1301 = vpop.xlane.xlu0 %1300
      %v1302 = vmul.f32 %v1298, %v236
      %1303 = vadd.xlane.f32.xlu0 %v1302
      %v1304 = vpop.xlane.xlu0 %1303
      %v1305 = vmul.f32 %v240, %v1301
      %v1306 = vadd.f32 %v1215, %v1305
      %v1307 = vmul.f32 %v240, %v1304
      %v1308 = vadd.f32 %v1222, %v1307
      %v1309 = vmul.f32 %v1306, %v137
      %v1310 = vmul.f32 %v1308, %v142
      %v1311 = vadd.f32 %v1309, %v1310
      %v1312 = vadd.f32 %v1311, %v148
      %v1313 = vmax.f32 %v1312, 0.0
      %1314 = vmatprep.subr.mxu0 0.0
      %1315 = vmatpush1.msra.mxu0 %v102
      %1316 = vmatprep.subr.mxu0 0.0
      %1317 = vmatpush1.msra.mxu0 %v101
      %1318 = vmatprep.subr.mxu0 0.0
      %1319 = vmatpush1.msra.mxu0 %v100
      %1320 = vmatprep.subr.mxu0 0.0
      %1321 = vmatpush1.msra.mxu0 %v99
      %1322 = vmatprep.subr.mxu0 0.0
      %1323 = vmatpush1.msra.mxu0 %v98
      %1324 = vmatprep.subr.mxu0 0.0
      %1325 = vmatpush1.msra.mxu0 %v97
      %1326 = vmatprep.subr.mxu0 0.0
      %1327 = vmatpush1.msra.mxu0 %v96
      %1328 = vmatprep.subr.mxu0 0.0
      %1329 = vmatpush1.msra.mxu0 %v95
      %1330 = vmatprep.subr.mxu0 0.0
      %1331 = vmatpush1.msra.mxu0 %v94
      %1332 = vmatprep.subr.mxu0 0.0
      %1333 = vmatpush1.msra.mxu0 %v93
      %1334 = vmatprep.subr.mxu0 0.0
      %1335 = vmatpush1.msra.mxu0 %v92
      %1336 = vmatprep.subr.mxu0 0.0
      %1337 = vmatpush1.msra.mxu0 %v91
      %1338 = vmatprep.subr.mxu0 0.0
      %1339 = vmatpush1.msra.mxu0 %v90
      %1340 = vmatprep.subr.mxu0 0.0
      %1341 = vmatpush1.msra.mxu0 %v89
      %1342 = vmatprep.subr.mxu0 0.0
      %1343 = vmatpush1.msra.mxu0 %v88
      %1344 = vmatprep.subr.mxu0 0.0
      %1345 = vmatpush1.msra.mxu0 %v87
      %1346 = vmatprep.subr.mxu0 0.0
      %1347 = vmatpush2.msra.mxu0 0.0
      %1348 = vmatprep.subr.mxu0 0.0
      %1349 = vmatpush2.msra.mxu0 0.0
      %1350 = vmatprep.subr.mxu0 0.0
      %1351 = vmatpush2.msra.mxu0 0.0
      %1352 = vmatprep.subr.mxu0 0.0
      %1353 = vmatpush2.msra.mxu0 0.0
      %1354 = vmatprep.subr.mxu0 0.0
      %1355 = vmatpush2.msra.mxu0 0.0
      %1356 = vmatprep.subr.mxu0 0.0
      %1357 = vmatpush2.msra.mxu0 0.0
      %1358 = vmatprep.subr.mxu0 0.0
      %1359 = vmatpush2.msra.mxu0 0.0
      %1360 = vmatprep.subr.mxu0 0.0
      %1361 = vmatpush2.msra.mxu0 0.0
      %1362 = vmatprep.subr.mxu0 0.0
      %1363 = vmatpush2.msra.mxu0 0.0
      %1364 = vmatprep.subr.mxu0 0.0
      %1365 = vmatpush2.msra.mxu0 0.0
      %1366 = vmatprep.subr.mxu0 0.0
      %1367 = vmatpush2.msra.mxu0 0.0
      %1368 = vmatprep.subr.mxu0 0.0
      %1369 = vmatpush2.msra.mxu0 0.0
      %1370 = vmatprep.subr.mxu0 0.0
      %1371 = vmatpush2.msra.mxu0 0.0
      %1372 = vmatprep.subr.mxu0 0.0
      %1373 = vmatpush2.msra.mxu0 0.0
      %1374 = vmatprep.subr.mxu0 0.0
      %1375 = vmatpush2.msra.mxu0 0.0
      %1376 = vmatprep.subr.mxu0 0.0
      %1377 = vmatpush2.msra.mxu0 0.0
      %1378 = vmatprep.mubr.f32.mxu0 0.0
      %1379 = vmatmul.mubr.f32.gmra.mxu0 %v1313
      %v1380 = vpop.f32.mrf.mxu0
      %v1381 = vadd.f32 %v154, %v1380
      %v1382 = vpop.f32.mrf.mxu0
      %1383 = vdwg.mxu0
      %v1384 = vmax.f32 %v1381, 0.0
      %v1385 = vmul.f32 %v1384, %v229
      %1386 = vadd.xlane.f32.xlu0 %v1385
      %v1387 = vpop.xlane.xlu0 %1386
      %v1388 = vmul.f32 %v1384, %v236
      %1389 = vadd.xlane.f32.xlu0 %v1388
      %v1390 = vpop.xlane.xlu0 %1389
      %v1391 = vmul.f32 %v240, %v1387
      %v1392 = vadd.f32 %v1215, %v1391
      %v1393 = vmul.f32 %v240, %v1390
      %v1394 = vadd.f32 %v1222, %v1393
      %v1395 = vmul.f32 %v1392, %v137
      %v1396 = vmul.f32 %v1394, %v142
      %v1397 = vadd.f32 %v1395, %v1396
      %v1398 = vadd.f32 %v1397, %v148
      %v1399 = vmax.f32 %v1398, 0.0
      %1400 = vmatprep.subr.mxu0 0.0
      %1401 = vmatpush1.msra.mxu0 %v102
      %1402 = vmatprep.subr.mxu0 0.0
      %1403 = vmatpush1.msra.mxu0 %v101
      %1404 = vmatprep.subr.mxu0 0.0
      %1405 = vmatpush1.msra.mxu0 %v100
      %1406 = vmatprep.subr.mxu0 0.0
      %1407 = vmatpush1.msra.mxu0 %v99
      %1408 = vmatprep.subr.mxu0 0.0
      %1409 = vmatpush1.msra.mxu0 %v98
      %1410 = vmatprep.subr.mxu0 0.0
      %1411 = vmatpush1.msra.mxu0 %v97
      %1412 = vmatprep.subr.mxu0 0.0
      %1413 = vmatpush1.msra.mxu0 %v96
      %1414 = vmatprep.subr.mxu0 0.0
      %1415 = vmatpush1.msra.mxu0 %v95
      %1416 = vmatprep.subr.mxu0 0.0
      %1417 = vmatpush1.msra.mxu0 %v94
      %1418 = vmatprep.subr.mxu0 0.0
      %1419 = vmatpush1.msra.mxu0 %v93
      %1420 = vmatprep.subr.mxu0 0.0
      %1421 = vmatpush1.msra.mxu0 %v92
      %1422 = vmatprep.subr.mxu0 0.0
      %1423 = vmatpush1.msra.mxu0 %v91
      %1424 = vmatprep.subr.mxu0 0.0
      %1425 = vmatpush1.msra.mxu0 %v90
      %1426 = vmatprep.subr.mxu0 0.0
      %1427 = vmatpush1.msra.mxu0 %v89
      %1428 = vmatprep.subr.mxu0 0.0
      %1429 = vmatpush1.msra.mxu0 %v88
      %1430 = vmatprep.subr.mxu0 0.0
      %1431 = vmatpush1.msra.mxu0 %v87
      %1432 = vmatprep.subr.mxu0 0.0
      %1433 = vmatpush2.msra.mxu0 0.0
      %1434 = vmatprep.subr.mxu0 0.0
      %1435 = vmatpush2.msra.mxu0 0.0
      %1436 = vmatprep.subr.mxu0 0.0
      %1437 = vmatpush2.msra.mxu0 0.0
      %1438 = vmatprep.subr.mxu0 0.0
      %1439 = vmatpush2.msra.mxu0 0.0
      %1440 = vmatprep.subr.mxu0 0.0
      %1441 = vmatpush2.msra.mxu0 0.0
      %1442 = vmatprep.subr.mxu0 0.0
      %1443 = vmatpush2.msra.mxu0 0.0
      %1444 = vmatprep.subr.mxu0 0.0
      %1445 = vmatpush2.msra.mxu0 0.0
      %1446 = vmatprep.subr.mxu0 0.0
      %1447 = vmatpush2.msra.mxu0 0.0
      %1448 = vmatprep.subr.mxu0 0.0
      %1449 = vmatpush2.msra.mxu0 0.0
      %1450 = vmatprep.subr.mxu0 0.0
      %1451 = vmatpush2.msra.mxu0 0.0
      %1452 = vmatprep.subr.mxu0 0.0
      %1453 = vmatpush2.msra.mxu0 0.0
      %1454 = vmatprep.subr.mxu0 0.0
      %1455 = vmatpush2.msra.mxu0 0.0
      %1456 = vmatprep.subr.mxu0 0.0
      %1457 = vmatpush2.msra.mxu0 0.0
      %1458 = vmatprep.subr.mxu0 0.0
      %1459 = vmatpush2.msra.mxu0 0.0
      %1460 = vmatprep.subr.mxu0 0.0
      %1461 = vmatpush2.msra.mxu0 0.0
      %1462 = vmatprep.subr.mxu0 0.0
      %1463 = vmatpush2.msra.mxu0 0.0
      %1464 = vmatprep.mubr.f32.mxu0 0.0
      %1465 = vmatmul.mubr.f32.gmra.mxu0 %v1399
      %v1466 = vpop.f32.mrf.mxu0
      %v1467 = vadd.f32 %v154, %v1466
      %v1468 = vpop.f32.mrf.mxu0
      %1469 = vdwg.mxu0
      %v1470 = vmax.f32 %v1467, 0.0
      %v1471 = vmul.f32 %v1470, %v229
      %1472 = vadd.xlane.f32.xlu0 %v1471
      %v1473 = vpop.xlane.xlu0 %1472
      %v1474 = vmul.f32 %v1470, %v236
      %1475 = vadd.xlane.f32.xlu0 %v1474
      %v1476 = vpop.xlane.xlu0 %1475
      %v1477 = vmul.f32 %v413, %v1473
      %v1478 = vadd.f32 %v1215, %v1477
      %v1479 = vmul.f32 %v413, %v1476
      %v1480 = vadd.f32 %v1222, %v1479
      %v1481 = vmul.f32 %v1478, %v137
      %v1482 = vmul.f32 %v1480, %v142
      %v1483 = vadd.f32 %v1481, %v1482
      %v1484 = vadd.f32 %v1483, %v148
      %v1485 = vmax.f32 %v1484, 0.0
      %1486 = vmatprep.subr.mxu0 0.0
      %1487 = vmatpush1.msra.mxu0 %v102
      %1488 = vmatprep.subr.mxu0 0.0
      %1489 = vmatpush1.msra.mxu0 %v101
      %1490 = vmatprep.subr.mxu0 0.0
      %1491 = vmatpush1.msra.mxu0 %v100
      %1492 = vmatprep.subr.mxu0 0.0
      %1493 = vmatpush1.msra.mxu0 %v99
      %1494 = vmatprep.subr.mxu0 0.0
      %1495 = vmatpush1.msra.mxu0 %v98
      %1496 = vmatprep.subr.mxu0 0.0
      %1497 = vmatpush1.msra.mxu0 %v97
      %1498 = vmatprep.subr.mxu0 0.0
      %1499 = vmatpush1.msra.mxu0 %v96
      %1500 = vmatprep.subr.mxu0 0.0
      %1501 = vmatpush1.msra.mxu0 %v95
      %1502 = vmatprep.subr.mxu0 0.0
      %1503 = vmatpush1.msra.mxu0 %v94
      %1504 = vmatprep.subr.mxu0 0.0
      %1505 = vmatpush1.msra.mxu0 %v93
      %1506 = vmatprep.subr.mxu0 0.0
      %1507 = vmatpush1.msra.mxu0 %v92
      %1508 = vmatprep.subr.mxu0 0.0
      %1509 = vmatpush1.msra.mxu0 %v91
      %1510 = vmatprep.subr.mxu0 0.0
      %1511 = vmatpush1.msra.mxu0 %v90
      %1512 = vmatprep.subr.mxu0 0.0
      %1513 = vmatpush1.msra.mxu0 %v89
      %1514 = vmatprep.subr.mxu0 0.0
      %1515 = vmatpush1.msra.mxu0 %v88
      %1516 = vmatprep.subr.mxu0 0.0
      %1517 = vmatpush1.msra.mxu0 %v87
      %1518 = vmatprep.subr.mxu0 0.0
      %1519 = vmatpush2.msra.mxu0 0.0
      %1520 = vmatprep.subr.mxu0 0.0
      %1521 = vmatpush2.msra.mxu0 0.0
      %1522 = vmatprep.subr.mxu0 0.0
      %1523 = vmatpush2.msra.mxu0 0.0
      %1524 = vmatprep.subr.mxu0 0.0
      %1525 = vmatpush2.msra.mxu0 0.0
      %1526 = vmatprep.subr.mxu0 0.0
      %1527 = vmatpush2.msra.mxu0 0.0
      %1528 = vmatprep.subr.mxu0 0.0
      %1529 = vmatpush2.msra.mxu0 0.0
      %1530 = vmatprep.subr.mxu0 0.0
      %1531 = vmatpush2.msra.mxu0 0.0
      %1532 = vmatprep.subr.mxu0 0.0
      %1533 = vmatpush2.msra.mxu0 0.0
      %1534 = vmatprep.subr.mxu0 0.0
      %1535 = vmatpush2.msra.mxu0 0.0
      %1536 = vmatprep.subr.mxu0 0.0
      %1537 = vmatpush2.msra.mxu0 0.0
      %1538 = vmatprep.subr.mxu0 0.0
      %1539 = vmatpush2.msra.mxu0 0.0
      %1540 = vmatprep.subr.mxu0 0.0
      %1541 = vmatpush2.msra.mxu0 0.0
      %1542 = vmatprep.subr.mxu0 0.0
      %1543 = vmatpush2.msra.mxu0 0.0
      %1544 = vmatprep.subr.mxu0 0.0
      %1545 = vmatpush2.msra.mxu0 0.0
      %1546 = vmatprep.subr.mxu0 0.0
      %1547 = vmatpush2.msra.mxu0 0.0
      %1548 = vmatprep.subr.mxu0 0.0
      %1549 = vmatpush2.msra.mxu0 0.0
      %1550 = vmatprep.mubr.f32.mxu0 0.0
      %1551 = vmatmul.mubr.f32.gmra.mxu0 %v1485
      %v1552 = vpop.f32.mrf.mxu0
      %v1553 = vadd.f32 %v154, %v1552
      %v1554 = vpop.f32.mrf.mxu0
      %1555 = vdwg.mxu0
      %v1556 = vmax.f32 %v1553, 0.0
      %v1557 = vmul.f32 %v1556, %v229
      %1558 = vadd.xlane.f32.xlu0 %v1557
      %v1559 = vpop.xlane.xlu0 %1558
      %v1560 = vmul.f32 %v1556, %v236
      %1561 = vadd.xlane.f32.xlu0 %v1560
      %v1562 = vpop.xlane.xlu0 %1561
      %v1563 = vmul.f32 %v1387, 2.0
      %v1564 = vadd.f32 %v1301, %v1563
      %v1565 = vmul.f32 %v1473, 2.0
      %v1566 = vadd.f32 %v1564, %v1565
      %v1567 = vadd.f32 %v1566, %v1559
      %v1568 = vmul.f32 %v505, %v1567
      %v1569 = vadd.f32 %v1215, %v1568
      %v1570 = vmul.f32 %v1390, 2.0
      %v1571 = vadd.f32 %v1304, %v1570
      %v1572 = vmul.f32 %v1476, 2.0
      %v1573 = vadd.f32 %v1571, %v1572
      %v1574 = vadd.f32 %v1573, %v1562
      %v1575 = vmul.f32 %v505, %v1574
      %v1576 = vadd.f32 %v1222, %v1575
      %v1577 = vmul.f32 %v1569, %v137
      %v1578 = vmul.f32 %v1576, %v142
      %v1579 = vadd.f32 %v1577, %v1578
      %v1580 = vadd.f32 %v1579, %v148
      %v1581 = vmax.f32 %v1580, 0.0
      %1582 = vmatprep.subr.mxu0 0.0
      %1583 = vmatpush1.msra.mxu0 %v102
      %1584 = vmatprep.subr.mxu0 0.0
      %1585 = vmatpush1.msra.mxu0 %v101
      %1586 = vmatprep.subr.mxu0 0.0
      %1587 = vmatpush1.msra.mxu0 %v100
      %1588 = vmatprep.subr.mxu0 0.0
      %1589 = vmatpush1.msra.mxu0 %v99
      %1590 = vmatprep.subr.mxu0 0.0
      %1591 = vmatpush1.msra.mxu0 %v98
      %1592 = vmatprep.subr.mxu0 0.0
      %1593 = vmatpush1.msra.mxu0 %v97
      %1594 = vmatprep.subr.mxu0 0.0
      %1595 = vmatpush1.msra.mxu0 %v96
      %1596 = vmatprep.subr.mxu0 0.0
      %1597 = vmatpush1.msra.mxu0 %v95
      %1598 = vmatprep.subr.mxu0 0.0
      %1599 = vmatpush1.msra.mxu0 %v94
      %1600 = vmatprep.subr.mxu0 0.0
      %1601 = vmatpush1.msra.mxu0 %v93
      %1602 = vmatprep.subr.mxu0 0.0
      %1603 = vmatpush1.msra.mxu0 %v92
      %1604 = vmatprep.subr.mxu0 0.0
      %1605 = vmatpush1.msra.mxu0 %v91
      %1606 = vmatprep.subr.mxu0 0.0
      %1607 = vmatpush1.msra.mxu0 %v90
      %1608 = vmatprep.subr.mxu0 0.0
      %1609 = vmatpush1.msra.mxu0 %v89
      %1610 = vmatprep.subr.mxu0 0.0
      %1611 = vmatpush1.msra.mxu0 %v88
      %1612 = vmatprep.subr.mxu0 0.0
      %1613 = vmatpush1.msra.mxu0 %v87
      %1614 = vmatprep.subr.mxu0 0.0
      %1615 = vmatpush2.msra.mxu0 0.0
      %1616 = vmatprep.subr.mxu0 0.0
      %1617 = vmatpush2.msra.mxu0 0.0
      %1618 = vmatprep.subr.mxu0 0.0
      %1619 = vmatpush2.msra.mxu0 0.0
      %1620 = vmatprep.subr.mxu0 0.0
      %1621 = vmatpush2.msra.mxu0 0.0
      %1622 = vmatprep.subr.mxu0 0.0
      %1623 = vmatpush2.msra.mxu0 0.0
      %1624 = vmatprep.subr.mxu0 0.0
      %1625 = vmatpush2.msra.mxu0 0.0
      %1626 = vmatprep.subr.mxu0 0.0
      %1627 = vmatpush2.msra.mxu0 0.0
      %1628 = vmatprep.subr.mxu0 0.0
      %1629 = vmatpush2.msra.mxu0 0.0
      %1630 = vmatprep.subr.mxu0 0.0
      %1631 = vmatpush2.msra.mxu0 0.0
      %1632 = vmatprep.subr.mxu0 0.0
      %1633 = vmatpush2.msra.mxu0 0.0
      %1634 = vmatprep.subr.mxu0 0.0
      %1635 = vmatpush2.msra.mxu0 0.0
      %1636 = vmatprep.subr.mxu0 0.0
      %1637 = vmatpush2.msra.mxu0 0.0
      %1638 = vmatprep.subr.mxu0 0.0
      %1639 = vmatpush2.msra.mxu0 0.0
      %1640 = vmatprep.subr.mxu0 0.0
      %1641 = vmatpush2.msra.mxu0 0.0
      %1642 = vmatprep.subr.mxu0 0.0
      %1643 = vmatpush2.msra.mxu0 0.0
      %1644 = vmatprep.subr.mxu0 0.0
      %1645 = vmatpush2.msra.mxu0 0.0
      %1646 = vmatprep.mubr.f32.mxu0 0.0
      %1647 = vmatmul.mubr.f32.gmra.mxu0 %v1581
      %v1648 = vpop.f32.mrf.mxu0
      %v1649 = vadd.f32 %v154, %v1648
      %v1650 = vpop.f32.mrf.mxu0
      %1651 = vdwg.mxu0
      %v1652 = vmax.f32 %v1649, 0.0
      %v1653 = vmul.f32 %v1652, %v229
      %1654 = vadd.xlane.f32.xlu0 %v1653
      %v1655 = vpop.xlane.xlu0 %1654
      %v1656 = vmul.f32 %v1652, %v236
      %1657 = vadd.xlane.f32.xlu0 %v1656
      %v1658 = vpop.xlane.xlu0 %1657
      %v1659 = vmul.f32 %v240, %v1655
      %v1660 = vadd.f32 %v1569, %v1659
      %v1661 = vmul.f32 %v240, %v1658
      %v1662 = vadd.f32 %v1576, %v1661
      %v1663 = vmul.f32 %v1660, %v137
      %v1664 = vmul.f32 %v1662, %v142
      %v1665 = vadd.f32 %v1663, %v1664
      %v1666 = vadd.f32 %v1665, %v148
      %v1667 = vmax.f32 %v1666, 0.0
      %1668 = vmatprep.subr.mxu0 0.0
      %1669 = vmatpush1.msra.mxu0 %v102
      %1670 = vmatprep.subr.mxu0 0.0
      %1671 = vmatpush1.msra.mxu0 %v101
      %1672 = vmatprep.subr.mxu0 0.0
      %1673 = vmatpush1.msra.mxu0 %v100
      %1674 = vmatprep.subr.mxu0 0.0
      %1675 = vmatpush1.msra.mxu0 %v99
      %1676 = vmatprep.subr.mxu0 0.0
      %1677 = vmatpush1.msra.mxu0 %v98
      %1678 = vmatprep.subr.mxu0 0.0
      %1679 = vmatpush1.msra.mxu0 %v97
      %1680 = vmatprep.subr.mxu0 0.0
      %1681 = vmatpush1.msra.mxu0 %v96
      %1682 = vmatprep.subr.mxu0 0.0
      %1683 = vmatpush1.msra.mxu0 %v95
      %1684 = vmatprep.subr.mxu0 0.0
      %1685 = vmatpush1.msra.mxu0 %v94
      %1686 = vmatprep.subr.mxu0 0.0
      %1687 = vmatpush1.msra.mxu0 %v93
      %1688 = vmatprep.subr.mxu0 0.0
      %1689 = vmatpush1.msra.mxu0 %v92
      %1690 = vmatprep.subr.mxu0 0.0
      %1691 = vmatpush1.msra.mxu0 %v91
      %1692 = vmatprep.subr.mxu0 0.0
      %1693 = vmatpush1.msra.mxu0 %v90
      %1694 = vmatprep.subr.mxu0 0.0
      %1695 = vmatpush1.msra.mxu0 %v89
      %1696 = vmatprep.subr.mxu0 0.0
      %1697 = vmatpush1.msra.mxu0 %v88
      %1698 = vmatprep.subr.mxu0 0.0
      %1699 = vmatpush1.msra.mxu0 %v87
      %1700 = vmatprep.subr.mxu0 0.0
      %1701 = vmatpush2.msra.mxu0 0.0
      %1702 = vmatprep.subr.mxu0 0.0
      %1703 = vmatpush2.msra.mxu0 0.0
      %1704 = vmatprep.subr.mxu0 0.0
      %1705 = vmatpush2.msra.mxu0 0.0
      %1706 = vmatprep.subr.mxu0 0.0
      %1707 = vmatpush2.msra.mxu0 0.0
      %1708 = vmatprep.subr.mxu0 0.0
      %1709 = vmatpush2.msra.mxu0 0.0
      %1710 = vmatprep.subr.mxu0 0.0
      %1711 = vmatpush2.msra.mxu0 0.0
      %1712 = vmatprep.subr.mxu0 0.0
      %1713 = vmatpush2.msra.mxu0 0.0
      %1714 = vmatprep.subr.mxu0 0.0
      %1715 = vmatpush2.msra.mxu0 0.0
      %1716 = vmatprep.subr.mxu0 0.0
      %1717 = vmatpush2.msra.mxu0 0.0
      %1718 = vmatprep.subr.mxu0 0.0
      %1719 = vmatpush2.msra.mxu0 0.0
      %1720 = vmatprep.subr.mxu0 0.0
      %1721 = vmatpush2.msra.mxu0 0.0
      %1722 = vmatprep.subr.mxu0 0.0
      %1723 = vmatpush2.msra.mxu0 0.0
      %1724 = vmatprep.subr.mxu0 0.0
      %1725 = vmatpush2.msra.mxu0 0.0
      %1726 = vmatprep.subr.mxu0 0.0
      %1727 = vmatpush2.msra.mxu0 0.0
      %1728 = vmatprep.subr.mxu0 0.0
      %1729 = vmatpush2.msra.mxu0 0.0
      %1730 = vmatprep.subr.mxu0 0.0
      %1731 = vmatpush2.msra.mxu0 0.0
      %1732 = vmatprep.mubr.f32.mxu0 0.0
      %1733 = vmatmul.mubr.f32.gmra.mxu0 %v1667
      %v1734 = vpop.f32.mrf.mxu0
      %v1735 = vadd.f32 %v154, %v1734
      %v1736 = vpop.f32.mrf.mxu0
      %1737 = vdwg.mxu0
      %v1738 = vmax.f32 %v1735, 0.0
      %v1739 = vmul.f32 %v1738, %v229
      %1740 = vadd.xlane.f32.xlu0 %v1739
      %v1741 = vpop.xlane.xlu0 %1740
      %v1742 = vmul.f32 %v1738, %v236
      %1743 = vadd.xlane.f32.xlu0 %v1742
      %v1744 = vpop.xlane.xlu0 %1743
      %v1745 = vmul.f32 %v240, %v1741
      %v1746 = vadd.f32 %v1569, %v1745
      %v1747 = vmul.f32 %v240, %v1744
      %v1748 = vadd.f32 %v1576, %v1747
      %v1749 = vmul.f32 %v1746, %v137
      %v1750 = vmul.f32 %v1748, %v142
      %v1751 = vadd.f32 %v1749, %v1750
      %v1752 = vadd.f32 %v1751, %v148
      %v1753 = vmax.f32 %v1752, 0.0
      %1754 = vmatprep.subr.mxu0 0.0
      %1755 = vmatpush1.msra.mxu0 %v102
      %1756 = vmatprep.subr.mxu0 0.0
      %1757 = vmatpush1.msra.mxu0 %v101
      %1758 = vmatprep.subr.mxu0 0.0
      %1759 = vmatpush1.msra.mxu0 %v100
      %1760 = vmatprep.subr.mxu0 0.0
      %1761 = vmatpush1.msra.mxu0 %v99
      %1762 = vmatprep.subr.mxu0 0.0
      %1763 = vmatpush1.msra.mxu0 %v98
      %1764 = vmatprep.subr.mxu0 0.0
      %1765 = vmatpush1.msra.mxu0 %v97
      %1766 = vmatprep.subr.mxu0 0.0
      %1767 = vmatpush1.msra.mxu0 %v96
      %1768 = vmatprep.subr.mxu0 0.0
      %1769 = vmatpush1.msra.mxu0 %v95
      %1770 = vmatprep.subr.mxu0 0.0
      %1771 = vmatpush1.msra.mxu0 %v94
      %1772 = vmatprep.subr.mxu0 0.0
      %1773 = vmatpush1.msra.mxu0 %v93
      %1774 = vmatprep.subr.mxu0 0.0
      %1775 = vmatpush1.msra.mxu0 %v92
      %1776 = vmatprep.subr.mxu0 0.0
      %1777 = vmatpush1.msra.mxu0 %v91
      %1778 = vmatprep.subr.mxu0 0.0
      %1779 = vmatpush1.msra.mxu0 %v90
      %1780 = vmatprep.subr.mxu0 0.0
      %1781 = vmatpush1.msra.mxu0 %v89
      %1782 = vmatprep.subr.mxu0 0.0
      %1783 = vmatpush1.msra.mxu0 %v88
      %1784 = vmatprep.subr.mxu0 0.0
      %1785 = vmatpush1.msra.mxu0 %v87
      %1786 = vmatprep.subr.mxu0 0.0
      %1787 = vmatpush2.msra.mxu0 0.0
      %1788 = vmatprep.subr.mxu0 0.0
      %1789 = vmatpush2.msra.mxu0 0.0
      %1790 = vmatprep.subr.mxu0 0.0
      %1791 = vmatpush2.msra.mxu0 0.0
      %1792 = vmatprep.subr.mxu0 0.0
      %1793 = vmatpush2.msra.mxu0 0.0
      %1794 = vmatprep.subr.mxu0 0.0
      %1795 = vmatpush2.msra.mxu0 0.0
      %1796 = vmatprep.subr.mxu0 0.0
      %1797 = vmatpush2.msra.mxu0 0.0
      %1798 = vmatprep.subr.mxu0 0.0
      %1799 = vmatpush2.msra.mxu0 0.0
      %1800 = vmatprep.subr.mxu0 0.0
      %1801 = vmatpush2.msra.mxu0 0.0
      %1802 = vmatprep.subr.mxu0 0.0
      %1803 = vmatpush2.msra.mxu0 0.0
      %1804 = vmatprep.subr.mxu0 0.0
      %1805 = vmatpush2.msra.mxu0 0.0
      %1806 = vmatprep.subr.mxu0 0.0
      %1807 = vmatpush2.msra.mxu0 0.0
      %1808 = vmatprep.subr.mxu0 0.0
      %1809 = vmatpush2.msra.mxu0 0.0
      %1810 = vmatprep.subr.mxu0 0.0
      %1811 = vmatpush2.msra.mxu0 0.0
      %1812 = vmatprep.subr.mxu0 0.0
      %1813 = vmatpush2.msra.mxu0 0.0
      %1814 = vmatprep.subr.mxu0 0.0
      %1815 = vmatpush2.msra.mxu0 0.0
      %1816 = vmatprep.subr.mxu0 0.0
      %1817 = vmatpush2.msra.mxu0 0.0
      %1818 = vmatprep.mubr.f32.mxu0 0.0
      %1819 = vmatmul.mubr.f32.gmra.mxu0 %v1753
      %v1820 = vpop.f32.mrf.mxu0
      %v1821 = vadd.f32 %v154, %v1820
      %v1822 = vpop.f32.mrf.mxu0
      %1823 = vdwg.mxu0
      %v1824 = vmax.f32 %v1821, 0.0
      %v1825 = vmul.f32 %v1824, %v229
      %1826 = vadd.xlane.f32.xlu0 %v1825
      %v1827 = vpop.xlane.xlu0 %1826
      %v1828 = vmul.f32 %v1824, %v236
      %1829 = vadd.xlane.f32.xlu0 %v1828
      %v1830 = vpop.xlane.xlu0 %1829
      %v1831 = vmul.f32 %v413, %v1827
      %v1832 = vadd.f32 %v1569, %v1831
      %v1833 = vmul.f32 %v413, %v1830
      %v1834 = vadd.f32 %v1576, %v1833
      %v1835 = vmul.f32 %v1832, %v137
      %v1836 = vmul.f32 %v1834, %v142
      %v1837 = vadd.f32 %v1835, %v1836
      %v1838 = vadd.f32 %v1837, %v148
      %v1839 = vmax.f32 %v1838, 0.0
      %1840 = vmatprep.subr.mxu0 0.0
      %1841 = vmatpush1.msra.mxu0 %v102
      %1842 = vmatprep.subr.mxu0 0.0
      %1843 = vmatpush1.msra.mxu0 %v101
      %1844 = vmatprep.subr.mxu0 0.0
      %1845 = vmatpush1.msra.mxu0 %v100
      %1846 = vmatprep.subr.mxu0 0.0
      %1847 = vmatpush1.msra.mxu0 %v99
      %1848 = vmatprep.subr.mxu0 0.0
      %1849 = vmatpush1.msra.mxu0 %v98
      %1850 = vmatprep.subr.mxu0 0.0
      %1851 = vmatpush1.msra.mxu0 %v97
      %1852 = vmatprep.subr.mxu0 0.0
      %1853 = vmatpush1.msra.mxu0 %v96
      %1854 = vmatprep.subr.mxu0 0.0
      %1855 = vmatpush1.msra.mxu0 %v95
      %1856 = vmatprep.subr.mxu0 0.0
      %1857 = vmatpush1.msra.mxu0 %v94
      %1858 = vmatprep.subr.mxu0 0.0
      %1859 = vmatpush1.msra.mxu0 %v93
      %1860 = vmatprep.subr.mxu0 0.0
      %1861 = vmatpush1.msra.mxu0 %v92
      %1862 = vmatprep.subr.mxu0 0.0
      %1863 = vmatpush1.msra.mxu0 %v91
      %1864 = vmatprep.subr.mxu0 0.0
      %1865 = vmatpush1.msra.mxu0 %v90
      %1866 = vmatprep.subr.mxu0 0.0
      %1867 = vmatpush1.msra.mxu0 %v89
      %1868 = vmatprep.subr.mxu0 0.0
      %1869 = vmatpush1.msra.mxu0 %v88
      %1870 = vmatprep.subr.mxu0 0.0
      %1871 = vmatpush1.msra.mxu0 %v87
      %1872 = vmatprep.subr.mxu0 0.0
      %1873 = vmatpush2.msra.mxu0 0.0
      %1874 = vmatprep.subr.mxu0 0.0
      %1875 = vmatpush2.msra.mxu0 0.0
      %1876 = vmatprep.subr.mxu0 0.0
      %1877 = vmatpush2.msra.mxu0 0.0
      %1878 = vmatprep.subr.mxu0 0.0
      %1879 = vmatpush2.msra.mxu0 0.0
      %1880 = vmatprep.subr.mxu0 0.0
      %1881 = vmatpush2.msra.mxu0 0.0
      %1882 = vmatprep.subr.mxu0 0.0
      %1883 = vmatpush2.msra.mxu0 0.0
      %1884 = vmatprep.subr.mxu0 0.0
      %1885 = vmatpush2.msra.mxu0 0.0
      %1886 = vmatprep.subr.mxu0 0.0
      %1887 = vmatpush2.msra.mxu0 0.0
      %1888 = vmatprep.subr.mxu0 0.0
      %1889 = vmatpush2.msra.mxu0 0.0
      %1890 = vmatprep.subr.mxu0 0.0
      %1891 = vmatpush2.msra.mxu0 0.0
      %1892 = vmatprep.subr.mxu0 0.0
      %1893 = vmatpush2.msra.mxu0 0.0
      %1894 = vmatprep.subr.mxu0 0.0
      %1895 = vmatpush2.msra.mxu0 0.0
      %1896 = vmatprep.subr.mxu0 0.0
      %1897 = vmatpush2.msra.mxu0 0.0
      %1898 = vmatprep.subr.mxu0 0.0
      %1899 = vmatpush2.msra.mxu0 0.0
      %1900 = vmatprep.subr.mxu0 0.0
      %1901 = vmatpush2.msra.mxu0 0.0
      %1902 = vmatprep.subr.mxu0 0.0
      %1903 = vmatpush2.msra.mxu0 0.0
      %1904 = vmatprep.mubr.f32.mxu0 0.0
      %1905 = vmatmul.mubr.f32.gmra.mxu0 %v1839
      %v1906 = vpop.f32.mrf.mxu0
      %v1907 = vadd.f32 %v154, %v1906
      %v1908 = vpop.f32.mrf.mxu0
      %1909 = vdwg.mxu0
      %v1910 = vmax.f32 %v1907, 0.0
      %v1911 = vmul.f32 %v1910, %v229
      %1912 = vadd.xlane.f32.xlu0 %v1911
      %v1913 = vpop.xlane.xlu0 %1912
      %v1914 = vmul.f32 %v1910, %v236
      %1915 = vadd.xlane.f32.xlu0 %v1914
      %v1916 = vpop.xlane.xlu0 %1915
      %v1917 = vmul.f32 %v1741, 2.0
      %v1918 = vadd.f32 %v1655, %v1917
      %v1919 = vmul.f32 %v1827, 2.0
      %v1920 = vadd.f32 %v1918, %v1919
      %v1921 = vadd.f32 %v1920, %v1913
      %v1922 = vmul.f32 %v505, %v1921
      %v1923 = vadd.f32 %v1569, %v1922
      %v1924 = vmul.f32 %v1744, 2.0
      %v1925 = vadd.f32 %v1658, %v1924
      %v1926 = vmul.f32 %v1830, 2.0
      %v1927 = vadd.f32 %v1925, %v1926
      %v1928 = vadd.f32 %v1927, %v1916
      %v1929 = vmul.f32 %v505, %v1928
      %v1930 = vadd.f32 %v1576, %v1929
      %v1931 = vmul.f32 %v1923, %v137
      %v1932 = vmul.f32 %v1930, %v142
      %v1933 = vadd.f32 %v1931, %v1932
      %v1934 = vadd.f32 %v1933, %v148
      %v1935 = vmax.f32 %v1934, 0.0
      %1936 = vmatprep.subr.mxu0 0.0
      %1937 = vmatpush1.msra.mxu0 %v102
      %1938 = vmatprep.subr.mxu0 0.0
      %1939 = vmatpush1.msra.mxu0 %v101
      %1940 = vmatprep.subr.mxu0 0.0
      %1941 = vmatpush1.msra.mxu0 %v100
      %1942 = vmatprep.subr.mxu0 0.0
      %1943 = vmatpush1.msra.mxu0 %v99
      %1944 = vmatprep.subr.mxu0 0.0
      %1945 = vmatpush1.msra.mxu0 %v98
      %1946 = vmatprep.subr.mxu0 0.0
      %1947 = vmatpush1.msra.mxu0 %v97
      %1948 = vmatprep.subr.mxu0 0.0
      %1949 = vmatpush1.msra.mxu0 %v96
      %1950 = vmatprep.subr.mxu0 0.0
      %1951 = vmatpush1.msra.mxu0 %v95
      %1952 = vmatprep.subr.mxu0 0.0
      %1953 = vmatpush1.msra.mxu0 %v94
      %1954 = vmatprep.subr.mxu0 0.0
      %1955 = vmatpush1.msra.mxu0 %v93
      %1956 = vmatprep.subr.mxu0 0.0
      %1957 = vmatpush1.msra.mxu0 %v92
      %1958 = vmatprep.subr.mxu0 0.0
      %1959 = vmatpush1.msra.mxu0 %v91
      %1960 = vmatprep.subr.mxu0 0.0
      %1961 = vmatpush1.msra.mxu0 %v90
      %1962 = vmatprep.subr.mxu0 0.0
      %1963 = vmatpush1.msra.mxu0 %v89
      %1964 = vmatprep.subr.mxu0 0.0
      %1965 = vmatpush1.msra.mxu0 %v88
      %1966 = vmatprep.subr.mxu0 0.0
      %1967 = vmatpush1.msra.mxu0 %v87
      %1968 = vmatprep.subr.mxu0 0.0
      %1969 = vmatpush2.msra.mxu0 0.0
      %1970 = vmatprep.subr.mxu0 0.0
      %1971 = vmatpush2.msra.mxu0 0.0
      %1972 = vmatprep.subr.mxu0 0.0
      %1973 = vmatpush2.msra.mxu0 0.0
      %1974 = vmatprep.subr.mxu0 0.0
      %1975 = vmatpush2.msra.mxu0 0.0
      %1976 = vmatprep.subr.mxu0 0.0
      %1977 = vmatpush2.msra.mxu0 0.0
      %1978 = vmatprep.subr.mxu0 0.0
      %1979 = vmatpush2.msra.mxu0 0.0
      %1980 = vmatprep.subr.mxu0 0.0
      %1981 = vmatpush2.msra.mxu0 0.0
      %1982 = vmatprep.subr.mxu0 0.0
      %1983 = vmatpush2.msra.mxu0 0.0
      %1984 = vmatprep.subr.mxu0 0.0
      %1985 = vmatpush2.msra.mxu0 0.0
      %1986 = vmatprep.subr.mxu0 0.0
      %1987 = vmatpush2.msra.mxu0 0.0
      %1988 = vmatprep.subr.mxu0 0.0
      %1989 = vmatpush2.msra.mxu0 0.0
      %1990 = vmatprep.subr.mxu0 0.0
      %1991 = vmatpush2.msra.mxu0 0.0
      %1992 = vmatprep.subr.mxu0 0.0
      %1993 = vmatpush2.msra.mxu0 0.0
      %1994 = vmatprep.subr.mxu0 0.0
      %1995 = vmatpush2.msra.mxu0 0.0
      %1996 = vmatprep.subr.mxu0 0.0
      %1997 = vmatpush2.msra.mxu0 0.0
      %1998 = vmatprep.subr.mxu0 0.0
      %1999 = vmatpush2.msra.mxu0 0.0
      %2000 = vmatprep.mubr.f32.mxu0 0.0
      %2001 = vmatmul.mubr.f32.gmra.mxu0 %v1935
      %v2002 = vpop.f32.mrf.mxu0
      %v2003 = vadd.f32 %v154, %v2002
      %v2004 = vpop.f32.mrf.mxu0
      %2005 = vdwg.mxu0
      %v2006 = vmax.f32 %v2003, 0.0
      %v2007 = vmul.f32 %v2006, %v229
      %2008 = vadd.xlane.f32.xlu0 %v2007
      %v2009 = vpop.xlane.xlu0 %2008
      %v2010 = vmul.f32 %v2006, %v236
      %2011 = vadd.xlane.f32.xlu0 %v2010
      %v2012 = vpop.xlane.xlu0 %2011
      %v2013 = vmul.f32 %v240, %v2009
      %v2014 = vadd.f32 %v1923, %v2013
      %v2015 = vmul.f32 %v240, %v2012
      %v2016 = vadd.f32 %v1930, %v2015
      %v2017 = vmul.f32 %v2014, %v137
      %v2018 = vmul.f32 %v2016, %v142
      %v2019 = vadd.f32 %v2017, %v2018
      %v2020 = vadd.f32 %v2019, %v148
      %v2021 = vmax.f32 %v2020, 0.0
      %2022 = vmatprep.subr.mxu0 0.0
      %2023 = vmatpush1.msra.mxu0 %v102
      %2024 = vmatprep.subr.mxu0 0.0
      %2025 = vmatpush1.msra.mxu0 %v101
      %2026 = vmatprep.subr.mxu0 0.0
      %2027 = vmatpush1.msra.mxu0 %v100
      %2028 = vmatprep.subr.mxu0 0.0
      %2029 = vmatpush1.msra.mxu0 %v99
      %2030 = vmatprep.subr.mxu0 0.0
      %2031 = vmatpush1.msra.mxu0 %v98
      %2032 = vmatprep.subr.mxu0 0.0
      %2033 = vmatpush1.msra.mxu0 %v97
      %2034 = vmatprep.subr.mxu0 0.0
      %2035 = vmatpush1.msra.mxu0 %v96
      %2036 = vmatprep.subr.mxu0 0.0
      %2037 = vmatpush1.msra.mxu0 %v95
      %2038 = vmatprep.subr.mxu0 0.0
      %2039 = vmatpush1.msra.mxu0 %v94
      %2040 = vmatprep.subr.mxu0 0.0
      %2041 = vmatpush1.msra.mxu0 %v93
      %2042 = vmatprep.subr.mxu0 0.0
      %2043 = vmatpush1.msra.mxu0 %v92
      %2044 = vmatprep.subr.mxu0 0.0
      %2045 = vmatpush1.msra.mxu0 %v91
      %2046 = vmatprep.subr.mxu0 0.0
      %2047 = vmatpush1.msra.mxu0 %v90
      %2048 = vmatprep.subr.mxu0 0.0
      %2049 = vmatpush1.msra.mxu0 %v89
      %2050 = vmatprep.subr.mxu0 0.0
      %2051 = vmatpush1.msra.mxu0 %v88
      %2052 = vmatprep.subr.mxu0 0.0
      %2053 = vmatpush1.msra.mxu0 %v87
      %2054 = vmatprep.subr.mxu0 0.0
      %2055 = vmatpush2.msra.mxu0 0.0
      %2056 = vmatprep.subr.mxu0 0.0
      %2057 = vmatpush2.msra.mxu0 0.0
      %2058 = vmatprep.subr.mxu0 0.0
      %2059 = vmatpush2.msra.mxu0 0.0
      %2060 = vmatprep.subr.mxu0 0.0
      %2061 = vmatpush2.msra.mxu0 0.0
      %2062 = vmatprep.subr.mxu0 0.0
      %2063 = vmatpush2.msra.mxu0 0.0
      %2064 = vmatprep.subr.mxu0 0.0
      %2065 = vmatpush2.msra.mxu0 0.0
      %2066 = vmatprep.subr.mxu0 0.0
      %2067 = vmatpush2.msra.mxu0 0.0
      %2068 = vmatprep.subr.mxu0 0.0
      %2069 = vmatpush2.msra.mxu0 0.0
      %2070 = vmatprep.subr.mxu0 0.0
      %2071 = vmatpush2.msra.mxu0 0.0
      %2072 = vmatprep.subr.mxu0 0.0
      %2073 = vmatpush2.msra.mxu0 0.0
      %2074 = vmatprep.subr.mxu0 0.0
      %2075 = vmatpush2.msra.mxu0 0.0
      %2076 = vmatprep.subr.mxu0 0.0
      %2077 = vmatpush2.msra.mxu0 0.0
      %2078 = vmatprep.subr.mxu0 0.0
      %2079 = vmatpush2.msra.mxu0 0.0
      %2080 = vmatprep.subr.mxu0 0.0
      %2081 = vmatpush2.msra.mxu0 0.0
      %2082 = vmatprep.subr.mxu0 0.0
      %2083 = vmatpush2.msra.mxu0 0.0
      %2084 = vmatprep.subr.mxu0 0.0
      %2085 = vmatpush2.msra.mxu0 0.0
      %2086 = vmatprep.mubr.f32.mxu0 0.0
      %2087 = vmatmul.mubr.f32.gmra.mxu0 %v2021
      %v2088 = vpop.f32.mrf.mxu0
      %v2089 = vadd.f32 %v154, %v2088
      %v2090 = vpop.f32.mrf.mxu0
      %2091 = vdwg.mxu0
      %v2092 = vmax.f32 %v2089, 0.0
      %v2093 = vmul.f32 %v2092, %v229
      %2094 = vadd.xlane.f32.xlu0 %v2093
      %v2095 = vpop.xlane.xlu0 %2094
      %v2096 = vmul.f32 %v2092, %v236
      %2097 = vadd.xlane.f32.xlu0 %v2096
      %v2098 = vpop.xlane.xlu0 %2097
      %v2099 = vmul.f32 %v240, %v2095
      %v2100 = vadd.f32 %v1923, %v2099
      %v2101 = vmul.f32 %v240, %v2098
      %v2102 = vadd.f32 %v1930, %v2101
      %v2103 = vmul.f32 %v2100, %v137
      %v2104 = vmul.f32 %v2102, %v142
      %v2105 = vadd.f32 %v2103, %v2104
      %v2106 = vadd.f32 %v2105, %v148
      %v2107 = vmax.f32 %v2106, 0.0
      %2108 = vmatprep.subr.mxu0 0.0
      %2109 = vmatpush1.msra.mxu0 %v102
      %2110 = vmatprep.subr.mxu0 0.0
      %2111 = vmatpush1.msra.mxu0 %v101
      %2112 = vmatprep.subr.mxu0 0.0
      %2113 = vmatpush1.msra.mxu0 %v100
      %2114 = vmatprep.subr.mxu0 0.0
      %2115 = vmatpush1.msra.mxu0 %v99
      %2116 = vmatprep.subr.mxu0 0.0
      %2117 = vmatpush1.msra.mxu0 %v98
      %2118 = vmatprep.subr.mxu0 0.0
      %2119 = vmatpush1.msra.mxu0 %v97
      %2120 = vmatprep.subr.mxu0 0.0
      %2121 = vmatpush1.msra.mxu0 %v96
      %2122 = vmatprep.subr.mxu0 0.0
      %2123 = vmatpush1.msra.mxu0 %v95
      %2124 = vmatprep.subr.mxu0 0.0
      %2125 = vmatpush1.msra.mxu0 %v94
      %2126 = vmatprep.subr.mxu0 0.0
      %2127 = vmatpush1.msra.mxu0 %v93
      %2128 = vmatprep.subr.mxu0 0.0
      %2129 = vmatpush1.msra.mxu0 %v92
      %2130 = vmatprep.subr.mxu0 0.0
      %2131 = vmatpush1.msra.mxu0 %v91
      %2132 = vmatprep.subr.mxu0 0.0
      %2133 = vmatpush1.msra.mxu0 %v90
      %2134 = vmatprep.subr.mxu0 0.0
      %2135 = vmatpush1.msra.mxu0 %v89
      %2136 = vmatprep.subr.mxu0 0.0
      %2137 = vmatpush1.msra.mxu0 %v88
      %2138 = vmatprep.subr.mxu0 0.0
      %2139 = vmatpush1.msra.mxu0 %v87
      %2140 = vmatprep.subr.mxu0 0.0
      %2141 = vmatpush2.msra.mxu0 0.0
      %2142 = vmatprep.subr.mxu0 0.0
      %2143 = vmatpush2.msra.mxu0 0.0
      %2144 = vmatprep.subr.mxu0 0.0
      %2145 = vmatpush2.msra.mxu0 0.0
      %2146 = vmatprep.subr.mxu0 0.0
      %2147 = vmatpush2.msra.mxu0 0.0
      %2148 = vmatprep.subr.mxu0 0.0
      %2149 = vmatpush2.msra.mxu0 0.0
      %2150 = vmatprep.subr.mxu0 0.0
      %2151 = vmatpush2.msra.mxu0 0.0
      %2152 = vmatprep.subr.mxu0 0.0
      %2153 = vmatpush2.msra.mxu0 0.0
      %2154 = vmatprep.subr.mxu0 0.0
      %2155 = vmatpush2.msra.mxu0 0.0
      %2156 = vmatprep.subr.mxu0 0.0
      %2157 = vmatpush2.msra.mxu0 0.0
      %2158 = vmatprep.subr.mxu0 0.0
      %2159 = vmatpush2.msra.mxu0 0.0
      %2160 = vmatprep.subr.mxu0 0.0
      %2161 = vmatpush2.msra.mxu0 0.0
      %2162 = vmatprep.subr.mxu0 0.0
      %2163 = vmatpush2.msra.mxu0 0.0
      %2164 = vmatprep.subr.mxu0 0.0
      %2165 = vmatpush2.msra.mxu0 0.0
      %2166 = vmatprep.subr.mxu0 0.0
      %2167 = vmatpush2.msra.mxu0 0.0
      %2168 = vmatprep.subr.mxu0 0.0
      %2169 = vmatpush2.msra.mxu0 0.0
      %2170 = vmatprep.subr.mxu0 0.0
      %2171 = vmatpush2.msra.mxu0 0.0
      %2172 = vmatprep.mubr.f32.mxu0 0.0
      %2173 = vmatmul.mubr.f32.gmra.mxu0 %v2107
      %v2174 = vpop.f32.mrf.mxu0
      %v2175 = vadd.f32 %v154, %v2174
      %v2176 = vpop.f32.mrf.mxu0
      %2177 = vdwg.mxu0
      %v2178 = vmax.f32 %v2175, 0.0
      %v2179 = vmul.f32 %v2178, %v229
      %2180 = vadd.xlane.f32.xlu0 %v2179
      %v2181 = vpop.xlane.xlu0 %2180
      %v2182 = vmul.f32 %v2178, %v236
      %2183 = vadd.xlane.f32.xlu0 %v2182
      %v2184 = vpop.xlane.xlu0 %2183
      %v2185 = vmul.f32 %v413, %v2181
      %v2186 = vadd.f32 %v1923, %v2185
      %v2187 = vmul.f32 %v413, %v2184
      %v2188 = vadd.f32 %v1930, %v2187
      %v2189 = vmul.f32 %v2186, %v137
      %v2190 = vmul.f32 %v2188, %v142
      %v2191 = vadd.f32 %v2189, %v2190
      %v2192 = vadd.f32 %v2191, %v148
      %v2193 = vmax.f32 %v2192, 0.0
      %2194 = vmatprep.subr.mxu0 0.0
      %2195 = vmatpush1.msra.mxu0 %v102
      %2196 = vmatprep.subr.mxu0 0.0
      %2197 = vmatpush1.msra.mxu0 %v101
      %2198 = vmatprep.subr.mxu0 0.0
      %2199 = vmatpush1.msra.mxu0 %v100
      %2200 = vmatprep.subr.mxu0 0.0
      %2201 = vmatpush1.msra.mxu0 %v99
      %2202 = vmatprep.subr.mxu0 0.0
      %2203 = vmatpush1.msra.mxu0 %v98
      %2204 = vmatprep.subr.mxu0 0.0
      %2205 = vmatpush1.msra.mxu0 %v97
      %2206 = vmatprep.subr.mxu0 0.0
      %2207 = vmatpush1.msra.mxu0 %v96
      %2208 = vmatprep.subr.mxu0 0.0
      %2209 = vmatpush1.msra.mxu0 %v95
      %2210 = vmatprep.subr.mxu0 0.0
      %2211 = vmatpush1.msra.mxu0 %v94
      %2212 = vmatprep.subr.mxu0 0.0
      %2213 = vmatpush1.msra.mxu0 %v93
      %2214 = vmatprep.subr.mxu0 0.0
      %2215 = vmatpush1.msra.mxu0 %v92
      %2216 = vmatprep.subr.mxu0 0.0
      %2217 = vmatpush1.msra.mxu0 %v91
      %2218 = vmatprep.subr.mxu0 0.0
      %2219 = vmatpush1.msra.mxu0 %v90
      %2220 = vmatprep.subr.mxu0 0.0
      %2221 = vmatpush1.msra.mxu0 %v89
      %2222 = vmatprep.subr.mxu0 0.0
      %2223 = vmatpush1.msra.mxu0 %v88
      %2224 = vmatprep.subr.mxu0 0.0
      %2225 = vmatpush1.msra.mxu0 %v87
      %2226 = vmatprep.subr.mxu0 0.0
      %2227 = vmatpush2.msra.mxu0 0.0
      %2228 = vmatprep.subr.mxu0 0.0
      %2229 = vmatpush2.msra.mxu0 0.0
      %2230 = vmatprep.subr.mxu0 0.0
      %2231 = vmatpush2.msra.mxu0 0.0
      %2232 = vmatprep.subr.mxu0 0.0
      %2233 = vmatpush2.msra.mxu0 0.0
      %2234 = vmatprep.subr.mxu0 0.0
      %2235 = vmatpush2.msra.mxu0 0.0
      %2236 = vmatprep.subr.mxu0 0.0
      %2237 = vmatpush2.msra.mxu0 0.0
      %2238 = vmatprep.subr.mxu0 0.0
      %2239 = vmatpush2.msra.mxu0 0.0
      %2240 = vmatprep.subr.mxu0 0.0
      %2241 = vmatpush2.msra.mxu0 0.0
      %2242 = vmatprep.subr.mxu0 0.0
      %2243 = vmatpush2.msra.mxu0 0.0
      %2244 = vmatprep.subr.mxu0 0.0
      %2245 = vmatpush2.msra.mxu0 0.0
      %2246 = vmatprep.subr.mxu0 0.0
      %2247 = vmatpush2.msra.mxu0 0.0
      %2248 = vmatprep.subr.mxu0 0.0
      %2249 = vmatpush2.msra.mxu0 0.0
      %2250 = vmatprep.subr.mxu0 0.0
      %2251 = vmatpush2.msra.mxu0 0.0
      %2252 = vmatprep.subr.mxu0 0.0
      %2253 = vmatpush2.msra.mxu0 0.0
      %2254 = vmatprep.subr.mxu0 0.0
      %2255 = vmatpush2.msra.mxu0 0.0
      %2256 = vmatprep.subr.mxu0 0.0
      %2257 = vmatpush2.msra.mxu0 0.0
      %2258 = vmatprep.mubr.f32.mxu0 0.0
      %2259 = vmatmul.mubr.f32.gmra.mxu0 %v2193
      %v2260 = vpop.f32.mrf.mxu0
      %v2261 = vadd.f32 %v154, %v2260
      %v2262 = vpop.f32.mrf.mxu0
      %2263 = vdwg.mxu0
      %v2264 = vmax.f32 %v2261, 0.0
      %v2265 = vmul.f32 %v2264, %v229
      %2266 = vadd.xlane.f32.xlu0 %v2265
      %v2267 = vpop.xlane.xlu0 %2266
      %v2268 = vmul.f32 %v2264, %v236
      %2269 = vadd.xlane.f32.xlu0 %v2268
      %v2270 = vpop.xlane.xlu0 %2269
      %v2271 = vmul.f32 %v2095, 2.0
      %v2272 = vadd.f32 %v2009, %v2271
      %v2273 = vmul.f32 %v2181, 2.0
      %v2274 = vadd.f32 %v2272, %v2273
      %v2275 = vadd.f32 %v2274, %v2267
      %v2276 = vmul.f32 %v505, %v2275
      %v2277 = vadd.f32 %v1923, %v2276
      %v2278 = vmul.f32 %v2098, 2.0
      %v2279 = vadd.f32 %v2012, %v2278
      %v2280 = vmul.f32 %v2184, 2.0
      %v2281 = vadd.f32 %v2279, %v2280
      %v2282 = vadd.f32 %v2281, %v2270
      %v2283 = vmul.f32 %v505, %v2282
      %v2284 = vadd.f32 %v1930, %v2283
      %v2285 = vmul.f32 %v2277, %v137
      %v2286 = vmul.f32 %v2284, %v142
      %v2287 = vadd.f32 %v2285, %v2286
      %v2288 = vadd.f32 %v2287, %v148
      %v2289 = vmax.f32 %v2288, 0.0
      %2290 = vmatprep.subr.mxu0 0.0
      %2291 = vmatpush1.msra.mxu0 %v102
      %2292 = vmatprep.subr.mxu0 0.0
      %2293 = vmatpush1.msra.mxu0 %v101
      %2294 = vmatprep.subr.mxu0 0.0
      %2295 = vmatpush1.msra.mxu0 %v100
      %2296 = vmatprep.subr.mxu0 0.0
      %2297 = vmatpush1.msra.mxu0 %v99
      %2298 = vmatprep.subr.mxu0 0.0
      %2299 = vmatpush1.msra.mxu0 %v98
      %2300 = vmatprep.subr.mxu0 0.0
      %2301 = vmatpush1.msra.mxu0 %v97
      %2302 = vmatprep.subr.mxu0 0.0
      %2303 = vmatpush1.msra.mxu0 %v96
      %2304 = vmatprep.subr.mxu0 0.0
      %2305 = vmatpush1.msra.mxu0 %v95
      %2306 = vmatprep.subr.mxu0 0.0
      %2307 = vmatpush1.msra.mxu0 %v94
      %2308 = vmatprep.subr.mxu0 0.0
      %2309 = vmatpush1.msra.mxu0 %v93
      %2310 = vmatprep.subr.mxu0 0.0
      %2311 = vmatpush1.msra.mxu0 %v92
      %2312 = vmatprep.subr.mxu0 0.0
      %2313 = vmatpush1.msra.mxu0 %v91
      %2314 = vmatprep.subr.mxu0 0.0
      %2315 = vmatpush1.msra.mxu0 %v90
      %2316 = vmatprep.subr.mxu0 0.0
      %2317 = vmatpush1.msra.mxu0 %v89
      %2318 = vmatprep.subr.mxu0 0.0
      %2319 = vmatpush1.msra.mxu0 %v88
      %2320 = vmatprep.subr.mxu0 0.0
      %2321 = vmatpush1.msra.mxu0 %v87
      %2322 = vmatprep.subr.mxu0 0.0
      %2323 = vmatpush2.msra.mxu0 0.0
      %2324 = vmatprep.subr.mxu0 0.0
      %2325 = vmatpush2.msra.mxu0 0.0
      %2326 = vmatprep.subr.mxu0 0.0
      %2327 = vmatpush2.msra.mxu0 0.0
      %2328 = vmatprep.subr.mxu0 0.0
      %2329 = vmatpush2.msra.mxu0 0.0
      %2330 = vmatprep.subr.mxu0 0.0
      %2331 = vmatpush2.msra.mxu0 0.0
      %2332 = vmatprep.subr.mxu0 0.0
      %2333 = vmatpush2.msra.mxu0 0.0
      %2334 = vmatprep.subr.mxu0 0.0
      %2335 = vmatpush2.msra.mxu0 0.0
      %2336 = vmatprep.subr.mxu0 0.0
      %2337 = vmatpush2.msra.mxu0 0.0
      %2338 = vmatprep.subr.mxu0 0.0
      %2339 = vmatpush2.msra.mxu0 0.0
      %2340 = vmatprep.subr.mxu0 0.0
      %2341 = vmatpush2.msra.mxu0 0.0
      %2342 = vmatprep.subr.mxu0 0.0
      %2343 = vmatpush2.msra.mxu0 0.0
      %2344 = vmatprep.subr.mxu0 0.0
      %2345 = vmatpush2.msra.mxu0 0.0
      %2346 = vmatprep.subr.mxu0 0.0
      %2347 = vmatpush2.msra.mxu0 0.0
      %2348 = vmatprep.subr.mxu0 0.0
      %2349 = vmatpush2.msra.mxu0 0.0
      %2350 = vmatprep.subr.mxu0 0.0
      %2351 = vmatpush2.msra.mxu0 0.0
      %2352 = vmatprep.subr.mxu0 0.0
      %2353 = vmatpush2.msra.mxu0 0.0
      %2354 = vmatprep.mubr.f32.mxu0 0.0
      %2355 = vmatmul.mubr.f32.gmra.mxu0 %v2289
      %v2356 = vpop.f32.mrf.mxu0
      %v2357 = vadd.f32 %v154, %v2356
      %v2358 = vpop.f32.mrf.mxu0
      %2359 = vdwg.mxu0
      %v2360 = vmax.f32 %v2357, 0.0
      %v2361 = vmul.f32 %v2360, %v229
      %2362 = vadd.xlane.f32.xlu0 %v2361
      %v2363 = vpop.xlane.xlu0 %2362
      %v2364 = vmul.f32 %v2360, %v236
      %2365 = vadd.xlane.f32.xlu0 %v2364
      %v2366 = vpop.xlane.xlu0 %2365
      %v2367 = vmul.f32 %v240, %v2363
      %v2368 = vadd.f32 %v2277, %v2367
      %v2369 = vmul.f32 %v240, %v2366
      %v2370 = vadd.f32 %v2284, %v2369
      %v2371 = vmul.f32 %v2368, %v137
      %v2372 = vmul.f32 %v2370, %v142
      %v2373 = vadd.f32 %v2371, %v2372
      %v2374 = vadd.f32 %v2373, %v148
      %v2375 = vmax.f32 %v2374, 0.0
      %2376 = vmatprep.subr.mxu0 0.0
      %2377 = vmatpush1.msra.mxu0 %v102
      %2378 = vmatprep.subr.mxu0 0.0
      %2379 = vmatpush1.msra.mxu0 %v101
      %2380 = vmatprep.subr.mxu0 0.0
      %2381 = vmatpush1.msra.mxu0 %v100
      %2382 = vmatprep.subr.mxu0 0.0
      %2383 = vmatpush1.msra.mxu0 %v99
      %2384 = vmatprep.subr.mxu0 0.0
      %2385 = vmatpush1.msra.mxu0 %v98
      %2386 = vmatprep.subr.mxu0 0.0
      %2387 = vmatpush1.msra.mxu0 %v97
      %2388 = vmatprep.subr.mxu0 0.0
      %2389 = vmatpush1.msra.mxu0 %v96
      %2390 = vmatprep.subr.mxu0 0.0
      %2391 = vmatpush1.msra.mxu0 %v95
      %2392 = vmatprep.subr.mxu0 0.0
      %2393 = vmatpush1.msra.mxu0 %v94
      %2394 = vmatprep.subr.mxu0 0.0
      %2395 = vmatpush1.msra.mxu0 %v93
      %2396 = vmatprep.subr.mxu0 0.0
      %2397 = vmatpush1.msra.mxu0 %v92
      %2398 = vmatprep.subr.mxu0 0.0
      %2399 = vmatpush1.msra.mxu0 %v91
      %2400 = vmatprep.subr.mxu0 0.0
      %2401 = vmatpush1.msra.mxu0 %v90
      %2402 = vmatprep.subr.mxu0 0.0
      %2403 = vmatpush1.msra.mxu0 %v89
      %2404 = vmatprep.subr.mxu0 0.0
      %2405 = vmatpush1.msra.mxu0 %v88
      %2406 = vmatprep.subr.mxu0 0.0
      %2407 = vmatpush1.msra.mxu0 %v87
      %2408 = vmatprep.subr.mxu0 0.0
      %2409 = vmatpush2.msra.mxu0 0.0
      %2410 = vmatprep.subr.mxu0 0.0
      %2411 = vmatpush2.msra.mxu0 0.0
      %2412 = vmatprep.subr.mxu0 0.0
      %2413 = vmatpush2.msra.mxu0 0.0
      %2414 = vmatprep.subr.mxu0 0.0
      %2415 = vmatpush2.msra.mxu0 0.0
      %2416 = vmatprep.subr.mxu0 0.0
      %2417 = vmatpush2.msra.mxu0 0.0
      %2418 = vmatprep.subr.mxu0 0.0
      %2419 = vmatpush2.msra.mxu0 0.0
      %2420 = vmatprep.subr.mxu0 0.0
      %2421 = vmatpush2.msra.mxu0 0.0
      %2422 = vmatprep.subr.mxu0 0.0
      %2423 = vmatpush2.msra.mxu0 0.0
      %2424 = vmatprep.subr.mxu0 0.0
      %2425 = vmatpush2.msra.mxu0 0.0
      %2426 = vmatprep.subr.mxu0 0.0
      %2427 = vmatpush2.msra.mxu0 0.0
      %2428 = vmatprep.subr.mxu0 0.0
      %2429 = vmatpush2.msra.mxu0 0.0
      %2430 = vmatprep.subr.mxu0 0.0
      %2431 = vmatpush2.msra.mxu0 0.0
      %2432 = vmatprep.subr.mxu0 0.0
      %2433 = vmatpush2.msra.mxu0 0.0
      %2434 = vmatprep.subr.mxu0 0.0
      %2435 = vmatpush2.msra.mxu0 0.0
      %2436 = vmatprep.subr.mxu0 0.0
      %2437 = vmatpush2.msra.mxu0 0.0
      %2438 = vmatprep.subr.mxu0 0.0
      %2439 = vmatpush2.msra.mxu0 0.0
      %2440 = vmatprep.mubr.f32.mxu0 0.0
      %2441 = vmatmul.mubr.f32.gmra.mxu0 %v2375
      %v2442 = vpop.f32.mrf.mxu0
      %v2443 = vadd.f32 %v154, %v2442
      %v2444 = vpop.f32.mrf.mxu0
      %2445 = vdwg.mxu0
      %v2446 = vmax.f32 %v2443, 0.0
      %v2447 = vmul.f32 %v2446, %v229
      %2448 = vadd.xlane.f32.xlu0 %v2447
      %v2449 = vpop.xlane.xlu0 %2448
      %v2450 = vmul.f32 %v2446, %v236
      %2451 = vadd.xlane.f32.xlu0 %v2450
      %v2452 = vpop.xlane.xlu0 %2451
      %v2453 = vmul.f32 %v240, %v2449
      %v2454 = vadd.f32 %v2277, %v2453
      %v2455 = vmul.f32 %v240, %v2452
      %v2456 = vadd.f32 %v2284, %v2455
      %v2457 = vmul.f32 %v2454, %v137
      %v2458 = vmul.f32 %v2456, %v142
      %v2459 = vadd.f32 %v2457, %v2458
      %v2460 = vadd.f32 %v2459, %v148
      %v2461 = vmax.f32 %v2460, 0.0
      %2462 = vmatprep.subr.mxu0 0.0
      %2463 = vmatpush1.msra.mxu0 %v102
      %2464 = vmatprep.subr.mxu0 0.0
      %2465 = vmatpush1.msra.mxu0 %v101
      %2466 = vmatprep.subr.mxu0 0.0
      %2467 = vmatpush1.msra.mxu0 %v100
      %2468 = vmatprep.subr.mxu0 0.0
      %2469 = vmatpush1.msra.mxu0 %v99
      %2470 = vmatprep.subr.mxu0 0.0
      %2471 = vmatpush1.msra.mxu0 %v98
      %2472 = vmatprep.subr.mxu0 0.0
      %2473 = vmatpush1.msra.mxu0 %v97
      %2474 = vmatprep.subr.mxu0 0.0
      %2475 = vmatpush1.msra.mxu0 %v96
      %2476 = vmatprep.subr.mxu0 0.0
      %2477 = vmatpush1.msra.mxu0 %v95
      %2478 = vmatprep.subr.mxu0 0.0
      %2479 = vmatpush1.msra.mxu0 %v94
      %2480 = vmatprep.subr.mxu0 0.0
      %2481 = vmatpush1.msra.mxu0 %v93
      %2482 = vmatprep.subr.mxu0 0.0
      %2483 = vmatpush1.msra.mxu0 %v92
      %2484 = vmatprep.subr.mxu0 0.0
      %2485 = vmatpush1.msra.mxu0 %v91
      %2486 = vmatprep.subr.mxu0 0.0
      %2487 = vmatpush1.msra.mxu0 %v90
      %2488 = vmatprep.subr.mxu0 0.0
      %2489 = vmatpush1.msra.mxu0 %v89
      %2490 = vmatprep.subr.mxu0 0.0
      %2491 = vmatpush1.msra.mxu0 %v88
      %2492 = vmatprep.subr.mxu0 0.0
      %2493 = vmatpush1.msra.mxu0 %v87
      %2494 = vmatprep.subr.mxu0 0.0
      %2495 = vmatpush2.msra.mxu0 0.0
      %2496 = vmatprep.subr.mxu0 0.0
      %2497 = vmatpush2.msra.mxu0 0.0
      %2498 = vmatprep.subr.mxu0 0.0
      %2499 = vmatpush2.msra.mxu0 0.0
      %2500 = vmatprep.subr.mxu0 0.0
      %2501 = vmatpush2.msra.mxu0 0.0
      %2502 = vmatprep.subr.mxu0 0.0
      %2503 = vmatpush2.msra.mxu0 0.0
      %2504 = vmatprep.subr.mxu0 0.0
      %2505 = vmatpush2.msra.mxu0 0.0
      %2506 = vmatprep.subr.mxu0 0.0
      %2507 = vmatpush2.msra.mxu0 0.0
      %2508 = vmatprep.subr.mxu0 0.0
      %2509 = vmatpush2.msra.mxu0 0.0
      %2510 = vmatprep.subr.mxu0 0.0
      %2511 = vmatpush2.msra.mxu0 0.0
      %2512 = vmatprep.subr.mxu0 0.0
      %2513 = vmatpush2.msra.mxu0 0.0
      %2514 = vmatprep.subr.mxu0 0.0
      %2515 = vmatpush2.msra.mxu0 0.0
      %2516 = vmatprep.subr.mxu0 0.0
      %2517 = vmatpush2.msra.mxu0 0.0
      %2518 = vmatprep.subr.mxu0 0.0
      %2519 = vmatpush2.msra.mxu0 0.0
      %2520 = vmatprep.subr.mxu0 0.0
      %2521 = vmatpush2.msra.mxu0 0.0
      %2522 = vmatprep.subr.mxu0 0.0
      %2523 = vmatpush2.msra.mxu0 0.0
      %2524 = vmatprep.subr.mxu0 0.0
      %2525 = vmatpush2.msra.mxu0 0.0
      %2526 = vmatprep.mubr.f32.mxu0 0.0
      %2527 = vmatmul.mubr.f32.gmra.mxu0 %v2461
      %v2528 = vpop.f32.mrf.mxu0
      %v2529 = vadd.f32 %v154, %v2528
      %v2530 = vpop.f32.mrf.mxu0
      %2531 = vdwg.mxu0
      %v2532 = vmax.f32 %v2529, 0.0
      %v2533 = vmul.f32 %v2532, %v229
      %2534 = vadd.xlane.f32.xlu0 %v2533
      %v2535 = vpop.xlane.xlu0 %2534
      %v2536 = vmul.f32 %v2532, %v236
      %2537 = vadd.xlane.f32.xlu0 %v2536
      %v2538 = vpop.xlane.xlu0 %2537
      %v2539 = vmul.f32 %v413, %v2535
      %v2540 = vadd.f32 %v2277, %v2539
      %v2541 = vmul.f32 %v413, %v2538
      %v2542 = vadd.f32 %v2284, %v2541
      %v2543 = vmul.f32 %v2540, %v137
      %v2544 = vmul.f32 %v2542, %v142
      %v2545 = vadd.f32 %v2543, %v2544
      %v2546 = vadd.f32 %v2545, %v148
      %v2547 = vmax.f32 %v2546, 0.0
      %2548 = vmatprep.subr.mxu0 0.0
      %2549 = vmatpush1.msra.mxu0 %v102
      %2550 = vmatprep.subr.mxu0 0.0
      %2551 = vmatpush1.msra.mxu0 %v101
      %2552 = vmatprep.subr.mxu0 0.0
      %2553 = vmatpush1.msra.mxu0 %v100
      %2554 = vmatprep.subr.mxu0 0.0
      %2555 = vmatpush1.msra.mxu0 %v99
      %2556 = vmatprep.subr.mxu0 0.0
      %2557 = vmatpush1.msra.mxu0 %v98
      %2558 = vmatprep.subr.mxu0 0.0
      %2559 = vmatpush1.msra.mxu0 %v97
      %2560 = vmatprep.subr.mxu0 0.0
      %2561 = vmatpush1.msra.mxu0 %v96
      %2562 = vmatprep.subr.mxu0 0.0
      %2563 = vmatpush1.msra.mxu0 %v95
      %2564 = vmatprep.subr.mxu0 0.0
      %2565 = vmatpush1.msra.mxu0 %v94
      %2566 = vmatprep.subr.mxu0 0.0
      %2567 = vmatpush1.msra.mxu0 %v93
      %2568 = vmatprep.subr.mxu0 0.0
      %2569 = vmatpush1.msra.mxu0 %v92
      %2570 = vmatprep.subr.mxu0 0.0
      %2571 = vmatpush1.msra.mxu0 %v91
      %2572 = vmatprep.subr.mxu0 0.0
      %2573 = vmatpush1.msra.mxu0 %v90
      %2574 = vmatprep.subr.mxu0 0.0
      %2575 = vmatpush1.msra.mxu0 %v89
      %2576 = vmatprep.subr.mxu0 0.0
      %2577 = vmatpush1.msra.mxu0 %v88
      %2578 = vmatprep.subr.mxu0 0.0
      %2579 = vmatpush1.msra.mxu0 %v87
      %2580 = vmatprep.subr.mxu0 0.0
      %2581 = vmatpush2.msra.mxu0 0.0
      %2582 = vmatprep.subr.mxu0 0.0
      %2583 = vmatpush2.msra.mxu0 0.0
      %2584 = vmatprep.subr.mxu0 0.0
      %2585 = vmatpush2.msra.mxu0 0.0
      %2586 = vmatprep.subr.mxu0 0.0
      %2587 = vmatpush2.msra.mxu0 0.0
      %2588 = vmatprep.subr.mxu0 0.0
      %2589 = vmatpush2.msra.mxu0 0.0
      %2590 = vmatprep.subr.mxu0 0.0
      %2591 = vmatpush2.msra.mxu0 0.0
      %2592 = vmatprep.subr.mxu0 0.0
      %2593 = vmatpush2.msra.mxu0 0.0
      %2594 = vmatprep.subr.mxu0 0.0
      %2595 = vmatpush2.msra.mxu0 0.0
      %2596 = vmatprep.subr.mxu0 0.0
      %2597 = vmatpush2.msra.mxu0 0.0
      %2598 = vmatprep.subr.mxu0 0.0
      %2599 = vmatpush2.msra.mxu0 0.0
      %2600 = vmatprep.subr.mxu0 0.0
      %2601 = vmatpush2.msra.mxu0 0.0
      %2602 = vmatprep.subr.mxu0 0.0
      %2603 = vmatpush2.msra.mxu0 0.0
      %2604 = vmatprep.subr.mxu0 0.0
      %2605 = vmatpush2.msra.mxu0 0.0
      %2606 = vmatprep.subr.mxu0 0.0
      %2607 = vmatpush2.msra.mxu0 0.0
      %2608 = vmatprep.subr.mxu0 0.0
      %2609 = vmatpush2.msra.mxu0 0.0
      %2610 = vmatprep.subr.mxu0 0.0
      %2611 = vmatpush2.msra.mxu0 0.0
      %2612 = vmatprep.mubr.f32.mxu0 0.0
      %2613 = vmatmul.mubr.f32.gmra.mxu0 %v2547
      %v2614 = vpop.f32.mrf.mxu0
      %v2615 = vadd.f32 %v154, %v2614
      %v2616 = vpop.f32.mrf.mxu0
      %2617 = vdwg.mxu0
      %v2618 = vmax.f32 %v2615, 0.0
      %v2619 = vmul.f32 %v2618, %v229
      %2620 = vadd.xlane.f32.xlu0 %v2619
      %v2621 = vpop.xlane.xlu0 %2620
      %v2622 = vmul.f32 %v2618, %v236
      %2623 = vadd.xlane.f32.xlu0 %v2622
      %v2624 = vpop.xlane.xlu0 %2623
      %v2625 = vmul.f32 %v2449, 2.0
      %v2626 = vadd.f32 %v2363, %v2625
      %v2627 = vmul.f32 %v2535, 2.0
      %v2628 = vadd.f32 %v2626, %v2627
      %v2629 = vadd.f32 %v2628, %v2621
      %v2630 = vmul.f32 %v505, %v2629
      %v2631 = vadd.f32 %v2277, %v2630
      %v2632 = vmul.f32 %v2452, 2.0
      %v2633 = vadd.f32 %v2366, %v2632
      %v2634 = vmul.f32 %v2538, 2.0
      %v2635 = vadd.f32 %v2633, %v2634
      %v2636 = vadd.f32 %v2635, %v2624
      %v2637 = vmul.f32 %v505, %v2636
      %v2638 = vadd.f32 %v2284, %v2637
      %v2639 = vmul.f32 %v2631, %v137
      %v2640 = vmul.f32 %v2638, %v142
      %v2641 = vadd.f32 %v2639, %v2640
      %v2642 = vadd.f32 %v2641, %v148
      %v2643 = vmax.f32 %v2642, 0.0
      %2644 = vmatprep.subr.mxu0 0.0
      %2645 = vmatpush1.msra.mxu0 %v102
      %2646 = vmatprep.subr.mxu0 0.0
      %2647 = vmatpush1.msra.mxu0 %v101
      %2648 = vmatprep.subr.mxu0 0.0
      %2649 = vmatpush1.msra.mxu0 %v100
      %2650 = vmatprep.subr.mxu0 0.0
      %2651 = vmatpush1.msra.mxu0 %v99
      %2652 = vmatprep.subr.mxu0 0.0
      %2653 = vmatpush1.msra.mxu0 %v98
      %2654 = vmatprep.subr.mxu0 0.0
      %2655 = vmatpush1.msra.mxu0 %v97
      %2656 = vmatprep.subr.mxu0 0.0
      %2657 = vmatpush1.msra.mxu0 %v96
      %2658 = vmatprep.subr.mxu0 0.0
      %2659 = vmatpush1.msra.mxu0 %v95
      %2660 = vmatprep.subr.mxu0 0.0
      %2661 = vmatpush1.msra.mxu0 %v94
      %2662 = vmatprep.subr.mxu0 0.0
      %2663 = vmatpush1.msra.mxu0 %v93
      %2664 = vmatprep.subr.mxu0 0.0
      %2665 = vmatpush1.msra.mxu0 %v92
      %2666 = vmatprep.subr.mxu0 0.0
      %2667 = vmatpush1.msra.mxu0 %v91
      %2668 = vmatprep.subr.mxu0 0.0
      %2669 = vmatpush1.msra.mxu0 %v90
      %2670 = vmatprep.subr.mxu0 0.0
      %2671 = vmatpush1.msra.mxu0 %v89
      %2672 = vmatprep.subr.mxu0 0.0
      %2673 = vmatpush1.msra.mxu0 %v88
      %2674 = vmatprep.subr.mxu0 0.0
      %2675 = vmatpush1.msra.mxu0 %v87
      %2676 = vmatprep.subr.mxu0 0.0
      %2677 = vmatpush2.msra.mxu0 0.0
      %2678 = vmatprep.subr.mxu0 0.0
      %2679 = vmatpush2.msra.mxu0 0.0
      %2680 = vmatprep.subr.mxu0 0.0
      %2681 = vmatpush2.msra.mxu0 0.0
      %2682 = vmatprep.subr.mxu0 0.0
      %2683 = vmatpush2.msra.mxu0 0.0
      %2684 = vmatprep.subr.mxu0 0.0
      %2685 = vmatpush2.msra.mxu0 0.0
      %2686 = vmatprep.subr.mxu0 0.0
      %2687 = vmatpush2.msra.mxu0 0.0
      %2688 = vmatprep.subr.mxu0 0.0
      %2689 = vmatpush2.msra.mxu0 0.0
      %2690 = vmatprep.subr.mxu0 0.0
      %2691 = vmatpush2.msra.mxu0 0.0
      %2692 = vmatprep.subr.mxu0 0.0
      %2693 = vmatpush2.msra.mxu0 0.0
      %2694 = vmatprep.subr.mxu0 0.0
      %2695 = vmatpush2.msra.mxu0 0.0
      %2696 = vmatprep.subr.mxu0 0.0
      %2697 = vmatpush2.msra.mxu0 0.0
      %2698 = vmatprep.subr.mxu0 0.0
      %2699 = vmatpush2.msra.mxu0 0.0
      %2700 = vmatprep.subr.mxu0 0.0
      %2701 = vmatpush2.msra.mxu0 0.0
      %2702 = vmatprep.subr.mxu0 0.0
      %2703 = vmatpush2.msra.mxu0 0.0
      %2704 = vmatprep.subr.mxu0 0.0
      %2705 = vmatpush2.msra.mxu0 0.0
      %2706 = vmatprep.subr.mxu0 0.0
      %2707 = vmatpush2.msra.mxu0 0.0
      %2708 = vmatprep.mubr.f32.mxu0 0.0
      %2709 = vmatmul.mubr.f32.gmra.mxu0 %v2643
      %v2710 = vpop.f32.mrf.mxu0
      %v2711 = vadd.f32 %v154, %v2710
      %v2712 = vpop.f32.mrf.mxu0
      %2713 = vdwg.mxu0
      %v2714 = vmax.f32 %v2711, 0.0
      %v2715 = vmul.f32 %v2714, %v229
      %2716 = vadd.xlane.f32.xlu0 %v2715
      %v2717 = vpop.xlane.xlu0 %2716
      %v2718 = vmul.f32 %v2714, %v236
      %2719 = vadd.xlane.f32.xlu0 %v2718
      %v2720 = vpop.xlane.xlu0 %2719
      %v2721 = vmul.f32 %v240, %v2717
      %v2722 = vadd.f32 %v2631, %v2721
      %v2723 = vmul.f32 %v240, %v2720
      %v2724 = vadd.f32 %v2638, %v2723
      %v2725 = vmul.f32 %v2722, %v137
      %v2726 = vmul.f32 %v2724, %v142
      %v2727 = vadd.f32 %v2725, %v2726
      %v2728 = vadd.f32 %v2727, %v148
      %v2729 = vmax.f32 %v2728, 0.0
      %2730 = vmatprep.subr.mxu0 0.0
      %2731 = vmatpush1.msra.mxu0 %v102
      %2732 = vmatprep.subr.mxu0 0.0
      %2733 = vmatpush1.msra.mxu0 %v101
      %2734 = vmatprep.subr.mxu0 0.0
      %2735 = vmatpush1.msra.mxu0 %v100
      %2736 = vmatprep.subr.mxu0 0.0
      %2737 = vmatpush1.msra.mxu0 %v99
      %2738 = vmatprep.subr.mxu0 0.0
      %2739 = vmatpush1.msra.mxu0 %v98
      %2740 = vmatprep.subr.mxu0 0.0
      %2741 = vmatpush1.msra.mxu0 %v97
      %2742 = vmatprep.subr.mxu0 0.0
      %2743 = vmatpush1.msra.mxu0 %v96
      %2744 = vmatprep.subr.mxu0 0.0
      %2745 = vmatpush1.msra.mxu0 %v95
      %2746 = vmatprep.subr.mxu0 0.0
      %2747 = vmatpush1.msra.mxu0 %v94
      %2748 = vmatprep.subr.mxu0 0.0
      %2749 = vmatpush1.msra.mxu0 %v93
      %2750 = vmatprep.subr.mxu0 0.0
      %2751 = vmatpush1.msra.mxu0 %v92
      %2752 = vmatprep.subr.mxu0 0.0
      %2753 = vmatpush1.msra.mxu0 %v91
      %2754 = vmatprep.subr.mxu0 0.0
      %2755 = vmatpush1.msra.mxu0 %v90
      %2756 = vmatprep.subr.mxu0 0.0
      %2757 = vmatpush1.msra.mxu0 %v89
      %2758 = vmatprep.subr.mxu0 0.0
      %2759 = vmatpush1.msra.mxu0 %v88
      %2760 = vmatprep.subr.mxu0 0.0
      %2761 = vmatpush1.msra.mxu0 %v87
      %2762 = vmatprep.subr.mxu0 0.0
      %2763 = vmatpush2.msra.mxu0 0.0
      %2764 = vmatprep.subr.mxu0 0.0
      %2765 = vmatpush2.msra.mxu0 0.0
      %2766 = vmatprep.subr.mxu0 0.0
      %2767 = vmatpush2.msra.mxu0 0.0
      %2768 = vmatprep.subr.mxu0 0.0
      %2769 = vmatpush2.msra.mxu0 0.0
      %2770 = vmatprep.subr.mxu0 0.0
      %2771 = vmatpush2.msra.mxu0 0.0
      %2772 = vmatprep.subr.mxu0 0.0
      %2773 = vmatpush2.msra.mxu0 0.0
      %2774 = vmatprep.subr.mxu0 0.0
      %2775 = vmatpush2.msra.mxu0 0.0
      %2776 = vmatprep.subr.mxu0 0.0
      %2777 = vmatpush2.msra.mxu0 0.0
      %2778 = vmatprep.subr.mxu0 0.0
      %2779 = vmatpush2.msra.mxu0 0.0
      %2780 = vmatprep.subr.mxu0 0.0
      %2781 = vmatpush2.msra.mxu0 0.0
      %2782 = vmatprep.subr.mxu0 0.0
      %2783 = vmatpush2.msra.mxu0 0.0
      %2784 = vmatprep.subr.mxu0 0.0
      %2785 = vmatpush2.msra.mxu0 0.0
      %2786 = vmatprep.subr.mxu0 0.0
      %2787 = vmatpush2.msra.mxu0 0.0
      %2788 = vmatprep.subr.mxu0 0.0
      %2789 = vmatpush2.msra.mxu0 0.0
      %2790 = vmatprep.subr.mxu0 0.0
      %2791 = vmatpush2.msra.mxu0 0.0
      %2792 = vmatprep.subr.mxu0 0.0
      %2793 = vmatpush2.msra.mxu0 0.0
      %2794 = vmatprep.mubr.f32.mxu0 0.0
      %2795 = vmatmul.mubr.f32.gmra.mxu0 %v2729
      %v2796 = vpop.f32.mrf.mxu0
      %v2797 = vadd.f32 %v154, %v2796
      %v2798 = vpop.f32.mrf.mxu0
      %2799 = vdwg.mxu0
      %v2800 = vmax.f32 %v2797, 0.0
      %v2801 = vmul.f32 %v2800, %v229
      %2802 = vadd.xlane.f32.xlu0 %v2801
      %v2803 = vpop.xlane.xlu0 %2802
      %v2804 = vmul.f32 %v2800, %v236
      %2805 = vadd.xlane.f32.xlu0 %v2804
      %v2806 = vpop.xlane.xlu0 %2805
      %v2807 = vmul.f32 %v240, %v2803
      %v2808 = vadd.f32 %v2631, %v2807
      %v2809 = vmul.f32 %v240, %v2806
      %v2810 = vadd.f32 %v2638, %v2809
      %v2811 = vmul.f32 %v2808, %v137
      %v2812 = vmul.f32 %v2810, %v142
      %v2813 = vadd.f32 %v2811, %v2812
      %v2814 = vadd.f32 %v2813, %v148
      %v2815 = vmax.f32 %v2814, 0.0
      %2816 = vmatprep.subr.mxu0 0.0
      %2817 = vmatpush1.msra.mxu0 %v102
      %2818 = vmatprep.subr.mxu0 0.0
      %2819 = vmatpush1.msra.mxu0 %v101
      %2820 = vmatprep.subr.mxu0 0.0
      %2821 = vmatpush1.msra.mxu0 %v100
      %2822 = vmatprep.subr.mxu0 0.0
      %2823 = vmatpush1.msra.mxu0 %v99
      %2824 = vmatprep.subr.mxu0 0.0
      %2825 = vmatpush1.msra.mxu0 %v98
      %2826 = vmatprep.subr.mxu0 0.0
      %2827 = vmatpush1.msra.mxu0 %v97
      %2828 = vmatprep.subr.mxu0 0.0
      %2829 = vmatpush1.msra.mxu0 %v96
      %2830 = vmatprep.subr.mxu0 0.0
      %2831 = vmatpush1.msra.mxu0 %v95
      %2832 = vmatprep.subr.mxu0 0.0
      %2833 = vmatpush1.msra.mxu0 %v94
      %2834 = vmatprep.subr.mxu0 0.0
      %2835 = vmatpush1.msra.mxu0 %v93
      %2836 = vmatprep.subr.mxu0 0.0
      %2837 = vmatpush1.msra.mxu0 %v92
      %2838 = vmatprep.subr.mxu0 0.0
      %2839 = vmatpush1.msra.mxu0 %v91
      %2840 = vmatprep.subr.mxu0 0.0
      %2841 = vmatpush1.msra.mxu0 %v90
      %2842 = vmatprep.subr.mxu0 0.0
      %2843 = vmatpush1.msra.mxu0 %v89
      %2844 = vmatprep.subr.mxu0 0.0
      %2845 = vmatpush1.msra.mxu0 %v88
      %2846 = vmatprep.subr.mxu0 0.0
      %2847 = vmatpush1.msra.mxu0 %v87
      %2848 = vmatprep.subr.mxu0 0.0
      %2849 = vmatpush2.msra.mxu0 0.0
      %2850 = vmatprep.subr.mxu0 0.0
      %2851 = vmatpush2.msra.mxu0 0.0
      %2852 = vmatprep.subr.mxu0 0.0
      %2853 = vmatpush2.msra.mxu0 0.0
      %2854 = vmatprep.subr.mxu0 0.0
      %2855 = vmatpush2.msra.mxu0 0.0
      %2856 = vmatprep.subr.mxu0 0.0
      %2857 = vmatpush2.msra.mxu0 0.0
      %2858 = vmatprep.subr.mxu0 0.0
      %2859 = vmatpush2.msra.mxu0 0.0
      %2860 = vmatprep.subr.mxu0 0.0
      %2861 = vmatpush2.msra.mxu0 0.0
      %2862 = vmatprep.subr.mxu0 0.0
      %2863 = vmatpush2.msra.mxu0 0.0
      %2864 = vmatprep.subr.mxu0 0.0
      %2865 = vmatpush2.msra.mxu0 0.0
      %2866 = vmatprep.subr.mxu0 0.0
      %2867 = vmatpush2.msra.mxu0 0.0
      %2868 = vmatprep.subr.mxu0 0.0
      %2869 = vmatpush2.msra.mxu0 0.0
      %2870 = vmatprep.subr.mxu0 0.0
      %2871 = vmatpush2.msra.mxu0 0.0
      %2872 = vmatprep.subr.mxu0 0.0
      %2873 = vmatpush2.msra.mxu0 0.0
      %2874 = vmatprep.subr.mxu0 0.0
      %2875 = vmatpush2.msra.mxu0 0.0
      %2876 = vmatprep.subr.mxu0 0.0
      %2877 = vmatpush2.msra.mxu0 0.0
      %2878 = vmatprep.subr.mxu0 0.0
      %2879 = vmatpush2.msra.mxu0 0.0
      %2880 = vmatprep.mubr.f32.mxu0 0.0
      %2881 = vmatmul.mubr.f32.gmra.mxu0 %v2815
      %v2882 = vpop.f32.mrf.mxu0
      %v2883 = vadd.f32 %v154, %v2882
      %v2884 = vpop.f32.mrf.mxu0
      %2885 = vdwg.mxu0
      %v2886 = vmax.f32 %v2883, 0.0
      %v2887 = vmul.f32 %v2886, %v229
      %2888 = vadd.xlane.f32.xlu0 %v2887
      %v2889 = vpop.xlane.xlu0 %2888
      %v2890 = vmul.f32 %v2886, %v236
      %2891 = vadd.xlane.f32.xlu0 %v2890
      %v2892 = vpop.xlane.xlu0 %2891
      %v2893 = vmul.f32 %v413, %v2889
      %v2894 = vadd.f32 %v2631, %v2893
      %v2895 = vmul.f32 %v413, %v2892
      %v2896 = vadd.f32 %v2638, %v2895
      %v2897 = vmul.f32 %v2894, %v137
      %v2898 = vmul.f32 %v2896, %v142
      %v2899 = vadd.f32 %v2897, %v2898
      %v2900 = vadd.f32 %v2899, %v148
      %v2901 = vmax.f32 %v2900, 0.0
      %2902 = vmatprep.subr.mxu0 0.0
      %2903 = vmatpush1.msra.mxu0 %v102
      %2904 = vmatprep.subr.mxu0 0.0
      %2905 = vmatpush1.msra.mxu0 %v101
      %2906 = vmatprep.subr.mxu0 0.0
      %2907 = vmatpush1.msra.mxu0 %v100
      %2908 = vmatprep.subr.mxu0 0.0
      %2909 = vmatpush1.msra.mxu0 %v99
      %2910 = vmatprep.subr.mxu0 0.0
      %2911 = vmatpush1.msra.mxu0 %v98
      %2912 = vmatprep.subr.mxu0 0.0
      %2913 = vmatpush1.msra.mxu0 %v97
      %2914 = vmatprep.subr.mxu0 0.0
      %2915 = vmatpush1.msra.mxu0 %v96
      %2916 = vmatprep.subr.mxu0 0.0
      %2917 = vmatpush1.msra.mxu0 %v95
      %2918 = vmatprep.subr.mxu0 0.0
      %2919 = vmatpush1.msra.mxu0 %v94
      %2920 = vmatprep.subr.mxu0 0.0
      %2921 = vmatpush1.msra.mxu0 %v93
      %2922 = vmatprep.subr.mxu0 0.0
      %2923 = vmatpush1.msra.mxu0 %v92
      %2924 = vmatprep.subr.mxu0 0.0
      %2925 = vmatpush1.msra.mxu0 %v91
      %2926 = vmatprep.subr.mxu0 0.0
      %2927 = vmatpush1.msra.mxu0 %v90
      %2928 = vmatprep.subr.mxu0 0.0
      %2929 = vmatpush1.msra.mxu0 %v89
      %2930 = vmatprep.subr.mxu0 0.0
      %2931 = vmatpush1.msra.mxu0 %v88
      %2932 = vmatprep.subr.mxu0 0.0
      %2933 = vmatpush1.msra.mxu0 %v87
      %2934 = vmatprep.subr.mxu0 0.0
      %2935 = vmatpush2.msra.mxu0 0.0
      %2936 = vmatprep.subr.mxu0 0.0
      %2937 = vmatpush2.msra.mxu0 0.0
      %2938 = vmatprep.subr.mxu0 0.0
      %2939 = vmatpush2.msra.mxu0 0.0
      %2940 = vmatprep.subr.mxu0 0.0
      %2941 = vmatpush2.msra.mxu0 0.0
      %2942 = vmatprep.subr.mxu0 0.0
      %2943 = vmatpush2.msra.mxu0 0.0
      %2944 = vmatprep.subr.mxu0 0.0
      %2945 = vmatpush2.msra.mxu0 0.0
      %2946 = vmatprep.subr.mxu0 0.0
      %2947 = vmatpush2.msra.mxu0 0.0
      %2948 = vmatprep.subr.mxu0 0.0
      %2949 = vmatpush2.msra.mxu0 0.0
      %2950 = vmatprep.subr.mxu0 0.0
      %2951 = vmatpush2.msra.mxu0 0.0
      %2952 = vmatprep.subr.mxu0 0.0
      %2953 = vmatpush2.msra.mxu0 0.0
      %2954 = vmatprep.subr.mxu0 0.0
      %2955 = vmatpush2.msra.mxu0 0.0
      %2956 = vmatprep.subr.mxu0 0.0
      %2957 = vmatpush2.msra.mxu0 0.0
      %2958 = vmatprep.subr.mxu0 0.0
      %2959 = vmatpush2.msra.mxu0 0.0
      %2960 = vmatprep.subr.mxu0 0.0
      %2961 = vmatpush2.msra.mxu0 0.0
      %2962 = vmatprep.subr.mxu0 0.0
      %2963 = vmatpush2.msra.mxu0 0.0
      %2964 = vmatprep.subr.mxu0 0.0
      %2965 = vmatpush2.msra.mxu0 0.0
      %2966 = vmatprep.mubr.f32.mxu0 0.0
      %2967 = vmatmul.mubr.f32.gmra.mxu0 %v2901
      %v2968 = vpop.f32.mrf.mxu0
      %v2969 = vadd.f32 %v154, %v2968
      %v2970 = vpop.f32.mrf.mxu0
      %2971 = vdwg.mxu0
      %v2972 = vmax.f32 %v2969, 0.0
      %v2973 = vmul.f32 %v2972, %v229
      %2974 = vadd.xlane.f32.xlu0 %v2973
      %v2975 = vpop.xlane.xlu0 %2974
      %v2976 = vmul.f32 %v2972, %v236
      %2977 = vadd.xlane.f32.xlu0 %v2976
      %v2978 = vpop.xlane.xlu0 %2977
      %v2979 = vmul.f32 %v2803, 2.0
      %v2980 = vadd.f32 %v2717, %v2979
      %v2981 = vmul.f32 %v2889, 2.0
      %v2982 = vadd.f32 %v2980, %v2981
      %v2983 = vadd.f32 %v2982, %v2975
      %v2984 = vmul.f32 %v505, %v2983
      %v2985 = vadd.f32 %v2631, %v2984
      %v2986 = vmul.f32 %v2806, 2.0
      %v2987 = vadd.f32 %v2720, %v2986
      %v2988 = vmul.f32 %v2892, 2.0
      %v2989 = vadd.f32 %v2987, %v2988
      %v2990 = vadd.f32 %v2989, %v2978
      %v2991 = vmul.f32 %v505, %v2990
      %v2992 = vadd.f32 %v2638, %v2991
      %v2993 = vsel %vm105, %v2985, 0.0
      %v2994 = vsel %vm106, %v2992, 0.0
      %v2995 = vadd.f32 %v2993, %v2994
      %s2996 = smul.u32 %s116, 8
      %s2997 = scalar_lea.vmem [#allocation12], %s2996
      %2998 = vst [vmem:[%s2997] sm:$0xff] %v2995
    $region46: #{tpu_custom_call.1} parent=1 // loop_footer
      %s120 = sadd.s32 1, %s116
    $region47: #{tpu_custom_call.1} parent=1 // loop_footer_branch
      %115 = sbr.rel target = $region43
    $region48: #{tpu_custom_call.1} parent=1 // loop_exit
      _
    // Predicated region
    $region49: #{tpu_custom_call.1} parent=1 // pred_check
      _
    $region50: #{tpu_custom_call.1} parent=1 // pred_check_branch
      %3000 = sbr.rel (0) target = $region52
    $region51: #{tpu_custom_call.1} parent=1 // pred_region
      %s3002 = ssub.s32 1024, 1024
      %3003 = vsyncadd [#allocation4], %s3002
      %s3004 = sshll.u32 [#allocation12], 4
      %s3005 = int_to_ptr.vmem [resolvable:$true] %s3004
      %3010 = dma.vmem_to_hbm [thread:$0]  %s3005, 1024, %s5, [#allocation4], 128, 128, 8
    $region52: #{tpu_custom_call.1} parent=1 // pred_fallthru
      _
    // Predicated region
    $region53: #{tpu_custom_call.1} parent=1 // pred_check
      _
    $region54: #{tpu_custom_call.1} parent=1 // pred_check_branch
      %3012 = sbr.rel (0) target = $region56
    $region55: #{tpu_custom_call.1} parent=1 // pred_region
      %3013 = dma.done [#allocation4], 1024
    $region56: #{tpu_custom_call.1} parent=1 // pred_fallthru
      _
    %3014 = vsyncpa [#allocation3], 1
    %3015 = vsyncpa [#allocation8], 1
    %3016 = vsyncpa [#allocation11], 1
    %3017 = vsyncpa [#allocation4], 1
    %3018 = vsyncpa [#allocation5], 1

</llo_original>
